<compile_context>
chip_gen: v5e
topology: v5e:2x2
jax: 0.10.0
libtpu: 0.0.40
codegen_flags: <defaults>
</compile_context>

<pallas_src>
import functools

import jax
import jax.numpy as jnp
from jax.experimental import pallas as pl
from jax.experimental.pallas import tpu as pltpu


# Above the 16 MiB (v5e) / 32 MiB (v6e/v7x) scoped defaults, below v7x's 64 MiB
# physical VMEM.
_VMEM_LIMIT = 48 * 1024 * 1024


def _round_up(x, m):
    return ((x + m - 1) // m) * m


def _mosaic_params(dims):
    return pltpu.CompilerParams(dimension_semantics=dims,
                                vmem_limit_bytes=_VMEM_LIMIT)


# ------------------------------------------------------------------
# Tiled matmul + bias (bf16 MXU operands, f32 accumulation)
# ------------------------------------------------------------------

def _matmul_bias_kernel(x_ref, w_ref, b_ref, o_ref, acc_ref):
    @pl.when(pl.program_id(2) == 0)
    def _init():
        acc_ref[...] = jnp.zeros_like(acc_ref)

    acc_ref[...] += jnp.dot(x_ref[...], w_ref[...],
                            preferred_element_type=jnp.float32)

    @pl.when(pl.program_id(2) == pl.num_programs(2) - 1)
    def _done():
        o_ref[...] = (acc_ref[...] + b_ref[...]).astype(o_ref.dtype)


def matmul_bias(x, w, b=None, *, out_dtype=jnp.float32, tm=512, tn=512, tk=512):
    """x:[M,K] @ w:[K,N] + b:[N] -> [M,N].  x/w fed to the MXU as bf16 (the
    activation is cast once in the wrapper, not per tile), f32 accumulation."""
    M, K = x.shape
    _, N = w.shape
    if b is None:
        b = jnp.zeros((N,), jnp.float32)
    x = x.astype(jnp.bfloat16)
    w = w.astype(jnp.bfloat16)
    b = b.astype(jnp.float32)
    bm = min(tm, _round_up(M, 8))
    bn = min(tn, _round_up(N, 128))
    bk = min(tk, _round_up(K, 128))
    Mp, Np, Kp = _round_up(M, bm), _round_up(N, bn), _round_up(K, bk)
    xp = jnp.pad(x, ((0, Mp - M), (0, Kp - K))) if (Mp, Kp) != (M, K) else x
    wp = jnp.pad(w, ((0, Kp - K), (0, Np - N))) if (Kp, Np) != (K, N) else w
    bp = jnp.pad(b, (0, Np - N)) if Np != N else b
    out = pl.pallas_call(
        _matmul_bias_kernel,
        out_shape=jax.ShapeDtypeStruct((Mp, Np), out_dtype),
        grid=(Mp // bm, Np // bn, Kp // bk),
        in_specs=[pl.BlockSpec((bm, bk), lambda i, j, k: (i, k)),
                  pl.BlockSpec((bk, bn), lambda i, j, k: (k, j)),
                  pl.BlockSpec((1, bn), lambda i, j, k: (0, j))],
        out_specs=pl.BlockSpec((bm, bn), lambda i, j, k: (i, j)),
        scratch_shapes=[pltpu.VMEM((bm, bn), jnp.float32)],
        compiler_params=_mosaic_params(("parallel", "parallel", "arbitrary")),
    )(xp, wp, bp.reshape(1, Np))
    return out[:M, :N]


# ------------------------------------------------------------------
# Fused LayerNorm + matmul + bias (ln_1 -> QKV, ln_post -> proj, ln_final -> proj)
# The normalized bf16 activation is computed once per row block (j == 0) into a
# VMEM scratch and reused for all N tiles of that row block.
# ------------------------------------------------------------------

def _ln_matmul_bias_kernel(x_ref, g_ref, b_ref, w_ref, bias_ref, o_ref,
                           xn_ref, *, eps):
    @pl.when(pl.program_id(1) == 0)
    def _ln():
        x = x_ref[...]                                   # (bm, D) f32
        mu = jnp.mean(x, axis=-1, keepdims=True)
        xc = x - mu
        var = jnp.mean(xc * xc, axis=-1, keepdims=True)
        xn = xc * jax.lax.rsqrt(var + eps) * g_ref[...] + b_ref[...]
        xn_ref[...] = xn.astype(jnp.bfloat16)

    o_ref[...] = (jnp.dot(xn_ref[...], w_ref[...],
                          preferred_element_type=jnp.float32)
                  + bias_ref[...]).astype(o_ref.dtype)


def ln_matmul_bias(x, g, b, w, bias=None, *, eps=1e-5, out_dtype=jnp.float32,
                   tm=256, tn=512):
    """LayerNorm(x) @ w + bias, LN over the full last dim (no K tiling)."""
    M, D = x.shape
    _, N = w.shape
    if bias is None:
        bias = jnp.zeros((N,), jnp.float32)
    w = w.astype(jnp.bfloat16)
    bm = min(tm, _round_up(M, 8))
    bn = min(tn, _round_up(N, 128))
    Mp, Np = _round_up(M, bm), _round_up(N, bn)
    xp = jnp.pad(x, ((0, Mp - M), (0, 0))) if Mp != M else x
    wp = jnp.pad(w, ((0, 0), (0, Np - N))) if Np != N else w
    bp = jnp.pad(bias, (0, Np - N)) if Np != N else bias
    out = pl.pallas_call(
        functools.partial(_ln_matmul_bias_kernel, eps=eps),
        out_shape=jax.ShapeDtypeStruct((Mp, Np), out_dtype),
        grid=(Mp // bm, Np // bn),
        in_specs=[pl.BlockSpec((bm, D), lambda i, j: (i, 0)),
                  pl.BlockSpec((1, D), lambda i, j: (0, 0)),
                  pl.BlockSpec((1, D), lambda i, j: (0, 0)),
                  pl.BlockSpec((D, bn), lambda i, j: (0, j)),
                  pl.BlockSpec((1, bn), lambda i, j: (0, j))],
        out_specs=pl.BlockSpec((bm, bn), lambda i, j: (i, j)),
        scratch_shapes=[pltpu.VMEM((bm, D), jnp.bfloat16)],
        # "arbitrary" on j: the cached LN scratch requires every row block's
        # N-sweep to start at j == 0 on one core.
        compiler_params=_mosaic_params(("parallel", "arbitrary")),
    )(xp, g.reshape(1, D), b.reshape(1, D), wp, bp.reshape(1, Np))
    return out[:M, :N]


# ------------------------------------------------------------------
# Fused LayerNorm + MLP (ln_2 -> fc1 -> QuickGELU -> fc2), tiled over (M, H)
# with a cached (bm, D) bf16 LN activation and a resident f32 accumulator.
# ------------------------------------------------------------------

def _ln_mlp_kernel(x_ref, g_ref, b_ref, w1_ref, b1_ref, w2_ref, b2_ref,
                   o_ref, xn_ref, acc_ref, *, eps):
    h_idx = pl.program_id(1)

    @pl.when(h_idx == 0)
    def _init():
        acc_ref[...] = jnp.zeros_like(acc_ref)
        x = x_ref[...]                                   # (bm, D) f32
        mu = jnp.mean(x, axis=-1, keepdims=True)
        xc = x - mu
        var = jnp.mean(xc * xc, axis=-1, keepdims=True)
        xn_ref[...] = (xc * jax.lax.rsqrt(var + eps) * g_ref[...]
                       + b_ref[...]).astype(jnp.bfloat16)

    h = jnp.dot(xn_ref[...], w1_ref[...],
                preferred_element_type=jnp.float32) + b1_ref[...]
    h = h * jax.nn.sigmoid(1.702 * h)                    # QuickGELU (per H tile)
    acc_ref[...] += jnp.dot(h.astype(jnp.bfloat16), w2_ref[...],
                            preferred_element_type=jnp.float32)

    @pl.when(h_idx == pl.num_programs(1) - 1)
    def _done():
        o_ref[...] = (acc_ref[...] + b2_ref[...]).astype(o_ref.dtype)


def ln_mlp(x, g, b, w1, b1, w2, b2, *, eps=1e-5, tm=256, th=1024):
    M, D = x.shape
    _, H = w1.shape
    bm = min(tm, _round_up(M, 8))
    bh = min(th, _round_up(H, 128))
    Mp, Hp = _round_up(M, bm), _round_up(H, bh)
    xp = jnp.pad(x, ((0, Mp - M), (0, 0))) if Mp != M else x
    w1p = w1.astype(jnp.bfloat16)
    w2p = w2.astype(jnp.bfloat16)
    b1p = b1
    if Hp != H:
        w1p = jnp.pad(w1p, ((0, 0), (0, Hp - H)))
        b1p = jnp.pad(b1p, (0, Hp - H))
        w2p = jnp.pad(w2p, ((0, Hp - H), (0, 0)))
    out = pl.pallas_call(
        functools.partial(_ln_mlp_kernel, eps=eps),
        out_shape=jax.ShapeDtypeStruct((Mp, D), jnp.float32),
        grid=(Mp // bm, Hp // bh),
        in_specs=[pl.BlockSpec((bm, D), lambda i, h: (i, 0)),
                  pl.BlockSpec((1, D), lambda i, h: (0, 0)),
                  pl.BlockSpec((1, D), lambda i, h: (0, 0)),
                  pl.BlockSpec((D, bh), lambda i, h: (0, h)),
                  pl.BlockSpec((1, bh), lambda i, h: (0, h)),
                  pl.BlockSpec((bh, D), lambda i, h: (h, 0)),
                  pl.BlockSpec((1, D), lambda i, h: (0, 0))],
        out_specs=pl.BlockSpec((bm, D), lambda i, h: (i, 0)),
        scratch_shapes=[pltpu.VMEM((bm, D), jnp.bfloat16),
                        pltpu.VMEM((bm, D), jnp.float32)],
        compiler_params=_mosaic_params(("parallel", "arbitrary")),
    )(xp, g.reshape(1, D), b.reshape(1, D), w1p, b1p.reshape(1, Hp),
      w2p, b2.reshape(1, D))
    return out[:M]


# ------------------------------------------------------------------
# Row-tiled LayerNorm (ln_pre)
# ------------------------------------------------------------------

def _layernorm_kernel(x_ref, g_ref, b_ref, o_ref, *, eps):
    x = x_ref[...]
    mu = jnp.mean(x, axis=-1, keepdims=True)
    xc = x - mu
    var = jnp.mean(xc * xc, axis=-1, keepdims=True)
    o_ref[...] = xc * jax.lax.rsqrt(var + eps) * g_ref[...] + b_ref[...]


def layernorm(x, g, b, eps=1e-5, *, tm=256):
    M, D = x.shape
    bm = min(tm, _round_up(M, 8))
    Mp = _round_up(M, bm)
    xp = jnp.pad(x, ((0, Mp - M), (0, 0))) if Mp != M else x
    out = pl.pallas_call(
        functools.partial(_layernorm_kernel, eps=eps),
        out_shape=jax.ShapeDtypeStruct((Mp, D), jnp.float32),
        grid=(Mp // bm,),
        in_specs=[pl.BlockSpec((bm, D), lambda i: (i, 0)),
                  pl.BlockSpec((1, D), lambda i: (0, 0)),
                  pl.BlockSpec((1, D), lambda i: (0, 0))],
        out_specs=pl.BlockSpec((bm, D), lambda i: (i, 0)),
        compiler_params=_mosaic_params(("parallel",)),
    )(xp, g.reshape(1, D), b.reshape(1, D))
    return out[:M]


# ------------------------------------------------------------------
# Attention: one batch element per grid step, heads batched into two einsums,
# bf16 qkv block, in-kernel causal mask, single lane-dense (S, D) store.
# ------------------------------------------------------------------

def _attention_kernel(qkv_ref, o_ref, *, heads, dh, scale, causal):
    S = qkv_ref.shape[1]
    D = heads * dh
    qkv = qkv_ref[0]                                     # [S, 3D] bf16

    def split(off):
        part = qkv[:, off:off + D].reshape(S, heads, dh)  # [S, h, dh]
        return jnp.swapaxes(part, 0, 1)                   # [h, S, dh]

    q, k, v = split(0), split(D), split(2 * D)

    s = jnp.einsum('hqd,hkd->hqk', q, k,
                   preferred_element_type=jnp.float32) * scale   # [h, S, S] f32
    if causal:
        row = jax.lax.broadcasted_iota(jnp.int32, (S, S), 0)
        col = jax.lax.broadcasted_iota(jnp.int32, (S, S), 1)
        # large finite negative instead of -inf: robust against all-masked rows
        s = jnp.where((col > row)[None], -1e30, s)

    s = s - jnp.max(s, axis=-1, keepdims=True)
    p = jnp.exp(s)
    p = p * pl.reciprocal(jnp.sum(p, axis=-1, keepdims=True), approx=True)

    o = jnp.einsum('hqk,hkd->hqd', p.astype(jnp.bfloat16), v,
                   preferred_element_type=jnp.float32)            # [h, S, dh]
    o_ref[0, :, :] = jnp.swapaxes(o, 0, 1).reshape(S, D).astype(o_ref.dtype)


def attention(qkv, heads, *, causal=False):
    """qkv:[B, S, 3D] bf16 (q|k|v concatenated) -> [B, S, D] bf16."""
    B, S, threeD = qkv.shape
    D = threeD // 3
    dh = D // heads
    scale = float(dh) ** -0.5
    # TODO(synk): for v7x (2 TensorCores) with B==1 or very long S, add a second
    # parallel grid axis (query-row / head-group tiles) and a flash-style KV loop.
    return pl.pallas_call(
        functools.partial(_attention_kernel, heads=heads, dh=dh, scale=scale,
                          causal=causal),
        out_shape=jax.ShapeDtypeStruct((B, S, D), jnp.bfloat16),
        grid=(B,),
        in_specs=[pl.BlockSpec((1, S, threeD), lambda b: (b, 0, 0))],
        out_specs=pl.BlockSpec((1, S, D), lambda b: (b, 0, 0)),
        compiler_params=_mosaic_params(("parallel",)),
    )(qkv.astype(jnp.bfloat16))


# ------------------------------------------------------------------
# CLIP logits: L2-normalize (f32) + exp(logit_scale) * im @ tx^T (bf16 MXU)
# ------------------------------------------------------------------

def _logits_kernel(ls_ref, im_ref, tx_ref, o_ref):
    im = im_ref[...]
    tx = tx_ref[...]
    im = im * jax.lax.rsqrt(jnp.sum(im * im, axis=-1, keepdims=True))
    tx = tx * jax.lax.rsqrt(jnp.sum(tx * tx, axis=-1, keepdims=True))
    li = jnp.einsum('id,jd->ij', im.astype(jnp.bfloat16), tx.astype(jnp.bfloat16),
                    preferred_element_type=jnp.float32)
    o_ref[...] = li * jnp.exp(ls_ref[0])


def clip_logits(im_feat, tx_feat, logit_scale):
    # TODO(synk): tile over (Bi, Bt) with a real grid for large contrastive batches.
    Bi, D = im_feat.shape
    Bt, _ = tx_feat.shape
    return pl.pallas_call(
        _logits_kernel,
        out_shape=jax.ShapeDtypeStruct((Bi, Bt), jnp.float32),
        grid=(1,),
        in_specs=[pl.BlockSpec(memory_space=pltpu.MemorySpace.SMEM),
                  pl.BlockSpec((Bi, D), lambda i: (0, 0)),
                  pl.BlockSpec((Bt, D), lambda i: (0, 0))],
        out_specs=pl.BlockSpec((Bi, Bt), lambda i: (0, 0)),
    )(logit_scale.reshape(1), im_feat, tx_feat)


# ------------------------------------------------------------------
# Model glue (plain JAX: reshapes / residuals / gathers)
# ------------------------------------------------------------------

def residual_attention_block(x, p, heads, *, causal):
    B, S, D = x.shape

    # attention branch: fused ln_1 + QKV projection, bf16 QKV / attention output
    qkv = ln_matmul_bias(x.reshape(B * S, D), p["ln1_g"], p["ln1_b"],
                         p["attn_in_w"], p["attn_in_b"],
                         out_dtype=jnp.bfloat16)                 # [B*S, 3D] bf16
    o = attention(qkv.reshape(B, S, 3 * D), heads, causal=causal)  # [B,S,D] bf16
    o = matmul_bias(o.reshape(B * S, D), p["attn_out_w"], p["attn_out_b"])
    x = x + o.reshape(B, S, D)

    # MLP branch: fused ln_2 + fc1 + QuickGELU + fc2
    h = ln_mlp(x.reshape(B * S, D), p["ln2_g"], p["ln2_b"],
               p["fc1_w"], p["fc1_b"], p["fc2_w"], p["fc2_b"])
    x = x + h.reshape(B, S, D)
    return x


def patch_embed(images, conv_w):
    """Conv2d(3, width, kernel=patch, stride=patch, bias=False) as a matmul."""
    B, C, H, W = images.shape
    width, _, p, _ = conv_w.shape
    gh, gw = H // p, W // p
    patches = images.reshape(B, C, gh, p, gw, p)
    patches = patches.transpose(0, 2, 4, 1, 3, 5).reshape(B * gh * gw, C * p * p)
    w = conv_w.reshape(width, C * p * p).T                          # [C*p*p, width]
    out = matmul_bias(patches, w)
    return out.reshape(B, gh * gw, width)


def encode_image(images, vp, heads):
    B = images.shape[0]
    x = patch_embed(images, vp["conv_w"])                           # [B, g, width]
    width = x.shape[-1]
    cls = jnp.broadcast_to(vp["class_emb"].reshape(1, 1, width), (B, 1, width))
    x = jnp.concatenate([cls, x], axis=1)                           # [B, S, width]
    x = x + vp["pos_emb"][None]
    B_, S, D = x.shape
    x = layernorm(x.reshape(B * S, D), vp["ln_pre_g"], vp["ln_pre_b"]).reshape(B, S, D)
    for lp in vp["layers"]:
        x = residual_attention_block(x, lp, heads, causal=False)    # no vision mask
    # fused ln_post + visual projection (CLS token only)
    x = ln_matmul_bias(x[:, 0, :], vp["ln_post_g"], vp["ln_post_b"], vp["proj"])
    return x


def encode_text(tokens, tp, heads):
    B, L = tokens.shape
    x = jnp.take(tp["tok_emb"], tokens, axis=0)                     # embedding gather (glue)
    x = x + tp["pos_emb"][None]
    D = x.shape[-1]
    for lp in tp["layers"]:
        x = residual_attention_block(x, lp, heads, causal=True)     # in-kernel causal mask
    eot = jnp.argmax(tokens, axis=-1)                               # text.argmax(dim=-1)
    x = x[jnp.arange(B), eot]                                       # [B, D]
    # LayerNorm is per-row, so gather-then-LN == LN-then-gather: fuse
    # ln_final + text projection on just the EOT rows.
    x = ln_matmul_bias(x, tp["ln_final_g"], tp["ln_final_b"], tp["text_proj"])
    return x


def clip_forward(images, tokens, params):
    image_features = encode_image(images, params["visual"], params["vision_heads"])
    text_features = encode_text(tokens, params["text"], params["text_heads"])
    logits_per_image = clip_logits(image_features, text_features,
                                   params["logit_scale"])
    logits_per_text = logits_per_image.T
    return logits_per_image, logits_per_text


# ------------------------------------------------------------------
# Deterministic parameter init (synthetic; shapes follow CLIP's __init__)
# Big matmul weights are stored in bf16 (f32 accumulation in the kernels).
# ------------------------------------------------------------------

def init_layer_params(key, width):
    ks = jax.random.split(key, 4)
    hidden = 4 * width
    s = width ** -0.5
    return dict(
        ln1_g=jnp.ones((width,), jnp.float32),
        ln1_b=jnp.zeros((width,), jnp.float32),
        attn_in_w=(jax.random.normal(ks[0], (width, 3 * width), jnp.float32)
                   * s).astype(jnp.bfloat16),
        attn_in_b=jnp.zeros((3 * width,), jnp.float32),
        attn_out_w=(jax.random.normal(ks[1], (width, width), jnp.float32)
                    * s).astype(jnp.bfloat16),
        attn_out_b=jnp.zeros((width,), jnp.float32),
        ln2_g=jnp.ones((width,), jnp.float32),
        ln2_b=jnp.zeros((width,), jnp.float32),
        fc1_w=(jax.random.normal(ks[2], (width, hidden), jnp.float32)
               * s).astype(jnp.bfloat16),
        fc1_b=jnp.zeros((hidden,), jnp.float32),
        fc2_w=(jax.random.normal(ks[3], (hidden, width), jnp.float32)
               * (hidden ** -0.5)).astype(jnp.bfloat16),
        fc2_b=jnp.zeros((width,), jnp.float32),
    )


def init_clip_params(key, *, embed_dim, input_resolution, vision_layers,
                     vision_width, vision_patch_size, context_length,
                     transformer_layers, transformer_width, transformer_heads,
                     vocab_size):
    kv, kt, k1, k2, k3, k4, k5, k6 = jax.random.split(key, 8)
    grid = input_resolution // vision_patch_size
    vs = vision_width ** -0.5
    ts = transformer_width ** -0.5

    visual = dict(
        conv_w=(jax.random.normal(
            k1, (vision_width, 3, vision_patch_size, vision_patch_size),
            jnp.float32) * vs).astype(jnp.bfloat16),
        class_emb=jax.random.normal(k2, (vision_width,), jnp.float32) * vs,
        pos_emb=jax.random.normal(
            k3, (grid * grid + 1, vision_width), jnp.float32) * vs,
        ln_pre_g=jnp.ones((vision_width,), jnp.float32),
        ln_pre_b=jnp.zeros((vision_width,), jnp.float32),
        layers=[init_layer_params(k, vision_width)
                for k in jax.random.split(kv, vision_layers)],
        ln_post_g=jnp.ones((vision_width,), jnp.float32),
        ln_post_b=jnp.zeros((vision_width,), jnp.float32),
        proj=(jax.random.normal(k4, (vision_width, embed_dim), jnp.float32)
              * vs).astype(jnp.bfloat16),
    )
    text = dict(
        tok_emb=jax.random.normal(
            k5, (vocab_size, transformer_width), jnp.float32) * 0.02,
        pos_emb=jax.random.normal(
            k6, (context_length, transformer_width), jnp.float32) * 0.01,
        layers=[init_layer_params(k, transformer_width)
                for k in jax.random.split(kt, transformer_layers)],
        ln_final_g=jnp.ones((transformer_width,), jnp.float32),
        ln_final_b=jnp.zeros((transformer_width,), jnp.float32),
        text_proj=(jax.random.normal(
            jax.random.fold_in(k5, 7), (transformer_width, embed_dim),
            jnp.float32) * ts).astype(jnp.bfloat16),
    )
    return dict(
        visual=visual,
        text=text,
        vision_heads=max(1, vision_width // 64),
        text_heads=transformer_heads,
        logit_scale=jnp.array(jnp.log(1.0 / 0.07), jnp.float32),
    )


# ------------------------------------------------------------------
# Main
# ------------------------------------------------------------------

if __name__ == "__main__":
    # Small synthetic config consistent with the CLIP forward pass (D=128 keeps
    # all lane dims 128-aligned; head_dim=64 as in real CLIP).
    cfg = dict(embed_dim=128, input_resolution=32, vision_layers=2,
               vision_width=128, vision_patch_size=16, context_length=8,
               transformer_layers=2, transformer_width=128,
               transformer_heads=2, vocab_size=64)

    key = jax.random.PRNGKey(0)
    kp, ki, kt = jax.random.split(key, 3)

    params = init_clip_params(kp, **cfg)

    B = 2
    images = jax.random.normal(
        ki, (B, 3, cfg["input_resolution"], cfg["input_resolution"]),
        jnp.float32)                                               # NCHW
    tokens = jax.random.randint(
        kt, (B, cfg["context_length"]), 1, cfg["vocab_size"], jnp.int32)

    logits_per_image, logits_per_text = jax.jit(
        lambda im, tok: clip_forward(im, tok, params))(images, tokens)
    jax.block_until_ready((logits_per_image, logits_per_text))

    assert logits_per_image.shape == (B, B)
    assert logits_per_text.shape == (B, B)
    assert bool(jnp.all(jnp.isfinite(logits_per_image)))
    print("KERNEL_OK")
</pallas_src>

<mosaic_0001>
module attributes {stable_mosaic.version = 11 : i64} {
  func.func @_matmul_bias_kernel(%arg0: i32, %arg1: i32, %arg2: i32, %arg3: memref<8x512xbf16, #tpu.memory_space<vmem>>, %arg4: memref<512x128xbf16, #tpu.memory_space<vmem>>, %arg5: memref<1x128xf32, #tpu.memory_space<vmem>>, %arg6: memref<8x128xf32, #tpu.memory_space<vmem>>, %arg7: memref<8x128xf32, #tpu.memory_space<vmem>>) attributes {dimension_semantics = [#tpu.dimension_semantics<parallel>, #tpu.dimension_semantics<parallel>, #tpu.dimension_semantics<arbitrary>], iteration_bounds = array<i64: 1, 1, 2>, scalar_prefetch = 0 : i64, scratch_operands = 1 : i64, tpu.core_type = #tpu.core_type<tc>, window_params = [{transform_indices = @transform_0, window_bounds = array<i64: 8, 512>}, {transform_indices = @transform_1, window_bounds = array<i64: 512, 128>}, {transform_indices = @transform_2, window_bounds = array<i64: 1, 128>}, {transform_indices = @transform_3, window_bounds = array<i64: 8, 128>}]} {
    %c0_i32 = arith.constant 0 : i32
    %0 = arith.cmpi eq, %arg2, %c0_i32 : i32
    %1 = arith.extui %0 : i1 to i32
    %c0_i32_0 = arith.constant 0 : i32
    %2 = arith.cmpi ne, %1, %c0_i32_0 : i32
    scf.if %2 {
      %cst_9 = arith.constant 0.000000e+00 : f32
      %12 = vector.broadcast %cst_9 : f32 to vector<8x128xf32>
      %c0_10 = arith.constant 0 : index
      %c0_11 = arith.constant 0 : index
      %13 = vector.load %arg7[%c0_10, %c0_11] : memref<8x128xf32, #tpu.memory_space<vmem>>, vector<8x128xf32>
      tpu.vector_store %arg7[%c0_10, %c0_11], %12 {strides = array<i32>} : memref<8x128xf32, #tpu.memory_space<vmem>>, vector<8x128xf32>,
    } else {
    }
    %c0 = arith.constant 0 : index
    %c0_1 = arith.constant 0 : index
    %3 = vector.load %arg7[%c0, %c0_1] : memref<8x128xf32, #tpu.memory_space<vmem>>, vector<8x128xf32>
    %c0_2 = arith.constant 0 : index
    %c0_3 = arith.constant 0 : index
    %4 = vector.load %arg3[%c0_2, %c0_3] : memref<8x512xbf16, #tpu.memory_space<vmem>>, vector<8x512xbf16>
    %c0_4 = arith.constant 0 : index
    %c0_5 = arith.constant 0 : index
    %5 = vector.load %arg4[%c0_4, %c0_5] : memref<512x128xbf16, #tpu.memory_space<vmem>>, vector<512x128xbf16>
    %cst = arith.constant dense<0.000000e+00> : vector<8x128xf32>
    %6 = tpu.matmul %4, %5, %cst {dimension_numbers = #tpu.dot_dimension_numbers<[1], [0], [0], [1], [0, 0, 1, 1], [], []>} : vector<8x512xbf16>, vector<512x128xbf16>, vector<8x128xf32> -> vector<8x128xf32>
    %7 = arith.addf %3, %6 : vector<8x128xf32>
    %c0_6 = arith.constant 0 : index
    %c0_7 = arith.constant 0 : index
    %8 = vector.load %arg7[%c0_6, %c0_7] : memref<8x128xf32, #tpu.memory_space<vmem>>, vector<8x128xf32>
    tpu.vector_store %arg7[%c0_6, %c0_7], %7 {strides = array<i32>} : memref<8x128xf32, #tpu.memory_space<vmem>>, vector<8x128xf32>,
    %c1_i32 = arith.constant 1 : i32
    %9 = arith.cmpi eq, %arg2, %c1_i32 : i32
    %10 = arith.extui %9 : i1 to i32
    %c0_i32_8 = arith.constant 0 : i32
    %11 = arith.cmpi ne, %10, %c0_i32_8 : i32
    scf.if %11 {
      %c0_9 = arith.constant 0 : index
      %c0_10 = arith.constant 0 : index
      %12 = vector.load %arg7[%c0_9, %c0_10] : memref<8x128xf32, #tpu.memory_space<vmem>>, vector<8x128xf32>
      %c0_11 = arith.constant 0 : index
      %c0_12 = arith.constant 0 : index
      %13 = vector.load %arg5[%c0_11, %c0_12] : memref<1x128xf32, #tpu.memory_space<vmem>>, vector<1x128xf32>
      %14 = vector.broadcast %13 : vector<1x128xf32> to vector<8x128xf32>
      %15 = arith.addf %12, %14 : vector<8x128xf32>
      %c0_13 = arith.constant 0 : index
      %c0_14 = arith.constant 0 : index
      %16 = vector.load %arg6[%c0_13, %c0_14] : memref<8x128xf32, #tpu.memory_space<vmem>>, vector<8x128xf32>
      tpu.vector_store %arg6[%c0_13, %c0_14], %15 {strides = array<i32>} : memref<8x128xf32, #tpu.memory_space<vmem>>, vector<8x128xf32>,
    } else {
    }
    return
  }
  func.func @transform_0(%arg0: i32, %arg1: i32, %arg2: i32) -> (i32, i32) {
    %c0_i32 = arith.constant 0 : i32
    return %arg0, %arg2 : i32, i32
  }
  func.func @transform_1(%arg0: i32, %arg1: i32, %arg2: i32) -> (i32, i32) {
    %c0_i32 = arith.constant 0 : i32
    return %arg2, %arg1 : i32, i32
  }
  func.func @transform_2(%arg0: i32, %arg1: i32, %arg2: i32) -> (i32, i32) {
    %c0_i32 = arith.constant 0 : i32
    %c0_i32_0 = arith.constant 0 : i32
    return %c0_i32, %arg1 : i32, i32
  }
  func.func @transform_3(%arg0: i32, %arg1: i32, %arg2: i32) -> (i32, i32) {
    %c0_i32 = arith.constant 0 : i32
    return %arg0, %arg1 : i32, i32
  }
}

module attributes {stable_mosaic.version = 11 : i64} {
  func.func @_layernorm_kernel(%arg0: i32, %arg1: memref<16x128xf32, #tpu.memory_space<vmem>>, %arg2: memref<1x128xf32, #tpu.memory_space<vmem>>, %arg3: memref<1x128xf32, #tpu.memory_space<vmem>>, %arg4: memref<16x128xf32, #tpu.memory_space<vmem>>) attributes {dimension_semantics = [#tpu.dimension_semantics<parallel>], iteration_bounds = array<i64: 1>, scalar_prefetch = 0 : i64, scratch_operands = 0 : i64, tpu.core_type = #tpu.core_type<tc>, window_params = [{transform_indices = @transform_0, window_bounds = array<i64: 16, 128>}, {pipeline_mode = #tpu.pipeline_mode<synchronous>, transform_indices = @transform_1, window_bounds = array<i64: 1, 128>}, {pipeline_mode = #tpu.pipeline_mode<synchronous>, transform_indices = @transform_2, window_bounds = array<i64: 1, 128>}, {transform_indices = @transform_3, window_bounds = array<i64: 16, 128>}]} {
    %c0 = arith.constant 0 : index
    %c0_0 = arith.constant 0 : index
    %0 = vector.load %arg1[%c0, %c0_0] : memref<16x128xf32, #tpu.memory_space<vmem>>, vector<16x128xf32>
    %cst = arith.constant dense<0.000000e+00> : vector<16xf32>
    %1 = vector.multi_reduction <add>, %0, %cst [1] : vector<16x128xf32> to vector<16xf32>
    %2 = vector.shape_cast %1 : vector<16xf32> to vector<16x1xf32>
    %cst_1 = arith.constant 1.280000e+02 : f32
    %3 = vector.broadcast %cst_1 : f32 to vector<16x1xf32>
    %4 = arith.divf %2, %3 : vector<16x1xf32>
    %5 = vector.broadcast %4 : vector<16x1xf32> to vector<16x128xf32>
    %6 = arith.subf %0, %5 : vector<16x128xf32>
    %7 = arith.mulf %6, %6 : vector<16x128xf32>
    %cst_2 = arith.constant dense<0.000000e+00> : vector<16xf32>
    %8 = vector.multi_reduction <add>, %7, %cst_2 [1] : vector<16x128xf32> to vector<16xf32>
    %9 = vector.shape_cast %8 : vector<16xf32> to vector<16x1xf32>
    %cst_3 = arith.constant 1.280000e+02 : f32
    %10 = vector.broadcast %cst_3 : f32 to vector<16x1xf32>
    %11 = arith.divf %9, %10 : vector<16x1xf32>
    %cst_4 = arith.constant 9.99999974E-6 : f32
    %12 = vector.broadcast %cst_4 : f32 to vector<16x1xf32>
    %13 = arith.addf %11, %12 : vector<16x1xf32>
    %14 = math.rsqrt %13 : vector<16x1xf32>
    %15 = vector.broadcast %14 : vector<16x1xf32> to vector<16x128xf32>
    %16 = arith.mulf %6, %15 : vector<16x128xf32>
    %c0_5 = arith.constant 0 : index
    %c0_6 = arith.constant 0 : index
    %17 = vector.load %arg2[%c0_5, %c0_6] : memref<1x128xf32, #tpu.memory_space<vmem>>, vector<1x128xf32>
    %18 = vector.broadcast %17 : vector<1x128xf32> to vector<16x128xf32>
    %19 = arith.mulf %16, %18 : vector<16x128xf32>
    %c0_7 = arith.constant 0 : index
    %c0_8 = arith.constant 0 : index
    %20 = vector.load %arg3[%c0_7, %c0_8] : memref<1x128xf32, #tpu.memory_space<vmem>>, vector<1x128xf32>
    %21 = vector.broadcast %20 : vector<1x128xf32> to vector<16x128xf32>
    %22 = arith.addf %19, %21 : vector<16x128xf32>
    %c0_9 = arith.constant 0 : index
    %c0_10 = arith.constant 0 : index
    %23 = vector.load %arg4[%c0_9, %c0_10] : memref<16x128xf32, #tpu.memory_space<vmem>>, vector<16x128xf32>
    tpu.vector_store %arg4[%c0_9, %c0_10], %22 {strides = array<i32>} : memref<16x128xf32, #tpu.memory_space<vmem>>, vector<16x128xf32>,
    return
  }
  func.func @transform_0(%arg0: i32) -> (i32, i32) {
    %c0_i32 = arith.constant 0 : i32
    %c0_i32_0 = arith.constant 0 : i32
    return %arg0, %c0_i32 : i32, i32
  }
  func.func @transform_1(%arg0: i32) -> (i32, i32) {
    %c0_i32 = arith.constant 0 : i32
    %c0_i32_0 = arith.constant 0 : i32
    %c0_i32_1 = arith.constant 0 : i32
    return %c0_i32, %c0_i32_0 : i32, i32
  }
  func.func @transform_2(%arg0: i32) -> (i32, i32) {
    %c0_i32 = arith.constant 0 : i32
    %c0_i32_0 = arith.constant 0 : i32
    %c0_i32_1 = arith.constant 0 : i32
    return %c0_i32, %c0_i32_0 : i32, i32
  }
  func.func @transform_3(%arg0: i32) -> (i32, i32) {
    %c0_i32 = arith.constant 0 : i32
    %c0_i32_0 = arith.constant 0 : i32
    return %arg0, %c0_i32 : i32, i32
  }
}

module attributes {stable_mosaic.version = 11 : i64} {
  func.func @_ln_matmul_bias_kernel(%arg0: i32, %arg1: i32, %arg2: memref<16x128xf32, #tpu.memory_space<vmem>>, %arg3: memref<1x128xf32, #tpu.memory_space<vmem>>, %arg4: memref<1x128xf32, #tpu.memory_space<vmem>>, %arg5: memref<128x384xbf16, #tpu.memory_space<vmem>>, %arg6: memref<1x384xf32, #tpu.memory_space<vmem>>, %arg7: memref<16x384xbf16, #tpu.memory_space<vmem>>, %arg8: memref<16x128xbf16, #tpu.memory_space<vmem>>) attributes {dimension_semantics = [#tpu.dimension_semantics<parallel>, #tpu.dimension_semantics<arbitrary>], iteration_bounds = array<i64: 1, 1>, scalar_prefetch = 0 : i64, scratch_operands = 1 : i64, tpu.core_type = #tpu.core_type<tc>, window_params = [{transform_indices = @transform_0, window_bounds = array<i64: 16, 128>}, {pipeline_mode = #tpu.pipeline_mode<synchronous>, transform_indices = @transform_1, window_bounds = array<i64: 1, 128>}, {pipeline_mode = #tpu.pipeline_mode<synchronous>, transform_indices = @transform_2, window_bounds = array<i64: 1, 128>}, {transform_indices = @transform_3, window_bounds = array<i64: 128, 384>}, {transform_indices = @transform_4, window_bounds = array<i64: 1, 384>}, {transform_indices = @transform_5, window_bounds = array<i64: 16, 384>}]} {
    %c0_i32 = arith.constant 0 : i32
    %0 = arith.cmpi eq, %arg1, %c0_i32 : i32
    %1 = arith.extui %0 : i1 to i32
    %c0_i32_0 = arith.constant 0 : i32
    %2 = arith.cmpi ne, %1, %c0_i32_0 : i32
    scf.if %2 {
      %c0_8 = arith.constant 0 : index
      %c0_9 = arith.constant 0 : index
      %11 = vector.load %arg2[%c0_8, %c0_9] : memref<16x128xf32, #tpu.memory_space<vmem>>, vector<16x128xf32>
      %cst_10 = arith.constant dense<0.000000e+00> : vector<16xf32>
      %12 = vector.multi_reduction <add>, %11, %cst_10 [1] : vector<16x128xf32> to vector<16xf32>
      %13 = vector.shape_cast %12 : vector<16xf32> to vector<16x1xf32>
      %cst_11 = arith.constant 1.280000e+02 : f32
      %14 = vector.broadcast %cst_11 : f32 to vector<16x1xf32>
      %15 = arith.divf %13, %14 : vector<16x1xf32>
      %16 = vector.broadcast %15 : vector<16x1xf32> to vector<16x128xf32>
      %17 = arith.subf %11, %16 : vector<16x128xf32>
      %18 = arith.mulf %17, %17 : vector<16x128xf32>
      %cst_12 = arith.constant dense<0.000000e+00> : vector<16xf32>
      %19 = vector.multi_reduction <add>, %18, %cst_12 [1] : vector<16x128xf32> to vector<16xf32>
      %20 = vector.shape_cast %19 : vector<16xf32> to vector<16x1xf32>
      %cst_13 = arith.constant 1.280000e+02 : f32
      %21 = vector.broadcast %cst_13 : f32 to vector<16x1xf32>
      %22 = arith.divf %20, %21 : vector<16x1xf32>
      %cst_14 = arith.constant 9.99999974E-6 : f32
      %23 = vector.broadcast %cst_14 : f32 to vector<16x1xf32>
      %24 = arith.addf %22, %23 : vector<16x1xf32>
      %25 = math.rsqrt %24 : vector<16x1xf32>
      %26 = vector.broadcast %25 : vector<16x1xf32> to vector<16x128xf32>
      %27 = arith.mulf %17, %26 : vector<16x128xf32>
      %c0_15 = arith.constant 0 : index
      %c0_16 = arith.constant 0 : index
      %28 = vector.load %arg3[%c0_15, %c0_16] : memref<1x128xf32, #tpu.memory_space<vmem>>, vector<1x128xf32>
      %29 = vector.broadcast %28 : vector<1x128xf32> to vector<16x128xf32>
      %30 = arith.mulf %27, %29 : vector<16x128xf32>
      %c0_17 = arith.constant 0 : index
      %c0_18 = arith.constant 0 : index
      %31 = vector.load %arg4[%c0_17, %c0_18] : memref<1x128xf32, #tpu.memory_space<vmem>>, vector<1x128xf32>
      %32 = vector.broadcast %31 : vector<1x128xf32> to vector<16x128xf32>
      %33 = arith.addf %30, %32 : vector<16x128xf32>
      %34 = arith.truncf %33 : vector<16x128xf32> to vector<16x128xbf16>
      %c0_19 = arith.constant 0 : index
      %c0_20 = arith.constant 0 : index
      %35 = vector.load %arg8[%c0_19, %c0_20] : memref<16x128xbf16, #tpu.memory_space<vmem>>, vector<16x128xbf16>
      tpu.vector_store %arg8[%c0_19, %c0_20], %34 {strides = array<i32>} : memref<16x128xbf16, #tpu.memory_space<vmem>>, vector<16x128xbf16>,
    } else {
    }
    %c0 = arith.constant 0 : index
    %c0_1 = arith.constant 0 : index
    %3 = vector.load %arg8[%c0, %c0_1] : memref<16x128xbf16, #tpu.memory_space<vmem>>, vector<16x128xbf16>
    %c0_2 = arith.constant 0 : index
    %c0_3 = arith.constant 0 : index
    %4 = vector.load %arg5[%c0_2, %c0_3] : memref<128x384xbf16, #tpu.memory_space<vmem>>, vector<128x384xbf16>
    %cst = arith.constant dense<0.000000e+00> : vector<16x384xf32>
    %5 = tpu.matmul %3, %4, %cst {dimension_numbers = #tpu.dot_dimension_numbers<[1], [0], [0], [1], [0, 0, 1, 1], [], []>} : vector<16x128xbf16>, vector<128x384xbf16>, vector<16x384xf32> -> vector<16x384xf32>
    %c0_4 = arith.constant 0 : index
    %c0_5 = arith.constant 0 : index
    %6 = vector.load %arg6[%c0_4, %c0_5] : memref<1x384xf32, #tpu.memory_space<vmem>>, vector<1x384xf32>
    %7 = vector.broadcast %6 : vector<1x384xf32> to vector<16x384xf32>
    %8 = arith.addf %5, %7 : vector<16x384xf32>
    %9 = arith.truncf %8 : vector<16x384xf32> to vector<16x384xbf16>
    %c0_6 = arith.constant 0 : index
    %c0_7 = arith.constant 0 : index
    %10 = vector.load %arg7[%c0_6, %c0_7] : memref<16x384xbf16, #tpu.memory_space<vmem>>, vector<16x384xbf16>
    tpu.vector_store %arg7[%c0_6, %c0_7], %9 {strides = array<i32>} : memref<16x384xbf16, #tpu.memory_space<vmem>>, vector<16x384xbf16>,
    return
  }
  func.func @transform_0(%arg0: i32, %arg1: i32) -> (i32, i32) {
    %c0_i32 = arith.constant 0 : i32
    %c0_i32_0 = arith.constant 0 : i32
    return %arg0, %c0_i32 : i32, i32
  }
  func.func @transform_1(%arg0: i32, %arg1: i32) -> (i32, i32) {
    %c0_i32 = arith.constant 0 : i32
    %c0_i32_0 = arith.constant 0 : i32
    %c0_i32_1 = arith.constant 0 : i32
    return %c0_i32, %c0_i32_0 : i32, i32
  }
  func.func @transform_2(%arg0: i32, %arg1: i32) -> (i32, i32) {
    %c0_i32 = arith.constant 0 : i32
    %c0_i32_0 = arith.constant 0 : i32
    %c0_i32_1 = arith.constant 0 : i32
    return %c0_i32, %c0_i32_0 : i32, i32
  }
  func.func @transform_3(%arg0: i32, %arg1: i32) -> (i32, i32) {
    %c0_i32 = arith.constant 0 : i32
    %c0_i32_0 = arith.constant 0 : i32
    return %c0_i32, %arg1 : i32, i32
  }
  func.func @transform_4(%arg0: i32, %arg1: i32) -> (i32, i32) {
    %c0_i32 = arith.constant 0 : i32
    %c0_i32_0 = arith.constant 0 : i32
    return %c0_i32, %arg1 : i32, i32
  }
  func.func @transform_5(%arg0: i32, %arg1: i32) -> (i32, i32) {
    %c0_i32 = arith.constant 0 : i32
    return %arg0, %arg1 : i32, i32
  }
}

module attributes {stable_mosaic.version = 11 : i64} {
  func.func @_attention_kernel(%arg0: i32, %arg1: memref<1x5x384xbf16, #tpu.memory_space<vmem>>, %arg2: memref<1x5x128xbf16, #tpu.memory_space<vmem>>) attributes {dimension_semantics = [#tpu.dimension_semantics<parallel>], iteration_bounds = array<i64: 2>, scalar_prefetch = 0 : i64, scratch_operands = 0 : i64, tpu.core_type = #tpu.core_type<tc>, window_params = [{transform_indices = @transform_0, window_bounds = array<i64: 1, 5, 384>}, {transform_indices = @transform_1, window_bounds = array<i64: 1, 5, 128>}]} {
    %c0 = arith.constant 0 : index
    %c0_0 = arith.constant 0 : index
    %c0_1 = arith.constant 0 : index
    %0 = vector.load %arg1[%c0, %c0_0, %c0_1] : memref<1x5x384xbf16, #tpu.memory_space<vmem>>, vector<1x5x384xbf16>
    %1 = vector.shape_cast %0 : vector<1x5x384xbf16> to vector<5x384xbf16>
    %2 = vector.extract_strided_slice %1 {offsets = [0, 0], sizes = [5, 128], strides = [1, 1]} : vector<5x384xbf16> to vector<5x128xbf16>
    %3 = vector.shape_cast %2 : vector<5x128xbf16> to vector<5x2x64xbf16>
    %4 = tpu.transpose %3, [1, 0, 2] : vector<5x2x64xbf16> -> vector<2x5x64xbf16>
    %5 = vector.extract_strided_slice %1 {offsets = [0, 128], sizes = [5, 128], strides = [1, 1]} : vector<5x384xbf16> to vector<5x128xbf16>
    %6 = vector.shape_cast %5 : vector<5x128xbf16> to vector<5x2x64xbf16>
    %7 = tpu.transpose %6, [1, 0, 2] : vector<5x2x64xbf16> -> vector<2x5x64xbf16>
    %8 = vector.extract_strided_slice %1 {offsets = [0, 256], sizes = [5, 128], strides = [1, 1]} : vector<5x384xbf16> to vector<5x128xbf16>
    %9 = vector.shape_cast %8 : vector<5x128xbf16> to vector<5x2x64xbf16>
    %10 = tpu.transpose %9, [1, 0, 2] : vector<5x2x64xbf16> -> vector<2x5x64xbf16>
    "tpu.trace_start"() <{level = 10 : i32, message = "hqd,hkd->hqk"}> : () -> ()
    %cst = arith.constant dense<0.000000e+00> : vector<2x5x5xf32>
    %11 = tpu.matmul %4, %7, %cst {dimension_numbers = #tpu.dot_dimension_numbers<[2], [2], [1], [1], [0, 0, 0, 1, 1, 1], [0], [0]>} : vector<2x5x64xbf16>, vector<2x5x64xbf16>, vector<2x5x5xf32> -> vector<2x5x5xf32>
    "tpu.trace_stop"() : () -> ()
    %cst_2 = arith.constant 1.250000e-01 : f32
    %12 = vector.broadcast %cst_2 : f32 to vector<2x5x5xf32>
    %13 = arith.mulf %11, %12 : vector<2x5x5xf32>
    %cst_3 = arith.constant dense<0xFF800000> : vector<2x5xf32>
    %14 = vector.multi_reduction <maximumf>, %13, %cst_3 [2] : vector<2x5x5xf32> to vector<2x5xf32>
    %15 = vector.shape_cast %14 : vector<2x5xf32> to vector<2x5x1xf32>
    %16 = vector.broadcast %15 : vector<2x5x1xf32> to vector<2x5x5xf32>
    %17 = arith.subf %13, %16 : vector<2x5x5xf32>
    %18 = math.exp %17 : vector<2x5x5xf32>
    %cst_4 = arith.constant dense<0.000000e+00> : vector<2x5xf32>
    %19 = vector.multi_reduction <add>, %18, %cst_4 [2] : vector<2x5x5xf32> to vector<2x5xf32>
    %20 = vector.shape_cast %19 : vector<2x5xf32> to vector<2x5x1xf32>
    %21 = tpu.reciprocal %20 {approx = true} : vector<2x5x1xf32> -> vector<2x5x1xf32>
    %22 = vector.broadcast %21 : vector<2x5x1xf32> to vector<2x5x5xf32>
    %23 = arith.mulf %18, %22 : vector<2x5x5xf32>
    %24 = arith.truncf %23 : vector<2x5x5xf32> to vector<2x5x5xbf16>
    "tpu.trace_start"() <{level = 10 : i32, message = "hqk,hkd->hqd"}> : () -> ()
    %cst_5 = arith.constant dense<0.000000e+00> : vector<2x5x64xf32>
    %25 = tpu.matmul %24, %10, %cst_5 {dimension_numbers = #tpu.dot_dimension_numbers<[2], [1], [1], [2], [0, 0, 0, 1, 1, 2], [0], [0]>} : vector<2x5x5xbf16>, vector<2x5x64xbf16>, vector<2x5x64xf32> -> vector<2x5x64xf32>
    "tpu.trace_stop"() : () -> ()
    %26 = tpu.transpose %25, [1, 0, 2] : vector<2x5x64xf32> -> vector<5x2x64xf32>
    %27 = vector.shape_cast %26 : vector<5x2x64xf32> to vector<5x128xf32>
    %28 = arith.truncf %27 : vector<5x128xf32> to vector<5x128xbf16>
    %c0_6 = arith.constant 0 : index
    %c0_7 = arith.constant 0 : index
    %c0_8 = arith.constant 0 : index
    %29 = vector.load %arg2[%c0_6, %c0_7, %c0_8] : memref<1x5x128xbf16, #tpu.memory_space<vmem>>, vector<1x5x128xbf16>
    %30 = vector.shape_cast %29 : vector<1x5x128xbf16> to vector<5x128xbf16>
    %31 = vector.shape_cast %28 : vector<5x128xbf16> to vector<1x5x128xbf16>
    tpu.vector_store %arg2[%c0_6, %c0_7, %c0_8], %31 {strides = array<i32>} : memref<1x5x128xbf16, #tpu.memory_space<vmem>>, vector<1x5x128xbf16>,
    return
  }
  func.func @transform_0(%arg0: i32) -> (i32, i32, i32) {
    %c0_i32 = arith.constant 0 : i32
    %c0_i32_0 = arith.constant 0 : i32
    %c0_i32_1 = arith.constant 0 : i32
    return %arg0, %c0_i32, %c0_i32_0 : i32, i32, i32
  }
  func.func @transform_1(%arg0: i32) -> (i32, i32, i32) {
    %c0_i32 = arith.constant 0 : i32
    %c0_i32_0 = arith.constant 0 : i32
    %c0_i32_1 = arith.constant 0 : i32
    return %arg0, %c0_i32, %c0_i32_0 : i32, i32, i32
  }
}

module attributes {stable_mosaic.version = 11 : i64} {
  func.func @_matmul_bias_kernel(%arg0: i32, %arg1: i32, %arg2: i32, %arg3: memref<16x128xbf16, #tpu.memory_space<vmem>>, %arg4: memref<128x128xbf16, #tpu.memory_space<vmem>>, %arg5: memref<1x128xf32, #tpu.memory_space<vmem>>, %arg6: memref<16x128xf32, #tpu.memory_space<vmem>>, %arg7: memref<16x128xf32, #tpu.memory_space<vmem>>) attributes {dimension_semantics = [#tpu.dimension_semantics<parallel>, #tpu.dimension_semantics<parallel>, #tpu.dimension_semantics<arbitrary>], iteration_bounds = array<i64: 1, 1, 1>, scalar_prefetch = 0 : i64, scratch_operands = 1 : i64, tpu.core_type = #tpu.core_type<tc>, window_params = [{transform_indices = @transform_0, window_bounds = array<i64: 16, 128>}, {transform_indices = @transform_1, window_bounds = array<i64: 128, 128>}, {transform_indices = @transform_2, window_bounds = array<i64: 1, 128>}, {transform_indices = @transform_3, window_bounds = array<i64: 16, 128>}]} {
    %c0_i32 = arith.constant 0 : i32
    %0 = arith.cmpi eq, %arg2, %c0_i32 : i32
    %1 = arith.extui %0 : i1 to i32
    %c0_i32_0 = arith.constant 0 : i32
    %2 = arith.cmpi ne, %1, %c0_i32_0 : i32
    scf.if %2 {
      %cst_10 = arith.constant 0.000000e+00 : f32
      %12 = vector.broadcast %cst_10 : f32 to vector<16x128xf32>
      %c0_11 = arith.constant 0 : index
      %c0_12 = arith.constant 0 : index
      %13 = vector.load %arg7[%c0_11, %c0_12] : memref<16x128xf32, #tpu.memory_space<vmem>>, vector<16x128xf32>
      tpu.vector_store %arg7[%c0_11, %c0_12], %12 {strides = array<i32>} : memref<16x128xf32, #tpu.memory_space<vmem>>, vector<16x128xf32>,
    } else {
    }
    %c0 = arith.constant 0 : index
    %c0_1 = arith.constant 0 : index
    %3 = vector.load %arg7[%c0, %c0_1] : memref<16x128xf32, #tpu.memory_space<vmem>>, vector<16x128xf32>
    %c0_2 = arith.constant 0 : index
    %c0_3 = arith.constant 0 : index
    %4 = vector.load %arg3[%c0_2, %c0_3] : memref<16x128xbf16, #tpu.memory_space<vmem>>, vector<16x128xbf16>
    %c0_4 = arith.constant 0 : index
    %c0_5 = arith.constant 0 : index
    %5 = vector.load %arg4[%c0_4, %c0_5] : memref<128x128xbf16, #tpu.memory_space<vmem>>, vector<128x128xbf16>
    %cst = arith.constant dense<0.000000e+00> : vector<16x128xf32>
    %6 = tpu.matmul %4, %5, %cst {dimension_numbers = #tpu.dot_dimension_numbers<[1], [0], [0], [1], [0, 0, 1, 1], [], []>} : vector<16x128xbf16>, vector<128x128xbf16>, vector<16x128xf32> -> vector<16x128xf32>
    %7 = arith.addf %3, %6 : vector<16x128xf32>
    %c0_6 = arith.constant 0 : index
    %c0_7 = arith.constant 0 : index
    %8 = vector.load %arg7[%c0_6, %c0_7] : memref<16x128xf32, #tpu.memory_space<vmem>>, vector<16x128xf32>
    tpu.vector_store %arg7[%c0_6, %c0_7], %7 {strides = array<i32>} : memref<16x128xf32, #tpu.memory_space<vmem>>, vector<16x128xf32>,
    %c0_i32_8 = arith.constant 0 : i32
    %9 = arith.cmpi eq, %arg2, %c0_i32_8 : i32
    %10 = arith.extui %9 : i1 to i32
    %c0_i32_9 = arith.constant 0 : i32
    %11 = arith.cmpi ne, %10, %c0_i32_9 : i32
    scf.if %11 {
      %c0_10 = arith.constant 0 : index
      %c0_11 = arith.constant 0 : index
      %12 = vector.load %arg7[%c0_10, %c0_11] : memref<16x128xf32, #tpu.memory_space<vmem>>, vector<16x128xf32>
      %c0_12 = arith.constant 0 : index
      %c0_13 = arith.constant 0 : index
      %13 = vector.load %arg5[%c0_12, %c0_13] : memref<1x128xf32, #tpu.memory_space<vmem>>, vector<1x128xf32>
      %14 = vector.broadcast %13 : vector<1x128xf32> to vector<16x128xf32>
      %15 = arith.addf %12, %14 : vector<16x128xf32>
      %c0_14 = arith.constant 0 : index
      %c0_15 = arith.constant 0 : index
      %16 = vector.load %arg6[%c0_14, %c0_15] : memref<16x128xf32, #tpu.memory_space<vmem>>, vector<16x128xf32>
      tpu.vector_store %arg6[%c0_14, %c0_15], %15 {strides = array<i32>} : memref<16x128xf32, #tpu.memory_space<vmem>>, vector<16x128xf32>,
    } else {
    }
    return
  }
  func.func @transform_0(%arg0: i32, %arg1: i32, %arg2: i32) -> (i32, i32) {
    %c0_i32 = arith.constant 0 : i32
    return %arg0, %arg2 : i32, i32
  }
  func.func @transform_1(%arg0: i32, %arg1: i32, %arg2: i32) -> (i32, i32) {
    %c0_i32 = arith.constant 0 : i32
    return %arg2, %arg1 : i32, i32
  }
  func.func @transform_2(%arg0: i32, %arg1: i32, %arg2: i32) -> (i32, i32) {
    %c0_i32 = arith.constant 0 : i32
    %c0_i32_0 = arith.constant 0 : i32
    return %c0_i32, %arg1 : i32, i32
  }
  func.func @transform_3(%arg0: i32, %arg1: i32, %arg2: i32) -> (i32, i32) {
    %c0_i32 = arith.constant 0 : i32
    return %arg0, %arg1 : i32, i32
  }
}

module attributes {stable_mosaic.version = 11 : i64} {
  func.func @_ln_mlp_kernel(%arg0: i32, %arg1: i32, %arg2: memref<16x128xf32, #tpu.memory_space<vmem>>, %arg3: memref<1x128xf32, #tpu.memory_space<vmem>>, %arg4: memref<1x128xf32, #tpu.memory_space<vmem>>, %arg5: memref<128x512xbf16, #tpu.memory_space<vmem>>, %arg6: memref<1x512xf32, #tpu.memory_space<vmem>>, %arg7: memref<512x128xbf16, #tpu.memory_space<vmem>>, %arg8: memref<1x128xf32, #tpu.memory_space<vmem>>, %arg9: memref<16x128xf32, #tpu.memory_space<vmem>>, %arg10: memref<16x128xbf16, #tpu.memory_space<vmem>>, %arg11: memref<16x128xf32, #tpu.memory_space<vmem>>) attributes {dimension_semantics = [#tpu.dimension_semantics<parallel>, #tpu.dimension_semantics<arbitrary>], iteration_bounds = array<i64: 1, 1>, scalar_prefetch = 0 : i64, scratch_operands = 2 : i64, tpu.core_type = #tpu.core_type<tc>, window_params = [{transform_indices = @transform_0, window_bounds = array<i64: 16, 128>}, {pipeline_mode = #tpu.pipeline_mode<synchronous>, transform_indices = @transform_1, window_bounds = array<i64: 1, 128>}, {pipeline_mode = #tpu.pipeline_mode<synchronous>, transform_indices = @transform_2, window_bounds = array<i64: 1, 128>}, {transform_indices = @transform_3, window_bounds = array<i64: 128, 512>}, {transform_indices = @transform_4, window_bounds = array<i64: 1, 512>}, {transform_indices = @transform_5, window_bounds = array<i64: 512, 128>}, {pipeline_mode = #tpu.pipeline_mode<synchronous>, transform_indices = @transform_6, window_bounds = array<i64: 1, 128>}, {transform_indices = @transform_7, window_bounds = array<i64: 16, 128>}]} {
    %c0_i32 = arith.constant 0 : i32
    %0 = arith.cmpi eq, %arg1, %c0_i32 : i32
    %1 = arith.extui %0 : i1 to i32
    %c0_i32_0 = arith.constant 0 : i32
    %2 = arith.cmpi ne, %1, %c0_i32_0 : i32
    scf.if %2 {
      %cst_17 = arith.constant 0.000000e+00 : f32
      %26 = vector.broadcast %cst_17 : f32 to vector<16x128xf32>
      %c0_18 = arith.constant 0 : index
      %c0_19 = arith.constant 0 : index
      %27 = vector.load %arg11[%c0_18, %c0_19] : memref<16x128xf32, #tpu.memory_space<vmem>>, vector<16x128xf32>
      tpu.vector_store %arg11[%c0_18, %c0_19], %26 {strides = array<i32>} : memref<16x128xf32, #tpu.memory_space<vmem>>, vector<16x128xf32>,
      %c0_20 = arith.constant 0 : index
      %c0_21 = arith.constant 0 : index
      %28 = vector.load %arg2[%c0_20, %c0_21] : memref<16x128xf32, #tpu.memory_space<vmem>>, vector<16x128xf32>
      %cst_22 = arith.constant dense<0.000000e+00> : vector<16xf32>
      %29 = vector.multi_reduction <add>, %28, %cst_22 [1] : vector<16x128xf32> to vector<16xf32>
      %30 = vector.shape_cast %29 : vector<16xf32> to vector<16x1xf32>
      %cst_23 = arith.constant 1.280000e+02 : f32
      %31 = vector.broadcast %cst_23 : f32 to vector<16x1xf32>
      %32 = arith.divf %30, %31 : vector<16x1xf32>
      %33 = vector.broadcast %32 : vector<16x1xf32> to vector<16x128xf32>
      %34 = arith.subf %28, %33 : vector<16x128xf32>
      %35 = arith.mulf %34, %34 : vector<16x128xf32>
      %cst_24 = arith.constant dense<0.000000e+00> : vector<16xf32>
      %36 = vector.multi_reduction <add>, %35, %cst_24 [1] : vector<16x128xf32> to vector<16xf32>
      %37 = vector.shape_cast %36 : vector<16xf32> to vector<16x1xf32>
      %cst_25 = arith.constant 1.280000e+02 : f32
      %38 = vector.broadcast %cst_25 : f32 to vector<16x1xf32>
      %39 = arith.divf %37, %38 : vector<16x1xf32>
      %cst_26 = arith.constant 9.99999974E-6 : f32
      %40 = vector.broadcast %cst_26 : f32 to vector<16x1xf32>
      %41 = arith.addf %39, %40 : vector<16x1xf32>
      %42 = math.rsqrt %41 : vector<16x1xf32>
      %43 = vector.broadcast %42 : vector<16x1xf32> to vector<16x128xf32>
      %44 = arith.mulf %34, %43 : vector<16x128xf32>
      %c0_27 = arith.constant 0 : index
      %c0_28 = arith.constant 0 : index
      %45 = vector.load %arg3[%c0_27, %c0_28] : memref<1x128xf32, #tpu.memory_space<vmem>>, vector<1x128xf32>
      %46 = vector.broadcast %45 : vector<1x128xf32> to vector<16x128xf32>
      %47 = arith.mulf %44, %46 : vector<16x128xf32>
      %c0_29 = arith.constant 0 : index
      %c0_30 = arith.constant 0 : index
      %48 = vector.load %arg4[%c0_29, %c0_30] : memref<1x128xf32, #tpu.memory_space<vmem>>, vector<1x128xf32>
      %49 = vector.broadcast %48 : vector<1x128xf32> to vector<16x128xf32>
      %50 = arith.addf %47, %49 : vector<16x128xf32>
      %51 = arith.truncf %50 : vector<16x128xf32> to vector<16x128xbf16>
      %c0_31 = arith.constant 0 : index
      %c0_32 = arith.constant 0 : index
      %52 = vector.load %arg10[%c0_31, %c0_32] : memref<16x128xbf16, #tpu.memory_space<vmem>>, vector<16x128xbf16>
      tpu.vector_store %arg10[%c0_31, %c0_32], %51 {strides = array<i32>} : memref<16x128xbf16, #tpu.memory_space<vmem>>, vector<16x128xbf16>,
    } else {
    }
    %c0 = arith.constant 0 : index
    %c0_1 = arith.constant 0 : index
    %3 = vector.load %arg10[%c0, %c0_1] : memref<16x128xbf16, #tpu.memory_space<vmem>>, vector<16x128xbf16>
    %c0_2 = arith.constant 0 : index
    %c0_3 = arith.constant 0 : index
    %4 = vector.load %arg5[%c0_2, %c0_3] : memref<128x512xbf16, #tpu.memory_space<vmem>>, vector<128x512xbf16>
    %cst = arith.constant dense<0.000000e+00> : vector<16x512xf32>
    %5 = tpu.matmul %3, %4, %cst {dimension_numbers = #tpu.dot_dimension_numbers<[1], [0], [0], [1], [0, 0, 1, 1], [], []>} : vector<16x128xbf16>, vector<128x512xbf16>, vector<16x512xf32> -> vector<16x512xf32>
    %c0_4 = arith.constant 0 : index
    %c0_5 = arith.constant 0 : index
    %6 = vector.load %arg6[%c0_4, %c0_5] : memref<1x512xf32, #tpu.memory_space<vmem>>, vector<1x512xf32>
    %7 = vector.broadcast %6 : vector<1x512xf32> to vector<16x512xf32>
    %8 = arith.addf %5, %7 : vector<16x512xf32>
    %cst_6 = arith.constant 1.702000e+00 : f32
    %9 = vector.broadcast %cst_6 : f32 to vector<16x512xf32>
    %10 = arith.mulf %9, %8 : vector<16x512xf32>
    %11 = arith.negf %10 : vector<16x512xf32>
    %12 = math.exp %11 : vector<16x512xf32>
    %cst_7 = arith.constant 1.000000e+00 : f32
    %13 = vector.broadcast %cst_7 : f32 to vector<16x512xf32>
    %14 = arith.addf %13, %12 : vector<16x512xf32>
    %15 = arith.divf %13, %14 : vector<16x512xf32>
    %16 = arith.mulf %8, %15 : vector<16x512xf32>
    %c0_8 = arith.constant 0 : index
    %c0_9 = arith.constant 0 : index
    %17 = vector.load %arg11[%c0_8, %c0_9] : memref<16x128xf32, #tpu.memory_space<vmem>>, vector<16x128xf32>
    %18 = arith.truncf %16 : vector<16x512xf32> to vector<16x512xbf16>
    %c0_10 = arith.constant 0 : index
    %c0_11 = arith.constant 0 : index
    %19 = vector.load %arg7[%c0_10, %c0_11] : memref<512x128xbf16, #tpu.memory_space<vmem>>, vector<512x128xbf16>
    %cst_12 = arith.constant dense<0.000000e+00> : vector<16x128xf32>
    %20 = tpu.matmul %18, %19, %cst_12 {dimension_numbers = #tpu.dot_dimension_numbers<[1], [0], [0], [1], [0, 0, 1, 1], [], []>} : vector<16x512xbf16>, vector<512x128xbf16>, vector<16x128xf32> -> vector<16x128xf32>
    %21 = arith.addf %17, %20 : vector<16x128xf32>
    %c0_13 = arith.constant 0 : index
    %c0_14 = arith.constant 0 : index
    %22 = vector.load %arg11[%c0_13, %c0_14] : memref<16x128xf32, #tpu.memory_space<vmem>>, vector<16x128xf32>
    tpu.vector_store %arg11[%c0_13, %c0_14], %21 {strides = array<i32>} : memref<16x128xf32, #tpu.memory_space<vmem>>, vector<16x128xf32>,
    %c0_i32_15 = arith.constant 0 : i32
    %23 = arith.cmpi eq, %arg1, %c0_i32_15 : i32
    %24 = arith.extui %23 : i1 to i32
    %c0_i32_16 = arith.constant 0 : i32
    %25 = arith.cmpi ne, %24, %c0_i32_16 : i32
    scf.if %25 {
      %c0_17 = arith.constant 0 : index
      %c0_18 = arith.constant 0 : index
      %26 = vector.load %arg11[%c0_17, %c0_18] : memref<16x128xf32, #tpu.memory_space<vmem>>, vector<16x128xf32>
      %c0_19 = arith.constant 0 : index
      %c0_20 = arith.constant 0 : index
      %27 = vector.load %arg8[%c0_19, %c0_20] : memref<1x128xf32, #tpu.memory_space<vmem>>, vector<1x128xf32>
      %28 = vector.broadcast %27 : vector<1x128xf32> to vector<16x128xf32>
      %29 = arith.addf %26, %28 : vector<16x128xf32>
      %c0_21 = arith.constant 0 : index
      %c0_22 = arith.constant 0 : index
      %30 = vector.load %arg9[%c0_21, %c0_22] : memref<16x128xf32, #tpu.memory_space<vmem>>, vector<16x128xf32>
      tpu.vector_store %arg9[%c0_21, %c0_22], %29 {strides = array<i32>} : memref<16x128xf32, #tpu.memory_space<vmem>>, vector<16x128xf32>,
    } else {
    }
    return
  }
  func.func @transform_0(%arg0: i32, %arg1: i32) -> (i32, i32) {
    %c0_i32 = arith.constant 0 : i32
    %c0_i32_0 = arith.constant 0 : i32
    return %arg0, %c0_i32 : i32, i32
  }
  func.func @transform_1(%arg0: i32, %arg1: i32) -> (i32, i32) {
    %c0_i32 = arith.constant 0 : i32
    %c0_i32_0 = arith.constant 0 : i32
    %c0_i32_1 = arith.constant 0 : i32
    return %c0_i32, %c0_i32_0 : i32, i32
  }
  func.func @transform_2(%arg0: i32, %arg1: i32) -> (i32, i32) {
    %c0_i32 = arith.constant 0 : i32
    %c0_i32_0 = arith.constant 0 : i32
    %c0_i32_1 = arith.constant 0 : i32
    return %c0_i32, %c0_i32_0 : i32, i32
  }
  func.func @transform_3(%arg0: i32, %arg1: i32) -> (i32, i32) {
    %c0_i32 = arith.constant 0 : i32
    %c0_i32_0 = arith.constant 0 : i32
    return %c0_i32, %arg1 : i32, i32
  }
  func.func @transform_4(%arg0: i32, %arg1: i32) -> (i32, i32) {
    %c0_i32 = arith.constant 0 : i32
    %c0_i32_0 = arith.constant 0 : i32
    return %c0_i32, %arg1 : i32, i32
  }
  func.func @transform_5(%arg0: i32, %arg1: i32) -> (i32, i32) {
    %c0_i32 = arith.constant 0 : i32
    %c0_i32_0 = arith.constant 0 : i32
    return %arg1, %c0_i32 : i32, i32
  }
  func.func @transform_6(%arg0: i32, %arg1: i32) -> (i32, i32) {
    %c0_i32 = arith.constant 0 : i32
    %c0_i32_0 = arith.constant 0 : i32
    %c0_i32_1 = arith.constant 0 : i32
    return %c0_i32, %c0_i32_0 : i32, i32
  }
  func.func @transform_7(%arg0: i32, %arg1: i32) -> (i32, i32) {
    %c0_i32 = arith.constant 0 : i32
    %c0_i32_0 = arith.constant 0 : i32
    return %arg0, %c0_i32 : i32, i32
  }
}

module attributes {stable_mosaic.version = 11 : i64} {
  func.func @_ln_matmul_bias_kernel(%arg0: i32, %arg1: i32, %arg2: memref<8x128xf32, #tpu.memory_space<vmem>>, %arg3: memref<1x128xf32, #tpu.memory_space<vmem>>, %arg4: memref<1x128xf32, #tpu.memory_space<vmem>>, %arg5: memref<128x128xbf16, #tpu.memory_space<vmem>>, %arg6: memref<1x128xf32, #tpu.memory_space<vmem>>, %arg7: memref<8x128xf32, #tpu.memory_space<vmem>>, %arg8: memref<8x128xbf16, #tpu.memory_space<vmem>>) attributes {dimension_semantics = [#tpu.dimension_semantics<parallel>, #tpu.dimension_semantics<arbitrary>], iteration_bounds = array<i64: 1, 1>, scalar_prefetch = 0 : i64, scratch_operands = 1 : i64, tpu.core_type = #tpu.core_type<tc>, window_params = [{transform_indices = @transform_0, window_bounds = array<i64: 8, 128>}, {pipeline_mode = #tpu.pipeline_mode<synchronous>, transform_indices = @transform_1, window_bounds = array<i64: 1, 128>}, {pipeline_mode = #tpu.pipeline_mode<synchronous>, transform_indices = @transform_2, window_bounds = array<i64: 1, 128>}, {transform_indices = @transform_3, window_bounds = array<i64: 128, 128>}, {transform_indices = @transform_4, window_bounds = array<i64: 1, 128>}, {transform_indices = @transform_5, window_bounds = array<i64: 8, 128>}]} {
    %c0_i32 = arith.constant 0 : i32
    %0 = arith.cmpi eq, %arg1, %c0_i32 : i32
    %1 = arith.extui %0 : i1 to i32
    %c0_i32_0 = arith.constant 0 : i32
    %2 = arith.cmpi ne, %1, %c0_i32_0 : i32
    scf.if %2 {
      %c0_8 = arith.constant 0 : index
      %c0_9 = arith.constant 0 : index
      %10 = vector.load %arg2[%c0_8, %c0_9] : memref<8x128xf32, #tpu.memory_space<vmem>>, vector<8x128xf32>
      %cst_10 = arith.constant dense<0.000000e+00> : vector<8xf32>
      %11 = vector.multi_reduction <add>, %10, %cst_10 [1] : vector<8x128xf32> to vector<8xf32>
      %12 = vector.shape_cast %11 : vector<8xf32> to vector<8x1xf32>
      %cst_11 = arith.constant 1.280000e+02 : f32
      %13 = vector.broadcast %cst_11 : f32 to vector<8x1xf32>
      %14 = arith.divf %12, %13 : vector<8x1xf32>
      %15 = vector.broadcast %14 : vector<8x1xf32> to vector<8x128xf32>
      %16 = arith.subf %10, %15 : vector<8x128xf32>
      %17 = arith.mulf %16, %16 : vector<8x128xf32>
      %cst_12 = arith.constant dense<0.000000e+00> : vector<8xf32>
      %18 = vector.multi_reduction <add>, %17, %cst_12 [1] : vector<8x128xf32> to vector<8xf32>
      %19 = vector.shape_cast %18 : vector<8xf32> to vector<8x1xf32>
      %cst_13 = arith.constant 1.280000e+02 : f32
      %20 = vector.broadcast %cst_13 : f32 to vector<8x1xf32>
      %21 = arith.divf %19, %20 : vector<8x1xf32>
      %cst_14 = arith.constant 9.99999974E-6 : f32
      %22 = vector.broadcast %cst_14 : f32 to vector<8x1xf32>
      %23 = arith.addf %21, %22 : vector<8x1xf32>
      %24 = math.rsqrt %23 : vector<8x1xf32>
      %25 = vector.broadcast %24 : vector<8x1xf32> to vector<8x128xf32>
      %26 = arith.mulf %16, %25 : vector<8x128xf32>
      %c0_15 = arith.constant 0 : index
      %c0_16 = arith.constant 0 : index
      %27 = vector.load %arg3[%c0_15, %c0_16] : memref<1x128xf32, #tpu.memory_space<vmem>>, vector<1x128xf32>
      %28 = vector.broadcast %27 : vector<1x128xf32> to vector<8x128xf32>
      %29 = arith.mulf %26, %28 : vector<8x128xf32>
      %c0_17 = arith.constant 0 : index
      %c0_18 = arith.constant 0 : index
      %30 = vector.load %arg4[%c0_17, %c0_18] : memref<1x128xf32, #tpu.memory_space<vmem>>, vector<1x128xf32>
      %31 = vector.broadcast %30 : vector<1x128xf32> to vector<8x128xf32>
      %32 = arith.addf %29, %31 : vector<8x128xf32>
      %33 = arith.truncf %32 : vector<8x128xf32> to vector<8x128xbf16>
      %c0_19 = arith.constant 0 : index
      %c0_20 = arith.constant 0 : index
      %34 = vector.load %arg8[%c0_19, %c0_20] : memref<8x128xbf16, #tpu.memory_space<vmem>>, vector<8x128xbf16>
      tpu.vector_store %arg8[%c0_19, %c0_20], %33 {strides = array<i32>} : memref<8x128xbf16, #tpu.memory_space<vmem>>, vector<8x128xbf16>,
    } else {
    }
    %c0 = arith.constant 0 : index
    %c0_1 = arith.constant 0 : index
    %3 = vector.load %arg8[%c0, %c0_1] : memref<8x128xbf16, #tpu.memory_space<vmem>>, vector<8x128xbf16>
    %c0_2 = arith.constant 0 : index
    %c0_3 = arith.constant 0 : index
    %4 = vector.load %arg5[%c0_2, %c0_3] : memref<128x128xbf16, #tpu.memory_space<vmem>>, vector<128x128xbf16>
    %cst = arith.constant dense<0.000000e+00> : vector<8x128xf32>
    %5 = tpu.matmul %3, %4, %cst {dimension_numbers = #tpu.dot_dimension_numbers<[1], [0], [0], [1], [0, 0, 1, 1], [], []>} : vector<8x128xbf16>, vector<128x128xbf16>, vector<8x128xf32> -> vector<8x128xf32>
    %c0_4 = arith.constant 0 : index
    %c0_5 = arith.constant 0 : index
    %6 = vector.load %arg6[%c0_4, %c0_5] : memref<1x128xf32, #tpu.memory_space<vmem>>, vector<1x128xf32>
    %7 = vector.broadcast %6 : vector<1x128xf32> to vector<8x128xf32>
    %8 = arith.addf %5, %7 : vector<8x128xf32>
    %c0_6 = arith.constant 0 : index
    %c0_7 = arith.constant 0 : index
    %9 = vector.load %arg7[%c0_6, %c0_7] : memref<8x128xf32, #tpu.memory_space<vmem>>, vector<8x128xf32>
    tpu.vector_store %arg7[%c0_6, %c0_7], %8 {strides = array<i32>} : memref<8x128xf32, #tpu.memory_space<vmem>>, vector<8x128xf32>,
    return
  }
  func.func @transform_0(%arg0: i32, %arg1: i32) -> (i32, i32) {
    %c0_i32 = arith.constant 0 : i32
    %c0_i32_0 = arith.constant 0 : i32
    return %arg0, %c0_i32 : i32, i32
  }
  func.func @transform_1(%arg0: i32, %arg1: i32) -> (i32, i32) {
    %c0_i32 = arith.constant 0 : i32
    %c0_i32_0 = arith.constant 0 : i32
    %c0_i32_1 = arith.constant 0 : i32
    return %c0_i32, %c0_i32_0 : i32, i32
  }
  func.func @transform_2(%arg0: i32, %arg1: i32) -> (i32, i32) {
    %c0_i32 = arith.constant 0 : i32
    %c0_i32_0 = arith.constant 0 : i32
    %c0_i32_1 = arith.constant 0 : i32
    return %c0_i32, %c0_i32_0 : i32, i32
  }
  func.func @transform_3(%arg0: i32, %arg1: i32) -> (i32, i32) {
    %c0_i32 = arith.constant 0 : i32
    %c0_i32_0 = arith.constant 0 : i32
    return %c0_i32, %arg1 : i32, i32
  }
  func.func @transform_4(%arg0: i32, %arg1: i32) -> (i32, i32) {
    %c0_i32 = arith.constant 0 : i32
    %c0_i32_0 = arith.constant 0 : i32
    return %c0_i32, %arg1 : i32, i32
  }
  func.func @transform_5(%arg0: i32, %arg1: i32) -> (i32, i32) {
    %c0_i32 = arith.constant 0 : i32
    return %arg0, %arg1 : i32, i32
  }
}

module attributes {stable_mosaic.version = 11 : i64} {
  func.func @_ln_matmul_bias_kernel(%arg0: i32, %arg1: i32, %arg2: memref<16x128xf32, #tpu.memory_space<vmem>>, %arg3: memref<1x128xf32, #tpu.memory_space<vmem>>, %arg4: memref<1x128xf32, #tpu.memory_space<vmem>>, %arg5: memref<128x384xbf16, #tpu.memory_space<vmem>>, %arg6: memref<1x384xf32, #tpu.memory_space<vmem>>, %arg7: memref<16x384xbf16, #tpu.memory_space<vmem>>, %arg8: memref<16x128xbf16, #tpu.memory_space<vmem>>) attributes {dimension_semantics = [#tpu.dimension_semantics<parallel>, #tpu.dimension_semantics<arbitrary>], iteration_bounds = array<i64: 1, 1>, scalar_prefetch = 0 : i64, scratch_operands = 1 : i64, tpu.core_type = #tpu.core_type<tc>, window_params = [{transform_indices = @transform_0, window_bounds = array<i64: 16, 128>}, {pipeline_mode = #tpu.pipeline_mode<synchronous>, transform_indices = @transform_1, window_bounds = array<i64: 1, 128>}, {pipeline_mode = #tpu.pipeline_mode<synchronous>, transform_indices = @transform_2, window_bounds = array<i64: 1, 128>}, {transform_indices = @transform_3, window_bounds = array<i64: 128, 384>}, {transform_indices = @transform_4, window_bounds = array<i64: 1, 384>}, {transform_indices = @transform_5, window_bounds = array<i64: 16, 384>}]} {
    %c0_i32 = arith.constant 0 : i32
    %0 = arith.cmpi eq, %arg1, %c0_i32 : i32
    %1 = arith.extui %0 : i1 to i32
    %c0_i32_0 = arith.constant 0 : i32
    %2 = arith.cmpi ne, %1, %c0_i32_0 : i32
    scf.if %2 {
      %c0_8 = arith.constant 0 : index
      %c0_9 = arith.constant 0 : index
      %11 = vector.load %arg2[%c0_8, %c0_9] : memref<16x128xf32, #tpu.memory_space<vmem>>, vector<16x128xf32>
      %cst_10 = arith.constant dense<0.000000e+00> : vector<16xf32>
      %12 = vector.multi_reduction <add>, %11, %cst_10 [1] : vector<16x128xf32> to vector<16xf32>
      %13 = vector.shape_cast %12 : vector<16xf32> to vector<16x1xf32>
      %cst_11 = arith.constant 1.280000e+02 : f32
      %14 = vector.broadcast %cst_11 : f32 to vector<16x1xf32>
      %15 = arith.divf %13, %14 : vector<16x1xf32>
      %16 = vector.broadcast %15 : vector<16x1xf32> to vector<16x128xf32>
      %17 = arith.subf %11, %16 : vector<16x128xf32>
      %18 = arith.mulf %17, %17 : vector<16x128xf32>
      %cst_12 = arith.constant dense<0.000000e+00> : vector<16xf32>
      %19 = vector.multi_reduction <add>, %18, %cst_12 [1] : vector<16x128xf32> to vector<16xf32>
      %20 = vector.shape_cast %19 : vector<16xf32> to vector<16x1xf32>
      %cst_13 = arith.constant 1.280000e+02 : f32
      %21 = vector.broadcast %cst_13 : f32 to vector<16x1xf32>
      %22 = arith.divf %20, %21 : vector<16x1xf32>
      %cst_14 = arith.constant 9.99999974E-6 : f32
      %23 = vector.broadcast %cst_14 : f32 to vector<16x1xf32>
      %24 = arith.addf %22, %23 : vector<16x1xf32>
      %25 = math.rsqrt %24 : vector<16x1xf32>
      %26 = vector.broadcast %25 : vector<16x1xf32> to vector<16x128xf32>
      %27 = arith.mulf %17, %26 : vector<16x128xf32>
      %c0_15 = arith.constant 0 : index
      %c0_16 = arith.constant 0 : index
      %28 = vector.load %arg3[%c0_15, %c0_16] : memref<1x128xf32, #tpu.memory_space<vmem>>, vector<1x128xf32>
      %29 = vector.broadcast %28 : vector<1x128xf32> to vector<16x128xf32>
      %30 = arith.mulf %27, %29 : vector<16x128xf32>
      %c0_17 = arith.constant 0 : index
      %c0_18 = arith.constant 0 : index
      %31 = vector.load %arg4[%c0_17, %c0_18] : memref<1x128xf32, #tpu.memory_space<vmem>>, vector<1x128xf32>
      %32 = vector.broadcast %31 : vector<1x128xf32> to vector<16x128xf32>
      %33 = arith.addf %30, %32 : vector<16x128xf32>
      %34 = arith.truncf %33 : vector<16x128xf32> to vector<16x128xbf16>
      %c0_19 = arith.constant 0 : index
      %c0_20 = arith.constant 0 : index
      %35 = vector.load %arg8[%c0_19, %c0_20] : memref<16x128xbf16, #tpu.memory_space<vmem>>, vector<16x128xbf16>
      tpu.vector_store %arg8[%c0_19, %c0_20], %34 {strides = array<i32>} : memref<16x128xbf16, #tpu.memory_space<vmem>>, vector<16x128xbf16>,
    } else {
    }
    %c0 = arith.constant 0 : index
    %c0_1 = arith.constant 0 : index
    %3 = vector.load %arg8[%c0, %c0_1] : memref<16x128xbf16, #tpu.memory_space<vmem>>, vector<16x128xbf16>
    %c0_2 = arith.constant 0 : index
    %c0_3 = arith.constant 0 : index
    %4 = vector.load %arg5[%c0_2, %c0_3] : memref<128x384xbf16, #tpu.memory_space<vmem>>, vector<128x384xbf16>
    %cst = arith.constant dense<0.000000e+00> : vector<16x384xf32>
    %5 = tpu.matmul %3, %4, %cst {dimension_numbers = #tpu.dot_dimension_numbers<[1], [0], [0], [1], [0, 0, 1, 1], [], []>} : vector<16x128xbf16>, vector<128x384xbf16>, vector<16x384xf32> -> vector<16x384xf32>
    %c0_4 = arith.constant 0 : index
    %c0_5 = arith.constant 0 : index
    %6 = vector.load %arg6[%c0_4, %c0_5] : memref<1x384xf32, #tpu.memory_space<vmem>>, vector<1x384xf32>
    %7 = vector.broadcast %6 : vector<1x384xf32> to vector<16x384xf32>
    %8 = arith.addf %5, %7 : vector<16x384xf32>
    %9 = arith.truncf %8 : vector<16x384xf32> to vector<16x384xbf16>
    %c0_6 = arith.constant 0 : index
    %c0_7 = arith.constant 0 : index
    %10 = vector.load %arg7[%c0_6, %c0_7] : memref<16x384xbf16, #tpu.memory_space<vmem>>, vector<16x384xbf16>
    tpu.vector_store %arg7[%c0_6, %c0_7], %9 {strides = array<i32>} : memref<16x384xbf16, #tpu.memory_space<vmem>>, vector<16x384xbf16>,
    return
  }
  func.func @transform_0(%arg0: i32, %arg1: i32) -> (i32, i32) {
    %c0_i32 = arith.constant 0 : i32
    %c0_i32_0 = arith.constant 0 : i32
    return %arg0, %c0_i32 : i32, i32
  }
  func.func @transform_1(%arg0: i32, %arg1: i32) -> (i32, i32) {
    %c0_i32 = arith.constant 0 : i32
    %c0_i32_0 = arith.constant 0 : i32
    %c0_i32_1 = arith.constant 0 : i32
    return %c0_i32, %c0_i32_0 : i32, i32
  }
  func.func @transform_2(%arg0: i32, %arg1: i32) -> (i32, i32) {
    %c0_i32 = arith.constant 0 : i32
    %c0_i32_0 = arith.constant 0 : i32
    %c0_i32_1 = arith.constant 0 : i32
    return %c0_i32, %c0_i32_0 : i32, i32
  }
  func.func @transform_3(%arg0: i32, %arg1: i32) -> (i32, i32) {
    %c0_i32 = arith.constant 0 : i32
    %c0_i32_0 = arith.constant 0 : i32
    return %c0_i32, %arg1 : i32, i32
  }
  func.func @transform_4(%arg0: i32, %arg1: i32) -> (i32, i32) {
    %c0_i32 = arith.constant 0 : i32
    %c0_i32_0 = arith.constant 0 : i32
    return %c0_i32, %arg1 : i32, i32
  }
  func.func @transform_5(%arg0: i32, %arg1: i32) -> (i32, i32) {
    %c0_i32 = arith.constant 0 : i32
    return %arg0, %arg1 : i32, i32
  }
}

module attributes {stable_mosaic.version = 11 : i64} {
  func.func @_attention_kernel(%arg0: i32, %arg1: memref<1x8x384xbf16, #tpu.memory_space<vmem>>, %arg2: memref<1x8x128xbf16, #tpu.memory_space<vmem>>) attributes {dimension_semantics = [#tpu.dimension_semantics<parallel>], iteration_bounds = array<i64: 2>, scalar_prefetch = 0 : i64, scratch_operands = 0 : i64, tpu.core_type = #tpu.core_type<tc>, window_params = [{transform_indices = @transform_0, window_bounds = array<i64: 1, 8, 384>}, {transform_indices = @transform_1, window_bounds = array<i64: 1, 8, 128>}]} {
    %c0 = arith.constant 0 : index
    %c0_0 = arith.constant 0 : index
    %c0_1 = arith.constant 0 : index
    %0 = vector.load %arg1[%c0, %c0_0, %c0_1] : memref<1x8x384xbf16, #tpu.memory_space<vmem>>, vector<1x8x384xbf16>
    %1 = vector.shape_cast %0 : vector<1x8x384xbf16> to vector<8x384xbf16>
    %2 = vector.extract_strided_slice %1 {offsets = [0, 0], sizes = [8, 128], strides = [1, 1]} : vector<8x384xbf16> to vector<8x128xbf16>
    %3 = vector.shape_cast %2 : vector<8x128xbf16> to vector<8x2x64xbf16>
    %4 = tpu.transpose %3, [1, 0, 2] : vector<8x2x64xbf16> -> vector<2x8x64xbf16>
    %5 = vector.extract_strided_slice %1 {offsets = [0, 128], sizes = [8, 128], strides = [1, 1]} : vector<8x384xbf16> to vector<8x128xbf16>
    %6 = vector.shape_cast %5 : vector<8x128xbf16> to vector<8x2x64xbf16>
    %7 = tpu.transpose %6, [1, 0, 2] : vector<8x2x64xbf16> -> vector<2x8x64xbf16>
    %8 = vector.extract_strided_slice %1 {offsets = [0, 256], sizes = [8, 128], strides = [1, 1]} : vector<8x384xbf16> to vector<8x128xbf16>
    %9 = vector.shape_cast %8 : vector<8x128xbf16> to vector<8x2x64xbf16>
    %10 = tpu.transpose %9, [1, 0, 2] : vector<8x2x64xbf16> -> vector<2x8x64xbf16>
    "tpu.trace_start"() <{level = 10 : i32, message = "hqd,hkd->hqk"}> : () -> ()
    %cst = arith.constant dense<0.000000e+00> : vector<2x8x8xf32>
    %11 = tpu.matmul %4, %7, %cst {dimension_numbers = #tpu.dot_dimension_numbers<[2], [2], [1], [1], [0, 0, 0, 1, 1, 1], [0], [0]>} : vector<2x8x64xbf16>, vector<2x8x64xbf16>, vector<2x8x8xf32> -> vector<2x8x8xf32>
    "tpu.trace_stop"() : () -> ()
    %cst_2 = arith.constant 1.250000e-01 : f32
    %12 = vector.broadcast %cst_2 : f32 to vector<2x8x8xf32>
    %13 = arith.mulf %11, %12 : vector<2x8x8xf32>
    %14 = tpu.iota {dimensions = array<i32: 0>} : vector<8x8xi32>
    %15 = tpu.iota {dimensions = array<i32: 1>} : vector<8x8xi32>
    %16 = arith.cmpi sgt, %15, %14 : vector<8x8xi32>
    %17 = vector.shape_cast %16 : vector<8x8xi1> to vector<1x8x8xi1>
    %cst_3 = arith.constant -1.000000e+30 : f32
    %18 = vector.shape_cast %17 : vector<1x8x8xi1> to vector<1x8x8xi1>
    %19 = vector.broadcast %18 : vector<1x8x8xi1> to vector<2x8x8xi1>
    %20 = vector.broadcast %cst_3 : f32 to vector<2x8x8xf32>
    %21 = arith.select %19, %20, %13 : vector<2x8x8xi1>, vector<2x8x8xf32>
    %cst_4 = arith.constant dense<0xFF800000> : vector<2x8xf32>
    %22 = vector.multi_reduction <maximumf>, %21, %cst_4 [2] : vector<2x8x8xf32> to vector<2x8xf32>
    %23 = vector.shape_cast %22 : vector<2x8xf32> to vector<2x8x1xf32>
    %24 = vector.broadcast %23 : vector<2x8x1xf32> to vector<2x8x8xf32>
    %25 = arith.subf %21, %24 : vector<2x8x8xf32>
    %26 = math.exp %25 : vector<2x8x8xf32>
    %cst_5 = arith.constant dense<0.000000e+00> : vector<2x8xf32>
    %27 = vector.multi_reduction <add>, %26, %cst_5 [2] : vector<2x8x8xf32> to vector<2x8xf32>
    %28 = vector.shape_cast %27 : vector<2x8xf32> to vector<2x8x1xf32>
    %29 = tpu.reciprocal %28 {approx = true} : vector<2x8x1xf32> -> vector<2x8x1xf32>
    %30 = vector.broadcast %29 : vector<2x8x1xf32> to vector<2x8x8xf32>
    %31 = arith.mulf %26, %30 : vector<2x8x8xf32>
    %32 = arith.truncf %31 : vector<2x8x8xf32> to vector<2x8x8xbf16>
    "tpu.trace_start"() <{level = 10 : i32, message = "hqk,hkd->hqd"}> : () -> ()
    %cst_6 = arith.constant dense<0.000000e+00> : vector<2x8x64xf32>
    %33 = tpu.matmul %32, %10, %cst_6 {dimension_numbers = #tpu.dot_dimension_numbers<[2], [1], [1], [2], [0, 0, 0, 1, 1, 2], [0], [0]>} : vector<2x8x8xbf16>, vector<2x8x64xbf16>, vector<2x8x64xf32> -> vector<2x8x64xf32>
    "tpu.trace_stop"() : () -> ()
    %34 = tpu.transpose %33, [1, 0, 2] : vector<2x8x64xf32> -> vector<8x2x64xf32>
    %35 = vector.shape_cast %34 : vector<8x2x64xf32> to vector<8x128xf32>
    %36 = arith.truncf %35 : vector<8x128xf32> to vector<8x128xbf16>
    %c0_7 = arith.constant 0 : index
    %c0_8 = arith.constant 0 : index
    %c0_9 = arith.constant 0 : index
    %37 = vector.load %arg2[%c0_7, %c0_8, %c0_9] : memref<1x8x128xbf16, #tpu.memory_space<vmem>>, vector<1x8x128xbf16>
    %38 = vector.shape_cast %37 : vector<1x8x128xbf16> to vector<8x128xbf16>
    %39 = vector.shape_cast %36 : vector<8x128xbf16> to vector<1x8x128xbf16>
    tpu.vector_store %arg2[%c0_7, %c0_8, %c0_9], %39 {strides = array<i32>} : memref<1x8x128xbf16, #tpu.memory_space<vmem>>, vector<1x8x128xbf16>,
    return
  }
  func.func @transform_0(%arg0: i32) -> (i32, i32, i32) {
    %c0_i32 = arith.constant 0 : i32
    %c0_i32_0 = arith.constant 0 : i32
    %c0_i32_1 = arith.constant 0 : i32
    return %arg0, %c0_i32, %c0_i32_0 : i32, i32, i32
  }
  func.func @transform_1(%arg0: i32) -> (i32, i32, i32) {
    %c0_i32 = arith.constant 0 : i32
    %c0_i32_0 = arith.constant 0 : i32
    %c0_i32_1 = arith.constant 0 : i32
    return %arg0, %c0_i32, %c0_i32_0 : i32, i32, i32
  }
}

module attributes {stable_mosaic.version = 11 : i64} {
  func.func @_matmul_bias_kernel(%arg0: i32, %arg1: i32, %arg2: i32, %arg3: memref<16x128xbf16, #tpu.memory_space<vmem>>, %arg4: memref<128x128xbf16, #tpu.memory_space<vmem>>, %arg5: memref<1x128xf32, #tpu.memory_space<vmem>>, %arg6: memref<16x128xf32, #tpu.memory_space<vmem>>, %arg7: memref<16x128xf32, #tpu.memory_space<vmem>>) attributes {dimension_semantics = [#tpu.dimension_semantics<parallel>, #tpu.dimension_semantics<parallel>, #tpu.dimension_semantics<arbitrary>], iteration_bounds = array<i64: 1, 1, 1>, scalar_prefetch = 0 : i64, scratch_operands = 1 : i64, tpu.core_type = #tpu.core_type<tc>, window_params = [{transform_indices = @transform_0, window_bounds = array<i64: 16, 128>}, {transform_indices = @transform_1, window_bounds = array<i64: 128, 128>}, {transform_indices = @transform_2, window_bounds = array<i64: 1, 128>}, {transform_indices = @transform_3, window_bounds = array<i64: 16, 128>}]} {
    %c0_i32 = arith.constant 0 : i32
    %0 = arith.cmpi eq, %arg2, %c0_i32 : i32
    %1 = arith.extui %0 : i1 to i32
    %c0_i32_0 = arith.constant 0 : i32
    %2 = arith.cmpi ne, %1, %c0_i32_0 : i32
    scf.if %2 {
      %cst_10 = arith.constant 0.000000e+00 : f32
      %12 = vector.broadcast %cst_10 : f32 to vector<16x128xf32>
      %c0_11 = arith.constant 0 : index
      %c0_12 = arith.constant 0 : index
      %13 = vector.load %arg7[%c0_11, %c0_12] : memref<16x128xf32, #tpu.memory_space<vmem>>, vector<16x128xf32>
      tpu.vector_store %arg7[%c0_11, %c0_12], %12 {strides = array<i32>} : memref<16x128xf32, #tpu.memory_space<vmem>>, vector<16x128xf32>,
    } else {
    }
    %c0 = arith.constant 0 : index
    %c0_1 = arith.constant 0 : index
    %3 = vector.load %arg7[%c0, %c0_1] : memref<16x128xf32, #tpu.memory_space<vmem>>, vector<16x128xf32>
    %c0_2 = arith.constant 0 : index
    %c0_3 = arith.constant 0 : index
    %4 = vector.load %arg3[%c0_2, %c0_3] : memref<16x128xbf16, #tpu.memory_space<vmem>>, vector<16x128xbf16>
    %c0_4 = arith.constant 0 : index
    %c0_5 = arith.constant 0 : index
    %5 = vector.load %arg4[%c0_4, %c0_5] : memref<128x128xbf16, #tpu.memory_space<vmem>>, vector<128x128xbf16>
    %cst = arith.constant dense<0.000000e+00> : vector<16x128xf32>
    %6 = tpu.matmul %4, %5, %cst {dimension_numbers = #tpu.dot_dimension_numbers<[1], [0], [0], [1], [0, 0, 1, 1], [], []>} : vector<16x128xbf16>, vector<128x128xbf16>, vector<16x128xf32> -> vector<16x128xf32>
    %7 = arith.addf %3, %6 : vector<16x128xf32>
    %c0_6 = arith.constant 0 : index
    %c0_7 = arith.constant 0 : index
    %8 = vector.load %arg7[%c0_6, %c0_7] : memref<16x128xf32, #tpu.memory_space<vmem>>, vector<16x128xf32>
    tpu.vector_store %arg7[%c0_6, %c0_7], %7 {strides = array<i32>} : memref<16x128xf32, #tpu.memory_space<vmem>>, vector<16x128xf32>,
    %c0_i32_8 = arith.constant 0 : i32
    %9 = arith.cmpi eq, %arg2, %c0_i32_8 : i32
    %10 = arith.extui %9 : i1 to i32
    %c0_i32_9 = arith.constant 0 : i32
    %11 = arith.cmpi ne, %10, %c0_i32_9 : i32
    scf.if %11 {
      %c0_10 = arith.constant 0 : index
      %c0_11 = arith.constant 0 : index
      %12 = vector.load %arg7[%c0_10, %c0_11] : memref<16x128xf32, #tpu.memory_space<vmem>>, vector<16x128xf32>
      %c0_12 = arith.constant 0 : index
      %c0_13 = arith.constant 0 : index
      %13 = vector.load %arg5[%c0_12, %c0_13] : memref<1x128xf32, #tpu.memory_space<vmem>>, vector<1x128xf32>
      %14 = vector.broadcast %13 : vector<1x128xf32> to vector<16x128xf32>
      %15 = arith.addf %12, %14 : vector<16x128xf32>
      %c0_14 = arith.constant 0 : index
      %c0_15 = arith.constant 0 : index
      %16 = vector.load %arg6[%c0_14, %c0_15] : memref<16x128xf32, #tpu.memory_space<vmem>>, vector<16x128xf32>
      tpu.vector_store %arg6[%c0_14, %c0_15], %15 {strides = array<i32>} : memref<16x128xf32, #tpu.memory_space<vmem>>, vector<16x128xf32>,
    } else {
    }
    return
  }
  func.func @transform_0(%arg0: i32, %arg1: i32, %arg2: i32) -> (i32, i32) {
    %c0_i32 = arith.constant 0 : i32
    return %arg0, %arg2 : i32, i32
  }
  func.func @transform_1(%arg0: i32, %arg1: i32, %arg2: i32) -> (i32, i32) {
    %c0_i32 = arith.constant 0 : i32
    return %arg2, %arg1 : i32, i32
  }
  func.func @transform_2(%arg0: i32, %arg1: i32, %arg2: i32) -> (i32, i32) {
    %c0_i32 = arith.constant 0 : i32
    %c0_i32_0 = arith.constant 0 : i32
    return %c0_i32, %arg1 : i32, i32
  }
  func.func @transform_3(%arg0: i32, %arg1: i32, %arg2: i32) -> (i32, i32) {
    %c0_i32 = arith.constant 0 : i32
    return %arg0, %arg1 : i32, i32
  }
}

module attributes {stable_mosaic.version = 11 : i64} {
  func.func @_ln_mlp_kernel(%arg0: i32, %arg1: i32, %arg2: memref<16x128xf32, #tpu.memory_space<vmem>>, %arg3: memref<1x128xf32, #tpu.memory_space<vmem>>, %arg4: memref<1x128xf32, #tpu.memory_space<vmem>>, %arg5: memref<128x512xbf16, #tpu.memory_space<vmem>>, %arg6: memref<1x512xf32, #tpu.memory_space<vmem>>, %arg7: memref<512x128xbf16, #tpu.memory_space<vmem>>, %arg8: memref<1x128xf32, #tpu.memory_space<vmem>>, %arg9: memref<16x128xf32, #tpu.memory_space<vmem>>, %arg10: memref<16x128xbf16, #tpu.memory_space<vmem>>, %arg11: memref<16x128xf32, #tpu.memory_space<vmem>>) attributes {dimension_semantics = [#tpu.dimension_semantics<parallel>, #tpu.dimension_semantics<arbitrary>], iteration_bounds = array<i64: 1, 1>, scalar_prefetch = 0 : i64, scratch_operands = 2 : i64, tpu.core_type = #tpu.core_type<tc>, window_params = [{transform_indices = @transform_0, window_bounds = array<i64: 16, 128>}, {pipeline_mode = #tpu.pipeline_mode<synchronous>, transform_indices = @transform_1, window_bounds = array<i64: 1, 128>}, {pipeline_mode = #tpu.pipeline_mode<synchronous>, transform_indices = @transform_2, window_bounds = array<i64: 1, 128>}, {transform_indices = @transform_3, window_bounds = array<i64: 128, 512>}, {transform_indices = @transform_4, window_bounds = array<i64: 1, 512>}, {transform_indices = @transform_5, window_bounds = array<i64: 512, 128>}, {pipeline_mode = #tpu.pipeline_mode<synchronous>, transform_indices = @transform_6, window_bounds = array<i64: 1, 128>}, {transform_indices = @transform_7, window_bounds = array<i64: 16, 128>}]} {
    %c0_i32 = arith.constant 0 : i32
    %0 = arith.cmpi eq, %arg1, %c0_i32 : i32
    %1 = arith.extui %0 : i1 to i32
    %c0_i32_0 = arith.constant 0 : i32
    %2 = arith.cmpi ne, %1, %c0_i32_0 : i32
    scf.if %2 {
      %cst_17 = arith.constant 0.000000e+00 : f32
      %26 = vector.broadcast %cst_17 : f32 to vector<16x128xf32>
      %c0_18 = arith.constant 0 : index
      %c0_19 = arith.constant 0 : index
      %27 = vector.load %arg11[%c0_18, %c0_19] : memref<16x128xf32, #tpu.memory_space<vmem>>, vector<16x128xf32>
      tpu.vector_store %arg11[%c0_18, %c0_19], %26 {strides = array<i32>} : memref<16x128xf32, #tpu.memory_space<vmem>>, vector<16x128xf32>,
      %c0_20 = arith.constant 0 : index
      %c0_21 = arith.constant 0 : index
      %28 = vector.load %arg2[%c0_20, %c0_21] : memref<16x128xf32, #tpu.memory_space<vmem>>, vector<16x128xf32>
      %cst_22 = arith.constant dense<0.000000e+00> : vector<16xf32>
      %29 = vector.multi_reduction <add>, %28, %cst_22 [1] : vector<16x128xf32> to vector<16xf32>
      %30 = vector.shape_cast %29 : vector<16xf32> to vector<16x1xf32>
      %cst_23 = arith.constant 1.280000e+02 : f32
      %31 = vector.broadcast %cst_23 : f32 to vector<16x1xf32>
      %32 = arith.divf %30, %31 : vector<16x1xf32>
      %33 = vector.broadcast %32 : vector<16x1xf32> to vector<16x128xf32>
      %34 = arith.subf %28, %33 : vector<16x128xf32>
      %35 = arith.mulf %34, %34 : vector<16x128xf32>
      %cst_24 = arith.constant dense<0.000000e+00> : vector<16xf32>
      %36 = vector.multi_reduction <add>, %35, %cst_24 [1] : vector<16x128xf32> to vector<16xf32>
      %37 = vector.shape_cast %36 : vector<16xf32> to vector<16x1xf32>
      %cst_25 = arith.constant 1.280000e+02 : f32
      %38 = vector.broadcast %cst_25 : f32 to vector<16x1xf32>
      %39 = arith.divf %37, %38 : vector<16x1xf32>
      %cst_26 = arith.constant 9.99999974E-6 : f32
      %40 = vector.broadcast %cst_26 : f32 to vector<16x1xf32>
      %41 = arith.addf %39, %40 : vector<16x1xf32>
      %42 = math.rsqrt %41 : vector<16x1xf32>
      %43 = vector.broadcast %42 : vector<16x1xf32> to vector<16x128xf32>
      %44 = arith.mulf %34, %43 : vector<16x128xf32>
      %c0_27 = arith.constant 0 : index
      %c0_28 = arith.constant 0 : index
      %45 = vector.load %arg3[%c0_27, %c0_28] : memref<1x128xf32, #tpu.memory_space<vmem>>, vector<1x128xf32>
      %46 = vector.broadcast %45 : vector<1x128xf32> to vector<16x128xf32>
      %47 = arith.mulf %44, %46 : vector<16x128xf32>
      %c0_29 = arith.constant 0 : index
      %c0_30 = arith.constant 0 : index
      %48 = vector.load %arg4[%c0_29, %c0_30] : memref<1x128xf32, #tpu.memory_space<vmem>>, vector<1x128xf32>
      %49 = vector.broadcast %48 : vector<1x128xf32> to vector<16x128xf32>
      %50 = arith.addf %47, %49 : vector<16x128xf32>
      %51 = arith.truncf %50 : vector<16x128xf32> to vector<16x128xbf16>
      %c0_31 = arith.constant 0 : index
      %c0_32 = arith.constant 0 : index
      %52 = vector.load %arg10[%c0_31, %c0_32] : memref<16x128xbf16, #tpu.memory_space<vmem>>, vector<16x128xbf16>
      tpu.vector_store %arg10[%c0_31, %c0_32], %51 {strides = array<i32>} : memref<16x128xbf16, #tpu.memory_space<vmem>>, vector<16x128xbf16>,
    } else {
    }
    %c0 = arith.constant 0 : index
    %c0_1 = arith.constant 0 : index
    %3 = vector.load %arg10[%c0, %c0_1] : memref<16x128xbf16, #tpu.memory_space<vmem>>, vector<16x128xbf16>
    %c0_2 = arith.constant 0 : index
    %c0_3 = arith.constant 0 : index
    %4 = vector.load %arg5[%c0_2, %c0_3] : memref<128x512xbf16, #tpu.memory_space<vmem>>, vector<128x512xbf16>
    %cst = arith.constant dense<0.000000e+00> : vector<16x512xf32>
    %5 = tpu.matmul %3, %4, %cst {dimension_numbers = #tpu.dot_dimension_numbers<[1], [0], [0], [1], [0, 0, 1, 1], [], []>} : vector<16x128xbf16>, vector<128x512xbf16>, vector<16x512xf32> -> vector<16x512xf32>
    %c0_4 = arith.constant 0 : index
    %c0_5 = arith.constant 0 : index
    %6 = vector.load %arg6[%c0_4, %c0_5] : memref<1x512xf32, #tpu.memory_space<vmem>>, vector<1x512xf32>
    %7 = vector.broadcast %6 : vector<1x512xf32> to vector<16x512xf32>
    %8 = arith.addf %5, %7 : vector<16x512xf32>
    %cst_6 = arith.constant 1.702000e+00 : f32
    %9 = vector.broadcast %cst_6 : f32 to vector<16x512xf32>
    %10 = arith.mulf %9, %8 : vector<16x512xf32>
    %11 = arith.negf %10 : vector<16x512xf32>
    %12 = math.exp %11 : vector<16x512xf32>
    %cst_7 = arith.constant 1.000000e+00 : f32
    %13 = vector.broadcast %cst_7 : f32 to vector<16x512xf32>
    %14 = arith.addf %13, %12 : vector<16x512xf32>
    %15 = arith.divf %13, %14 : vector<16x512xf32>
    %16 = arith.mulf %8, %15 : vector<16x512xf32>
    %c0_8 = arith.constant 0 : index
    %c0_9 = arith.constant 0 : index
    %17 = vector.load %arg11[%c0_8, %c0_9] : memref<16x128xf32, #tpu.memory_space<vmem>>, vector<16x128xf32>
    %18 = arith.truncf %16 : vector<16x512xf32> to vector<16x512xbf16>
    %c0_10 = arith.constant 0 : index
    %c0_11 = arith.constant 0 : index
    %19 = vector.load %arg7[%c0_10, %c0_11] : memref<512x128xbf16, #tpu.memory_space<vmem>>, vector<512x128xbf16>
    %cst_12 = arith.constant dense<0.000000e+00> : vector<16x128xf32>
    %20 = tpu.matmul %18, %19, %cst_12 {dimension_numbers = #tpu.dot_dimension_numbers<[1], [0], [0], [1], [0, 0, 1, 1], [], []>} : vector<16x512xbf16>, vector<512x128xbf16>, vector<16x128xf32> -> vector<16x128xf32>
    %21 = arith.addf %17, %20 : vector<16x128xf32>
    %c0_13 = arith.constant 0 : index
    %c0_14 = arith.constant 0 : index
    %22 = vector.load %arg11[%c0_13, %c0_14] : memref<16x128xf32, #tpu.memory_space<vmem>>, vector<16x128xf32>
    tpu.vector_store %arg11[%c0_13, %c0_14], %21 {strides = array<i32>} : memref<16x128xf32, #tpu.memory_space<vmem>>, vector<16x128xf32>,
    %c0_i32_15 = arith.constant 0 : i32
    %23 = arith.cmpi eq, %arg1, %c0_i32_15 : i32
    %24 = arith.extui %23 : i1 to i32
    %c0_i32_16 = arith.constant 0 : i32
    %25 = arith.cmpi ne, %24, %c0_i32_16 : i32
    scf.if %25 {
      %c0_17 = arith.constant 0 : index
      %c0_18 = arith.constant 0 : index
      %26 = vector.load %arg11[%c0_17, %c0_18] : memref<16x128xf32, #tpu.memory_space<vmem>>, vector<16x128xf32>
      %c0_19 = arith.constant 0 : index
      %c0_20 = arith.constant 0 : index
      %27 = vector.load %arg8[%c0_19, %c0_20] : memref<1x128xf32, #tpu.memory_space<vmem>>, vector<1x128xf32>
      %28 = vector.broadcast %27 : vector<1x128xf32> to vector<16x128xf32>
      %29 = arith.addf %26, %28 : vector<16x128xf32>
      %c0_21 = arith.constant 0 : index
      %c0_22 = arith.constant 0 : index
      %30 = vector.load %arg9[%c0_21, %c0_22] : memref<16x128xf32, #tpu.memory_space<vmem>>, vector<16x128xf32>
      tpu.vector_store %arg9[%c0_21, %c0_22], %29 {strides = array<i32>} : memref<16x128xf32, #tpu.memory_space<vmem>>, vector<16x128xf32>,
    } else {
    }
    return
  }
  func.func @transform_0(%arg0: i32, %arg1: i32) -> (i32, i32) {
    %c0_i32 = arith.constant 0 : i32
    %c0_i32_0 = arith.constant 0 : i32
    return %arg0, %c0_i32 : i32, i32
  }
  func.func @transform_1(%arg0: i32, %arg1: i32) -> (i32, i32) {
    %c0_i32 = arith.constant 0 : i32
    %c0_i32_0 = arith.constant 0 : i32
    %c0_i32_1 = arith.constant 0 : i32
    return %c0_i32, %c0_i32_0 : i32, i32
  }
  func.func @transform_2(%arg0: i32, %arg1: i32) -> (i32, i32) {
    %c0_i32 = arith.constant 0 : i32
    %c0_i32_0 = arith.constant 0 : i32
    %c0_i32_1 = arith.constant 0 : i32
    return %c0_i32, %c0_i32_0 : i32, i32
  }
  func.func @transform_3(%arg0: i32, %arg1: i32) -> (i32, i32) {
    %c0_i32 = arith.constant 0 : i32
    %c0_i32_0 = arith.constant 0 : i32
    return %c0_i32, %arg1 : i32, i32
  }
  func.func @transform_4(%arg0: i32, %arg1: i32) -> (i32, i32) {
    %c0_i32 = arith.constant 0 : i32
    %c0_i32_0 = arith.constant 0 : i32
    return %c0_i32, %arg1 : i32, i32
  }
  func.func @transform_5(%arg0: i32, %arg1: i32) -> (i32, i32) {
    %c0_i32 = arith.constant 0 : i32
    %c0_i32_0 = arith.constant 0 : i32
    return %arg1, %c0_i32 : i32, i32
  }
  func.func @transform_6(%arg0: i32, %arg1: i32) -> (i32, i32) {
    %c0_i32 = arith.constant 0 : i32
    %c0_i32_0 = arith.constant 0 : i32
    %c0_i32_1 = arith.constant 0 : i32
    return %c0_i32, %c0_i32_0 : i32, i32
  }
  func.func @transform_7(%arg0: i32, %arg1: i32) -> (i32, i32) {
    %c0_i32 = arith.constant 0 : i32
    %c0_i32_0 = arith.constant 0 : i32
    return %arg0, %c0_i32 : i32, i32
  }
}

module attributes {stable_mosaic.version = 11 : i64} {
  func.func @_ln_matmul_bias_kernel(%arg0: i32, %arg1: i32, %arg2: memref<8x128xf32, #tpu.memory_space<vmem>>, %arg3: memref<1x128xf32, #tpu.memory_space<vmem>>, %arg4: memref<1x128xf32, #tpu.memory_space<vmem>>, %arg5: memref<128x128xbf16, #tpu.memory_space<vmem>>, %arg6: memref<1x128xf32, #tpu.memory_space<vmem>>, %arg7: memref<8x128xf32, #tpu.memory_space<vmem>>, %arg8: memref<8x128xbf16, #tpu.memory_space<vmem>>) attributes {dimension_semantics = [#tpu.dimension_semantics<parallel>, #tpu.dimension_semantics<arbitrary>], iteration_bounds = array<i64: 1, 1>, scalar_prefetch = 0 : i64, scratch_operands = 1 : i64, tpu.core_type = #tpu.core_type<tc>, window_params = [{transform_indices = @transform_0, window_bounds = array<i64: 8, 128>}, {pipeline_mode = #tpu.pipeline_mode<synchronous>, transform_indices = @transform_1, window_bounds = array<i64: 1, 128>}, {pipeline_mode = #tpu.pipeline_mode<synchronous>, transform_indices = @transform_2, window_bounds = array<i64: 1, 128>}, {transform_indices = @transform_3, window_bounds = array<i64: 128, 128>}, {transform_indices = @transform_4, window_bounds = array<i64: 1, 128>}, {transform_indices = @transform_5, window_bounds = array<i64: 8, 128>}]} {
    %c0_i32 = arith.constant 0 : i32
    %0 = arith.cmpi eq, %arg1, %c0_i32 : i32
    %1 = arith.extui %0 : i1 to i32
    %c0_i32_0 = arith.constant 0 : i32
    %2 = arith.cmpi ne, %1, %c0_i32_0 : i32
    scf.if %2 {
      %c0_8 = arith.constant 0 : index
      %c0_9 = arith.constant 0 : index
      %10 = vector.load %arg2[%c0_8, %c0_9] : memref<8x128xf32, #tpu.memory_space<vmem>>, vector<8x128xf32>
      %cst_10 = arith.constant dense<0.000000e+00> : vector<8xf32>
      %11 = vector.multi_reduction <add>, %10, %cst_10 [1] : vector<8x128xf32> to vector<8xf32>
      %12 = vector.shape_cast %11 : vector<8xf32> to vector<8x1xf32>
      %cst_11 = arith.constant 1.280000e+02 : f32
      %13 = vector.broadcast %cst_11 : f32 to vector<8x1xf32>
      %14 = arith.divf %12, %13 : vector<8x1xf32>
      %15 = vector.broadcast %14 : vector<8x1xf32> to vector<8x128xf32>
      %16 = arith.subf %10, %15 : vector<8x128xf32>
      %17 = arith.mulf %16, %16 : vector<8x128xf32>
      %cst_12 = arith.constant dense<0.000000e+00> : vector<8xf32>
      %18 = vector.multi_reduction <add>, %17, %cst_12 [1] : vector<8x128xf32> to vector<8xf32>
      %19 = vector.shape_cast %18 : vector<8xf32> to vector<8x1xf32>
      %cst_13 = arith.constant 1.280000e+02 : f32
      %20 = vector.broadcast %cst_13 : f32 to vector<8x1xf32>
      %21 = arith.divf %19, %20 : vector<8x1xf32>
      %cst_14 = arith.constant 9.99999974E-6 : f32
      %22 = vector.broadcast %cst_14 : f32 to vector<8x1xf32>
      %23 = arith.addf %21, %22 : vector<8x1xf32>
      %24 = math.rsqrt %23 : vector<8x1xf32>
      %25 = vector.broadcast %24 : vector<8x1xf32> to vector<8x128xf32>
      %26 = arith.mulf %16, %25 : vector<8x128xf32>
      %c0_15 = arith.constant 0 : index
      %c0_16 = arith.constant 0 : index
      %27 = vector.load %arg3[%c0_15, %c0_16] : memref<1x128xf32, #tpu.memory_space<vmem>>, vector<1x128xf32>
      %28 = vector.broadcast %27 : vector<1x128xf32> to vector<8x128xf32>
      %29 = arith.mulf %26, %28 : vector<8x128xf32>
      %c0_17 = arith.constant 0 : index
      %c0_18 = arith.constant 0 : index
      %30 = vector.load %arg4[%c0_17, %c0_18] : memref<1x128xf32, #tpu.memory_space<vmem>>, vector<1x128xf32>
      %31 = vector.broadcast %30 : vector<1x128xf32> to vector<8x128xf32>
      %32 = arith.addf %29, %31 : vector<8x128xf32>
      %33 = arith.truncf %32 : vector<8x128xf32> to vector<8x128xbf16>
      %c0_19 = arith.constant 0 : index
      %c0_20 = arith.constant 0 : index
      %34 = vector.load %arg8[%c0_19, %c0_20] : memref<8x128xbf16, #tpu.memory_space<vmem>>, vector<8x128xbf16>
      tpu.vector_store %arg8[%c0_19, %c0_20], %33 {strides = array<i32>} : memref<8x128xbf16, #tpu.memory_space<vmem>>, vector<8x128xbf16>,
    } else {
    }
    %c0 = arith.constant 0 : index
    %c0_1 = arith.constant 0 : index
    %3 = vector.load %arg8[%c0, %c0_1] : memref<8x128xbf16, #tpu.memory_space<vmem>>, vector<8x128xbf16>
    %c0_2 = arith.constant 0 : index
    %c0_3 = arith.constant 0 : index
    %4 = vector.load %arg5[%c0_2, %c0_3] : memref<128x128xbf16, #tpu.memory_space<vmem>>, vector<128x128xbf16>
    %cst = arith.constant dense<0.000000e+00> : vector<8x128xf32>
    %5 = tpu.matmul %3, %4, %cst {dimension_numbers = #tpu.dot_dimension_numbers<[1], [0], [0], [1], [0, 0, 1, 1], [], []>} : vector<8x128xbf16>, vector<128x128xbf16>, vector<8x128xf32> -> vector<8x128xf32>
    %c0_4 = arith.constant 0 : index
    %c0_5 = arith.constant 0 : index
    %6 = vector.load %arg6[%c0_4, %c0_5] : memref<1x128xf32, #tpu.memory_space<vmem>>, vector<1x128xf32>
    %7 = vector.broadcast %6 : vector<1x128xf32> to vector<8x128xf32>
    %8 = arith.addf %5, %7 : vector<8x128xf32>
    %c0_6 = arith.constant 0 : index
    %c0_7 = arith.constant 0 : index
    %9 = vector.load %arg7[%c0_6, %c0_7] : memref<8x128xf32, #tpu.memory_space<vmem>>, vector<8x128xf32>
    tpu.vector_store %arg7[%c0_6, %c0_7], %8 {strides = array<i32>} : memref<8x128xf32, #tpu.memory_space<vmem>>, vector<8x128xf32>,
    return
  }
  func.func @transform_0(%arg0: i32, %arg1: i32) -> (i32, i32) {
    %c0_i32 = arith.constant 0 : i32
    %c0_i32_0 = arith.constant 0 : i32
    return %arg0, %c0_i32 : i32, i32
  }
  func.func @transform_1(%arg0: i32, %arg1: i32) -> (i32, i32) {
    %c0_i32 = arith.constant 0 : i32
    %c0_i32_0 = arith.constant 0 : i32
    %c0_i32_1 = arith.constant 0 : i32
    return %c0_i32, %c0_i32_0 : i32, i32
  }
  func.func @transform_2(%arg0: i32, %arg1: i32) -> (i32, i32) {
    %c0_i32 = arith.constant 0 : i32
    %c0_i32_0 = arith.constant 0 : i32
    %c0_i32_1 = arith.constant 0 : i32
    return %c0_i32, %c0_i32_0 : i32, i32
  }
  func.func @transform_3(%arg0: i32, %arg1: i32) -> (i32, i32) {
    %c0_i32 = arith.constant 0 : i32
    %c0_i32_0 = arith.constant 0 : i32
    return %c0_i32, %arg1 : i32, i32
  }
  func.func @transform_4(%arg0: i32, %arg1: i32) -> (i32, i32) {
    %c0_i32 = arith.constant 0 : i32
    %c0_i32_0 = arith.constant 0 : i32
    return %c0_i32, %arg1 : i32, i32
  }
  func.func @transform_5(%arg0: i32, %arg1: i32) -> (i32, i32) {
    %c0_i32 = arith.constant 0 : i32
    return %arg0, %arg1 : i32, i32
  }
}

module attributes {stable_mosaic.version = 11 : i64} {
  func.func @_logits_kernel(%arg0: i32, %arg1: memref<1xf32, #tpu.memory_space<smem>>, %arg2: memref<2x128xf32, #tpu.memory_space<vmem>>, %arg3: memref<2x128xf32, #tpu.memory_space<vmem>>, %arg4: memref<2x2xf32, #tpu.memory_space<vmem>>) attributes {dimension_semantics = [#tpu.dimension_semantics<arbitrary>], iteration_bounds = array<i64: 1>, scalar_prefetch = 0 : i64, scratch_operands = 0 : i64, tpu.core_type = #tpu.core_type<tc>, window_params = [{transform_indices = @transform_0, window_bounds = array<i64: 1>}, {pipeline_mode = #tpu.pipeline_mode<synchronous>, transform_indices = @transform_1, window_bounds = array<i64: 2, 128>}, {pipeline_mode = #tpu.pipeline_mode<synchronous>, transform_indices = @transform_2, window_bounds = array<i64: 2, 128>}, {pipeline_mode = #tpu.pipeline_mode<synchronous>, transform_indices = @transform_3, window_bounds = array<i64: 2, 2>}]} {
    %c0 = arith.constant 0 : index
    %c0_0 = arith.constant 0 : index
    %0 = vector.load %arg2[%c0, %c0_0] : memref<2x128xf32, #tpu.memory_space<vmem>>, vector<2x128xf32>
    %c0_1 = arith.constant 0 : index
    %c0_2 = arith.constant 0 : index
    %1 = vector.load %arg3[%c0_1, %c0_2] : memref<2x128xf32, #tpu.memory_space<vmem>>, vector<2x128xf32>
    %2 = arith.mulf %0, %0 : vector<2x128xf32>
    %cst = arith.constant dense<0.000000e+00> : vector<2xf32>
    %3 = vector.multi_reduction <add>, %2, %cst [1] : vector<2x128xf32> to vector<2xf32>
    %4 = vector.shape_cast %3 : vector<2xf32> to vector<2x1xf32>
    %5 = math.rsqrt %4 : vector<2x1xf32>
    %6 = vector.broadcast %5 : vector<2x1xf32> to vector<2x128xf32>
    %7 = arith.mulf %0, %6 : vector<2x128xf32>
    %8 = arith.mulf %1, %1 : vector<2x128xf32>
    %cst_3 = arith.constant dense<0.000000e+00> : vector<2xf32>
    %9 = vector.multi_reduction <add>, %8, %cst_3 [1] : vector<2x128xf32> to vector<2xf32>
    %10 = vector.shape_cast %9 : vector<2xf32> to vector<2x1xf32>
    %11 = math.rsqrt %10 : vector<2x1xf32>
    %12 = vector.broadcast %11 : vector<2x1xf32> to vector<2x128xf32>
    %13 = arith.mulf %1, %12 : vector<2x128xf32>
    %14 = arith.truncf %7 : vector<2x128xf32> to vector<2x128xbf16>
    %15 = arith.truncf %13 : vector<2x128xf32> to vector<2x128xbf16>
    "tpu.trace_start"() <{level = 10 : i32, message = "id,jd->ij"}> : () -> ()
    %cst_4 = arith.constant dense<0.000000e+00> : vector<2x2xf32>
    %16 = tpu.matmul %14, %15, %cst_4 {dimension_numbers = #tpu.dot_dimension_numbers<[1], [1], [0], [0], [0, 0, 1, 0], [], []>} : vector<2x128xbf16>, vector<2x128xbf16>, vector<2x2xf32> -> vector<2x2xf32>
    "tpu.trace_stop"() : () -> ()
    %c0_5 = arith.constant 0 : index
    %17 = memref.load %arg1[%c0_5] : memref<1xf32, #tpu.memory_space<smem>>
    %18 = math.exp %17 : f32
    %19 = vector.broadcast %18 : f32 to vector<2x2xf32>
    %20 = arith.mulf %16, %19 : vector<2x2xf32>
    %c0_6 = arith.constant 0 : index
    %c0_7 = arith.constant 0 : index
    %21 = vector.load %arg4[%c0_6, %c0_7] : memref<2x2xf32, #tpu.memory_space<vmem>>, vector<2x2xf32>
    tpu.vector_store %arg4[%c0_6, %c0_7], %20 {strides = array<i32>} : memref<2x2xf32, #tpu.memory_space<vmem>>, vector<2x2xf32>,
    return
  }
  func.func @transform_0(%arg0: i32) -> i32 {
    %c0_i32 = arith.constant 0 : i32
    %c0_i32_0 = arith.constant 0 : i32
    return %c0_i32 : i32
  }
  func.func @transform_1(%arg0: i32) -> (i32, i32) {
    %c0_i32 = arith.constant 0 : i32
    %c0_i32_0 = arith.constant 0 : i32
    %c0_i32_1 = arith.constant 0 : i32
    return %c0_i32, %c0_i32_0 : i32, i32
  }
  func.func @transform_2(%arg0: i32) -> (i32, i32) {
    %c0_i32 = arith.constant 0 : i32
    %c0_i32_0 = arith.constant 0 : i32
    %c0_i32_1 = arith.constant 0 : i32
    return %c0_i32, %c0_i32_0 : i32, i32
  }
  func.func @transform_3(%arg0: i32) -> (i32, i32) {
    %c0_i32 = arith.constant 0 : i32
    %c0_i32_0 = arith.constant 0 : i32
    %c0_i32_1 = arith.constant 0 : i32
    return %c0_i32, %c0_i32_0 : i32, i32
  }
}

</mosaic_0001>

<llo_original>
// kernel: _lambda_.22
$region0: #{_lambda_.22}
  #allocation0 [shape = 'u32[]', space=smem, size = 0x4, offset = 0x4, fixed_abs, tag = 'smem constant byte address 0x4 - core index']
  #allocation1 [shape = 'u32[72,128]{1,0:T(1,128)}', space=vmem, size = 0x9000, scoped, tag = 'internal scratch']
  %s0 = inlined_call_operand.vmem [shape: f32[16,128], index: 0, kind: input, shape index: {}]
  %s1 = inlined_call_operand.vmem [shape: f32[1,128], index: 1, kind: input, shape index: {}]
  %s2 = inlined_call_operand.vmem [shape: f32[1,128], index: 2, kind: input, shape index: {}]
  %s3 = inlined_call_operand.vmem [shape: f32[16,128], index: 3, kind: output, shape index: {}]
  %s4 = sld [smem:[#allocation0]]
  $region22: #{_lambda_.22} parent=0
    _
  %s6 = ssub.s32 1, %s4
  %s7 = scalar_select 0, %s6, %s4
  // Predicated region
  $region2: #{_lambda_.22} parent=0 // pred_check
    _
  $region3: #{_lambda_.22} parent=0 // pred_check_branch
    %9 = sbr.rel (0) target = $region5
  $region4: #{_lambda_.22} parent=0 // pred_region
    _
  $region5: #{_lambda_.22} parent=0 // pred_fallthru
    _
  // Predicated region
  $region6: #{_lambda_.22} parent=0 // pred_check
    _
  $region7: #{_lambda_.22} parent=0 // pred_check_branch
    %11 = sbr.rel (0) target = $region9
  $region8: #{_lambda_.22} parent=0 // pred_region
    _
  $region9: #{_lambda_.22} parent=0 // pred_fallthru
    _
  // Predicated region
  $region10: #{_lambda_.22} parent=0 // pred_check
    _
  $region11: #{_lambda_.22} parent=0 // pred_check_branch
    %13 = sbr.rel (0) target = $region13
  $region12: #{_lambda_.22} parent=0 // pred_region
    _
  $region13: #{_lambda_.22} parent=0 // pred_fallthru
    _
  %v14 = vld [vmem:[%s0] sm:$0xff]
  %v15 = vld [vmem:[%s0 + $0x8] sm:$0xff]
  %16 = vadd.xlane.f32.xlu0 %v14
  %v17 = vpop.xlane.xlu0 %16
  %18 = vadd.xlane.f32.xlu0 %v15
  %v19 = vpop.xlane.xlu0 %18
  %v20 = vrcp.pop 128.0
  %v21 = vmul.f32 128.0, %v20
  %v22 = vsub.f32 1.0, %v21
  %v23 = vmul.f32 %v20, %v22
  %v24 = vadd.f32 %v20, %v23
  %vm25 = vweird.f32 %v20
  %v26 = vsel %vm25, %v20, %v24
  %v27 = vmul.f32 %v17, %v26
  %v28 = vmul.f32 %v19, %v26
  %v29 = vsub.f32 %v14, %v27
  %v30 = vsub.f32 %v15, %v28
  %v31 = vmul.f32 %v29, %v29
  %v32 = vmul.f32 %v30, %v30
  %33 = vadd.xlane.f32.xlu0 %v31
  %v34 = vpop.xlane.xlu0 %33
  %35 = vadd.xlane.f32.xlu0 %v32
  %v36 = vpop.xlane.xlu0 %35
  %v37 = vmul.f32 %v34, %v26
  %v38 = vmul.f32 %v36, %v26
  %v39 = vadd.f32 %v37, 1e-05
  %v40 = vadd.f32 %v38, 1e-05
  %v41 = vrsqrt.pop %v39
  %v42 = vmul.f32 %v41, %v39
  %v43 = vmul.f32 %v42, %v41
  %v44 = vmul.f32 0.5, %v43
  %v45 = vsub.f32 1.5, %v44
  %v46 = vmul.f32 %v41, %v45
  %vm47 = vweird.f32 %v39
  %vm48 = vweird.f32 %v41
  %vm49 = vmor %vm47, %vm48
  %v50 = vsel %vm49, %v41, %v46
  %v51 = vrsqrt.pop %v40
  %v52 = vmul.f32 %v51, %v40
  %v53 = vmul.f32 %v52, %v51
  %v54 = vmul.f32 0.5, %v53
  %v55 = vsub.f32 1.5, %v54
  %v56 = vmul.f32 %v51, %v55
  %vm57 = vweird.f32 %v40
  %vm58 = vweird.f32 %v51
  %vm59 = vmor %vm57, %vm58
  %v60 = vsel %vm59, %v51, %v56
  %v61 = vmul.f32 %v29, %v50
  %v62 = vmul.f32 %v30, %v60
  %v63 = vld [vmem:[%s1] sm:$0x1]
  %v65 = vperm.slane %v63, 0
  %v67 = vmul.f32 %v61, %v65
  %v68 = vmul.f32 %v62, %v65
  %v69 = vld [vmem:[%s2] sm:$0x1]
  %v71 = vperm.slane %v69, 0
  %v73 = vadd.f32 %v67, %v71
  %v74 = vadd.f32 %v68, %v71
  %75 = vst [vmem:[%s3] sm:$0xff] %v73
  %76 = vst [vmem:[%s3 + $0x8] sm:$0xff] %v74
  // Predicated region
  $region14: #{_lambda_.22} parent=0 // pred_check
    _
  $region15: #{_lambda_.22} parent=0 // pred_check_branch
    %78 = sbr.rel (0) target = $region17
  $region16: #{_lambda_.22} parent=0 // pred_region
    _
  $region17: #{_lambda_.22} parent=0 // pred_fallthru
    _
  // Predicated region
  $region18: #{_lambda_.22} parent=0 // pred_check
    _
  $region19: #{_lambda_.22} parent=0 // pred_check_branch
    %80 = sbr.rel (0) target = $region21
  $region20: #{_lambda_.22} parent=0 // pred_region
    _
  $region21: #{_lambda_.22} parent=0 // pred_fallthru
    _

// kernel: _lambda_.21
$region0: #{_lambda_.21}
  #allocation0 [shape = 'u32[]', space=smem, size = 0x4, offset = 0x4, fixed_abs, tag = 'smem constant byte address 0x4 - core index']
  #allocation1 [shape = 'u32[72,128]{1,0:T(1,128)}', space=vmem, size = 0x9000, scoped, tag = 'internal scratch']
  #allocation2 [shape = 'f32[8,128]{1,0:T(8,128)}', space=vmem, size = 0x1000, scoped, tag = 'scratch operand']
  %s0 = inlined_call_operand.vmem [shape: bf16[8,1024], index: 0, kind: input, shape index: {}]
  %s1 = inlined_call_operand.vmem [shape: bf16[1024,128], index: 1, kind: input, shape index: {}]
  %s2 = inlined_call_operand.vmem [shape: f32[1,128], index: 2, kind: input, shape index: {}]
  %s3 = inlined_call_operand.vmem [shape: f32[8,128], index: 3, kind: output, shape index: {}]
  %s4 = sld [smem:[#allocation0]]
  $region53: #{_lambda_.21} parent=0
    _
  %s6 = ssub.s32 1, %s4
  %s7 = scalar_select 0, %s6, %s4
  loop: start=0, step=1, limit=4
  $region2: #{_lambda_.21} parent=0 // loop_pre_header
    _
  $region3: #{_lambda_.21} parent=0 // loop_header
    %s9 = sphi 0, %s13
    %p10 = scmp.ge.s32.totalorder %s9, 4
    %s16 = sphi 0, %s35
    %s17 = sphi 0, %s31
    %s18 = sphi 0, %s27
    %s19 = sphi 0, %s16
    %s20 = sphi 0, %s17
    %s21 = sphi 0, %s18
    %s22 = sphi 0, %s19
    %s23 = sphi 0, %s20
    %s24 = sphi 0, %s21
    %s40 = sphi 0, %s42
    %s43 = sphi 0, %s40
    %s44 = sphi 0, %s43
    %s60 = sphi 0, %s44
    %s68 = sphi 0, %s70
    %s71 = sphi 0, %s68
    %s72 = sphi 0, %s71
    %s88 = sphi 0, %s72
    %s94 = sphi 0, %s96
    %s97 = sphi 0, %s94
    %s98 = sphi 0, %s97
    %s114 = sphi 0, %s98
    %s122 = sphi 0, %s124
    %s125 = sphi 0, %s122
    %s126 = sphi 0, %s125
    %s142 = sphi 0, %s126
  $region4: #{_lambda_.21} parent=0 // loop_header_branch
    %12 = sbr.rel (%p10) target = $region8
  $region5: #{_lambda_.21} parent=0 // loop_body
    %s14 = ssub.s32 %s9, 1
    %s15 = ssub.s32 %s9, 2
    %s25 = sadd.s32 1, %s18
    %p26 = scmp.ge.s32.totalorder %s25, 2
    %s27 = scalar_select %p26, 0, %s25
    %s28 = sadd.s32 1, %s17
    %s29 = scalar_select %p26, %s28, %s17
    %p30 = scmp.ge.s32.totalorder %s29, 1
    %s31 = scalar_select %p30, 0, %s29
    %s32 = sadd.s32 1, %s16
    %s33 = scalar_select %p30, %s32, %s16
    %p34 = scmp.ge.s32.totalorder %s33, 1
    %s35 = scalar_select %p34, 0, %s33
    %s36 = ssub.s32 %s16, %s35
    %s37 = ssub.s32 %s18, %s27
    %s38 = sor.u32 %s36, %s37
    %p39 = scmp.eq.s32.totalorder %s38, 0
    %s41 = sadd.s32 %s40, 1
    %s42 = scalar_select %p39, %s40, %s41
    %p45 = pneg %p39
    %p46 = scmp.eq.s32.totalorder %s9, 1
    %p47 = por %p45, %p46
    %p48 = scmp.ne.s32.totalorder %s40, %s43
    %p49 = scmp.eq.s32.totalorder %s9, 0
    %p50 = por %p48, %p49
    %p51 = scmp.ne.s32.totalorder %s40, %s43
    %p52 = scmp.eq.s32.totalorder %s14, 1
    %p53 = por %p51, %p52
    %p54 = scmp.ne.s32.totalorder %s43, %s44
    %p55 = scmp.eq.s32.totalorder %s14, 0
    %p56 = por %p54, %p55
    %p57 = scmp.ne.s32.totalorder %s43, %s44
    %p58 = scmp.eq.s32.totalorder %s15, 1
    %p59 = por %p57, %p58
    %p61 = scmp.ne.s32.totalorder %s44, %s60
    %p62 = scmp.eq.s32.totalorder %s15, 0
    %p63 = por %p61, %p62
    %s64 = ssub.s32 %s18, %s27
    %s65 = ssub.s32 %s17, %s31
    %s66 = sor.u32 %s64, %s65
    %p67 = scmp.eq.s32.totalorder %s66, 0
    %s69 = sadd.s32 %s68, 1
    %s70 = scalar_select %p67, %s68, %s69
    %p73 = pneg %p67
    %p74 = scmp.eq.s32.totalorder %s9, 1
    %p75 = por %p73, %p74
    %p76 = scmp.ne.s32.totalorder %s68, %s71
    %p77 = scmp.eq.s32.totalorder %s9, 0
    %p78 = por %p76, %p77
    %p79 = scmp.ne.s32.totalorder %s68, %s71
    %p80 = scmp.eq.s32.totalorder %s14, 1
    %p81 = por %p79, %p80
    %p82 = scmp.ne.s32.totalorder %s71, %s72
    %p83 = scmp.eq.s32.totalorder %s14, 0
    %p84 = por %p82, %p83
    %p85 = scmp.ne.s32.totalorder %s71, %s72
    %p86 = scmp.eq.s32.totalorder %s15, 1
    %p87 = por %p85, %p86
    %p89 = scmp.ne.s32.totalorder %s72, %s88
    %p90 = scmp.eq.s32.totalorder %s15, 0
    %p91 = por %p89, %p90
    %s92 = ssub.s32 %s17, %s31
    %p93 = scmp.eq.s32.totalorder %s92, 0
    %s95 = sadd.s32 %s94, 1
    %s96 = scalar_select %p93, %s94, %s95
    %p99 = pneg %p93
    %p100 = scmp.eq.s32.totalorder %s9, 1
    %p101 = por %p99, %p100
    %p102 = scmp.ne.s32.totalorder %s94, %s97
    %p103 = scmp.eq.s32.totalorder %s9, 0
    %p104 = por %p102, %p103
    %p105 = scmp.ne.s32.totalorder %s94, %s97
    %p106 = scmp.eq.s32.totalorder %s14, 1
    %p107 = por %p105, %p106
    %p108 = scmp.ne.s32.totalorder %s97, %s98
    %p109 = scmp.eq.s32.totalorder %s14, 0
    %p110 = por %p108, %p109
    %p111 = scmp.ne.s32.totalorder %s97, %s98
    %p112 = scmp.eq.s32.totalorder %s15, 1
    %p113 = por %p111, %p112
    %p115 = scmp.ne.s32.totalorder %s98, %s114
    %p116 = scmp.eq.s32.totalorder %s15, 0
    %p117 = por %p115, %p116
    %s118 = ssub.s32 %s16, %s35
    %s119 = ssub.s32 %s17, %s31
    %s120 = sor.u32 %s118, %s119
    %p121 = scmp.eq.s32.totalorder %s120, 0
    %s123 = sadd.s32 %s122, 1
    %s124 = scalar_select %p121, %s122, %s123
    %p127 = pneg %p121
    %p128 = scmp.eq.s32.totalorder %s9, 1
    %p129 = por %p127, %p128
    %p130 = scmp.ne.s32.totalorder %s122, %s125
    %p131 = scmp.eq.s32.totalorder %s9, 0
    %p132 = por %p130, %p131
    %p133 = scmp.ne.s32.totalorder %s122, %s125
    %p134 = scmp.eq.s32.totalorder %s14, 1
    %p135 = por %p133, %p134
    %p136 = scmp.ne.s32.totalorder %s125, %s126
    %p137 = scmp.eq.s32.totalorder %s14, 0
    %p138 = por %p136, %p137
    %p139 = scmp.ne.s32.totalorder %s125, %s126
    %p140 = scmp.eq.s32.totalorder %s15, 1
    %p141 = por %p139, %p140
    %p143 = scmp.ne.s32.totalorder %s126, %s142
    %p144 = scmp.eq.s32.totalorder %s15, 0
    %p145 = por %p143, %p144
    %p146 = scmp.le.s32.totalorder 1, %s9
    %p147 = scmp.lt.s32.totalorder %s9, 3
    %p148 = pnand %p146, %p147
    %p149 = pneg %p148
    // Predicated region
    $region9: #{_lambda_.21} parent=5 // pred_check
      _
    $region10: #{_lambda_.21} parent=5 // pred_check_branch
      %151 = sbr.rel (%p148) target = $region12
    $region11: #{_lambda_.21} parent=5 // pred_region
      %s152 = ssub.s32 %s9, 1
      // Predicated region
      $region13: #{_lambda_.21} parent=11 // pred_check
        %p153 = pneg %p110
      $region14: #{_lambda_.21} parent=11 // pred_check_branch
        %155 = sbr.rel (%p153) target = $region16
      $region15: #{_lambda_.21} parent=11 // pred_region
        %p156 = scmp.lt.s32.totalorder %s20, 0
        %s157 = scalar_select %p156, %s20, 0
        %s158 = scalar_lea.vmem %s2, %s157
      $region16: #{_lambda_.21} parent=11 // pred_fallthru
        _
    $region12: #{_lambda_.21} parent=5 // pred_fallthru
      _
    %p159 = scmp.lt.s32.totalorder %s9, 2
    // Predicated region
    $region17: #{_lambda_.21} parent=5 // pred_check
      %p160 = pneg %p159
    $region18: #{_lambda_.21} parent=5 // pred_check_branch
      %162 = sbr.rel (%p160) target = $region20
    $region19: #{_lambda_.21} parent=5 // pred_region
      // Predicated region
      $region21: #{_lambda_.21} parent=19 // pred_check
        %p163 = pneg %p50
      $region22: #{_lambda_.21} parent=19 // pred_check_branch
        %165 = sbr.rel (%p163) target = $region24
      $region23: #{_lambda_.21} parent=19 // pred_region
        %s166 = smul.u32 4, %s18
        %p167 = scmp.lt.s32.totalorder %s16, 0
        %s168 = scalar_select %p167, %s16, 0
        %p169 = scmp.lt.s32.totalorder %s166, 7
        %s170 = scalar_select %p169, %s166, 7
        %s171 = smul.addr %s168, 8
        %s172 = sadd.s32 %s170, %s171
        %s173 = smul.addr %s172, 4
        %s174 = scalar_lea.vmem %s0, %s173
        %s175 = smul.u32 4, %s18
      $region24: #{_lambda_.21} parent=19 // pred_fallthru
        _
      // Predicated region
      $region25: #{_lambda_.21} parent=19 // pred_check
        %p176 = pneg %p78
      $region26: #{_lambda_.21} parent=19 // pred_check_branch
        %178 = sbr.rel (%p176) target = $region28
      $region27: #{_lambda_.21} parent=19 // pred_region
        %s179 = smul.u32 64, %s18
        %p180 = scmp.lt.s32.totalorder %s179, 127
        %s181 = scalar_select %p180, %s179, 127
        %p182 = scmp.lt.s32.totalorder %s17, 0
        %s183 = scalar_select %p182, %s17, 0
        %s184 = sadd.s32 %s183, %s181
        %s185 = smul.addr %s184, 4
        %s186 = scalar_lea.vmem %s1, %s185
        %s187 = smul.u32 64, %s18
      $region28: #{_lambda_.21} parent=19 // pred_fallthru
        _
    $region20: #{_lambda_.21} parent=5 // pred_fallthru
      _
    %p188 = scmp.le.s32.totalorder 1, %s9
    %p189 = scmp.lt.s32.totalorder %s9, 3
    %p190 = pnand %p188, %p189
    %p191 = pneg %p190
    // Predicated region
    $region29: #{_lambda_.21} parent=5 // pred_check
      _
    $region30: #{_lambda_.21} parent=5 // pred_check_branch
      %193 = sbr.rel (%p190) target = $region32
    $region31: #{_lambda_.21} parent=5 // pred_region
      %s194 = ssub.s32 %s9, 1
      %s195 = smul.u32 4, %s21
      %p196 = scmp.lt.s32.totalorder %s19, 0
      %s197 = scalar_select %p196, %s19, 0
      %p198 = scmp.lt.s32.totalorder %s195, 7
      %s199 = scalar_select %p198, %s195, 7
      %s200 = smul.addr %s197, 8
      %s201 = sadd.s32 %s199, %s200
      %s202 = smul.addr %s201, 4
      %s203 = scalar_lea.vmem %s0, %s202
      %p204 = pneg %p56
      %p205 = pneg %p53
      %s206 = smul.u32 64, %s21
      %p207 = scmp.lt.s32.totalorder %s206, 127
      %s208 = scalar_select %p207, %s206, 127
      %p209 = scmp.lt.s32.totalorder %s20, 0
      %s210 = scalar_select %p209, %s20, 0
      %s211 = sadd.s32 %s210, %s208
      %s212 = smul.addr %s211, 4
      %s213 = scalar_lea.vmem %s1, %s212
      %p214 = pneg %p84
      %p215 = pneg %p81
      %p216 = scmp.lt.s32.totalorder %s20, 0
      %s217 = scalar_select %p216, %s20, 0
      %s218 = scalar_lea.vmem %s2, %s217
      %p219 = pneg %p110
      %p220 = pneg %p107
      %p221 = pneg %p138
      %p222 = pneg %p135
      %p223 = scmp.lt.s32.totalorder %s19, 0
      %s224 = scalar_select %p223, %s19, 0
      %p225 = scmp.lt.s32.totalorder %s20, 0
      %s226 = scalar_select %p225, %s20, 0
      %s227 = sadd.s32 %s226, %s224
      %s228 = smul.addr %s227, 8
      %s229 = scalar_lea.vmem %s3, %s228
      %s230 = smul.u32 4, %s21
      %p231 = scmp.lt.s32.totalorder %s19, 0
      %s232 = scalar_select %p231, %s19, 0
      %p233 = scmp.lt.s32.totalorder %s230, 7
      %s234 = scalar_select %p233, %s230, 7
      %s235 = smul.addr %s232, 8
      %s236 = sadd.s32 %s234, %s235
      %s237 = smul.addr %s236, 4
      %s238 = scalar_lea.vmem %s0, %s237
      %s239 = smul.u32 4, %s21
      %s240 = smul.u32 64, %s21
      %p241 = scmp.lt.s32.totalorder %s240, 127
      %s242 = scalar_select %p241, %s240, 127
      %p243 = scmp.lt.s32.totalorder %s20, 0
      %s244 = scalar_select %p243, %s20, 0
      %s245 = sadd.s32 %s244, %s242
      %s246 = smul.addr %s245, 4
      %s247 = scalar_lea.vmem %s1, %s246
      %s248 = smul.u32 64, %s21
      %p249 = scmp.lt.s32.totalorder %s20, 0
      %s250 = scalar_select %p249, %s20, 0
      %s251 = scalar_lea.vmem %s2, %s250
      %p252 = scmp.lt.s32.totalorder %s19, 0
      %s253 = scalar_select %p252, %s19, 0
      %p254 = scmp.lt.s32.totalorder %s20, 0
      %s255 = scalar_select %p254, %s20, 0
      %s256 = sadd.s32 %s255, %s253
      %s257 = smul.addr %s256, 8
      %s258 = scalar_lea.vmem %s3, %s257
      %p259 = scmp.eq.s32.totalorder %s21, 0
      // Predicated region
      $region33: #{_lambda_.21} parent=31 // pred_check
        %p260 = pneg %p259
      $region34: #{_lambda_.21} parent=31 // pred_check_branch
        %262 = sbr.rel (%p260) target = $region36
      $region35: #{_lambda_.21} parent=31 // pred_region
        %263 = vst [vmem:[#allocation2] sm:$0xff] 0.0
      $region36: #{_lambda_.21} parent=31 // pred_fallthru
        _
      %v264 = vld [vmem:[#allocation2] sm:$0xff]
      %v265 = vld [vmem:[%s238] sm:$0xff]
      %v266 = vld [vmem:[%s238 + $0x8] sm:$0xff]
      %v267 = vld [vmem:[%s247] sm:$0xf]
      %v268 = vld [vmem:[%s247 + $0x4] sm:$0xf]
      %v269 = vld [vmem:[%s247 + $0x8] sm:$0xf]
      %v270 = vld [vmem:[%s247 + $0xc] sm:$0xf]
      %v271 = vld [vmem:[%s247 + $0x10] sm:$0xf]
      %v272 = vld [vmem:[%s247 + $0x14] sm:$0xf]
      %v273 = vld [vmem:[%s247 + $0x18] sm:$0xf]
      %v274 = vld [vmem:[%s247 + $0x1c] sm:$0xf]
      %v275 = vld [vmem:[%s247 + $0x20] sm:$0xf]
      %v276 = vld [vmem:[%s247 + $0x24] sm:$0xf]
      %v277 = vld [vmem:[%s247 + $0x28] sm:$0xf]
      %v278 = vld [vmem:[%s247 + $0x2c] sm:$0xf]
      %v279 = vld [vmem:[%s247 + $0x30] sm:$0xf]
      %v280 = vld [vmem:[%s247 + $0x34] sm:$0xf]
      %v281 = vld [vmem:[%s247 + $0x38] sm:$0xf]
      %v282 = vld [vmem:[%s247 + $0x3c] sm:$0xf]
      %v283 = vld [vmem:[%s247 + $0x40] sm:$0xf]
      %v284 = vld [vmem:[%s247 + $0x44] sm:$0xf]
      %v285 = vld [vmem:[%s247 + $0x48] sm:$0xf]
      %v286 = vld [vmem:[%s247 + $0x4c] sm:$0xf]
      %v287 = vld [vmem:[%s247 + $0x50] sm:$0xf]
      %v288 = vld [vmem:[%s247 + $0x54] sm:$0xf]
      %v289 = vld [vmem:[%s247 + $0x58] sm:$0xf]
      %v290 = vld [vmem:[%s247 + $0x5c] sm:$0xf]
      %v291 = vld [vmem:[%s247 + $0x60] sm:$0xf]
      %v292 = vld [vmem:[%s247 + $0x64] sm:$0xf]
      %v293 = vld [vmem:[%s247 + $0x68] sm:$0xf]
      %v294 = vld [vmem:[%s247 + $0x6c] sm:$0xf]
      %v295 = vld [vmem:[%s247 + $0x70] sm:$0xf]
      %v296 = vld [vmem:[%s247 + $0x74] sm:$0xf]
      %v297 = vld [vmem:[%s247 + $0x78] sm:$0xf]
      %v298 = vld [vmem:[%s247 + $0x7c] sm:$0xf]
      %v299 = vld [vmem:[%s247 + $0x80] sm:$0xf]
      %v300 = vld [vmem:[%s247 + $0x84] sm:$0xf]
      %v301 = vld [vmem:[%s247 + $0x88] sm:$0xf]
      %v302 = vld [vmem:[%s247 + $0x8c] sm:$0xf]
      %v303 = vld [vmem:[%s247 + $0x90] sm:$0xf]
      %v304 = vld [vmem:[%s247 + $0x94] sm:$0xf]
      %v305 = vld [vmem:[%s247 + $0x98] sm:$0xf]
      %v306 = vld [vmem:[%s247 + $0x9c] sm:$0xf]
      %v307 = vld [vmem:[%s247 + $0xa0] sm:$0xf]
      %v308 = vld [vmem:[%s247 + $0xa4] sm:$0xf]
      %v309 = vld [vmem:[%s247 + $0xa8] sm:$0xf]
      %v310 = vld [vmem:[%s247 + $0xac] sm:$0xf]
      %v311 = vld [vmem:[%s247 + $0xb0] sm:$0xf]
      %v312 = vld [vmem:[%s247 + $0xb4] sm:$0xf]
      %v313 = vld [vmem:[%s247 + $0xb8] sm:$0xf]
      %v314 = vld [vmem:[%s247 + $0xbc] sm:$0xf]
      %v315 = vld [vmem:[%s247 + $0xc0] sm:$0xf]
      %v316 = vld [vmem:[%s247 + $0xc4] sm:$0xf]
      %v317 = vld [vmem:[%s247 + $0xc8] sm:$0xf]
      %v318 = vld [vmem:[%s247 + $0xcc] sm:$0xf]
      %v319 = vld [vmem:[%s247 + $0xd0] sm:$0xf]
      %v320 = vld [vmem:[%s247 + $0xd4] sm:$0xf]
      %v321 = vld [vmem:[%s247 + $0xd8] sm:$0xf]
      %v322 = vld [vmem:[%s247 + $0xdc] sm:$0xf]
      %v323 = vld [vmem:[%s247 + $0xe0] sm:$0xf]
      %v324 = vld [vmem:[%s247 + $0xe4] sm:$0xf]
      %v325 = vld [vmem:[%s247 + $0xe8] sm:$0xf]
      %v326 = vld [vmem:[%s247 + $0xec] sm:$0xf]
      %v327 = vld [vmem:[%s247 + $0xf0] sm:$0xf]
      %v328 = vld [vmem:[%s247 + $0xf4] sm:$0xf]
      %v329 = vld [vmem:[%s247 + $0xf8] sm:$0xf]
      %v330 = vld [vmem:[%s247 + $0xfc] sm:$0xf]
      %v333 = vunpack.c.l.b16 %v265
      %v334 = vunpack.c.h.b16 %v265
      %v335 = vunpack.c.l.b16 %v266
      %v336 = vunpack.c.h.b16 %v266
      %v337 = vpack.c.b16 %v333, %v333
      %v338 = vpack.c.b16 %v334, %v334
      %v339 = vpack.c.b16 %v335, %v335
      %v340 = vpack.c.b16 %v336, %v336
      %v409 = vunpack.c.l.b16 %v267
      %v410 = vunpack.c.l.b16 %v268
      %v411 = vunpack.c.l.b16 %v269
      %v412 = vunpack.c.l.b16 %v270
      %v413 = vunpack.c.l.b16 %v271
      %v414 = vunpack.c.l.b16 %v272
      %v415 = vunpack.c.l.b16 %v273
      %v416 = vunpack.c.l.b16 %v274
      %v417 = vunpack.c.l.b16 %v275
      %v418 = vunpack.c.l.b16 %v276
      %v419 = vunpack.c.l.b16 %v277
      %v420 = vunpack.c.l.b16 %v278
      %v421 = vunpack.c.l.b16 %v279
      %v422 = vunpack.c.l.b16 %v280
      %v423 = vunpack.c.l.b16 %v281
      %v424 = vunpack.c.l.b16 %v282
      %v425 = vunpack.c.l.b16 %v283
      %v426 = vunpack.c.l.b16 %v284
      %v427 = vunpack.c.l.b16 %v285
      %v428 = vunpack.c.l.b16 %v286
      %v429 = vunpack.c.l.b16 %v287
      %v430 = vunpack.c.l.b16 %v288
      %v431 = vunpack.c.l.b16 %v289
      %v432 = vunpack.c.l.b16 %v290
      %v433 = vunpack.c.l.b16 %v291
      %v434 = vunpack.c.l.b16 %v292
      %v435 = vunpack.c.l.b16 %v293
      %v436 = vunpack.c.l.b16 %v294
      %v437 = vunpack.c.l.b16 %v295
      %v438 = vunpack.c.l.b16 %v296
      %v439 = vunpack.c.l.b16 %v297
      %v440 = vunpack.c.l.b16 %v298
      %v441 = vunpack.c.l.b16 %v299
      %v442 = vunpack.c.l.b16 %v300
      %v443 = vunpack.c.l.b16 %v301
      %v444 = vunpack.c.l.b16 %v302
      %v445 = vunpack.c.l.b16 %v303
      %v446 = vunpack.c.l.b16 %v304
      %v447 = vunpack.c.l.b16 %v305
      %v448 = vunpack.c.l.b16 %v306
      %v449 = vunpack.c.l.b16 %v307
      %v450 = vunpack.c.l.b16 %v308
      %v451 = vunpack.c.l.b16 %v309
      %v452 = vunpack.c.l.b16 %v310
      %v453 = vunpack.c.l.b16 %v311
      %v454 = vunpack.c.l.b16 %v312
      %v455 = vunpack.c.l.b16 %v313
      %v456 = vunpack.c.l.b16 %v314
      %v457 = vunpack.c.l.b16 %v315
      %v458 = vunpack.c.l.b16 %v316
      %v459 = vunpack.c.l.b16 %v317
      %v460 = vunpack.c.l.b16 %v318
      %v461 = vunpack.c.l.b16 %v319
      %v462 = vunpack.c.l.b16 %v320
      %v463 = vunpack.c.l.b16 %v321
      %v464 = vunpack.c.l.b16 %v322
      %v465 = vunpack.c.l.b16 %v323
      %v466 = vunpack.c.l.b16 %v324
      %v467 = vunpack.c.l.b16 %v325
      %v468 = vunpack.c.l.b16 %v326
      %v469 = vunpack.c.l.b16 %v327
      %v470 = vunpack.c.l.b16 %v328
      %v471 = vunpack.c.l.b16 %v329
      %v472 = vunpack.c.l.b16 %v330
      %v473 = vpack.c.b16 %v410, %v409
      %v474 = vpack.c.b16 %v412, %v411
      %v475 = vpack.c.b16 %v414, %v413
      %v476 = vpack.c.b16 %v416, %v415
      %v477 = vpack.c.b16 %v418, %v417
      %v478 = vpack.c.b16 %v420, %v419
      %v479 = vpack.c.b16 %v422, %v421
      %v480 = vpack.c.b16 %v424, %v423
      %v481 = vpack.c.b16 %v426, %v425
      %v482 = vpack.c.b16 %v428, %v427
      %v483 = vpack.c.b16 %v430, %v429
      %v484 = vpack.c.b16 %v432, %v431
      %v485 = vpack.c.b16 %v434, %v433
      %v486 = vpack.c.b16 %v436, %v435
      %v487 = vpack.c.b16 %v438, %v437
      %v488 = vpack.c.b16 %v440, %v439
      %v489 = vpack.c.b16 %v442, %v441
      %v490 = vpack.c.b16 %v444, %v443
      %v491 = vpack.c.b16 %v446, %v445
      %v492 = vpack.c.b16 %v448, %v447
      %v493 = vpack.c.b16 %v450, %v449
      %v494 = vpack.c.b16 %v452, %v451
      %v495 = vpack.c.b16 %v454, %v453
      %v496 = vpack.c.b16 %v456, %v455
      %v497 = vpack.c.b16 %v458, %v457
      %v498 = vpack.c.b16 %v460, %v459
      %v499 = vpack.c.b16 %v462, %v461
      %v500 = vpack.c.b16 %v464, %v463
      %v501 = vpack.c.b16 %v466, %v465
      %v502 = vpack.c.b16 %v468, %v467
      %v503 = vpack.c.b16 %v470, %v469
      %v504 = vpack.c.b16 %v472, %v471
      %537 = vmatpush.bf16.msra.mxu0 %v480
      %538 = vmatpush.bf16.msra.mxu0 %v479
      %539 = vmatpush.bf16.msra.mxu0 %v478
      %540 = vmatpush.bf16.msra.mxu0 %v477
      %541 = vmatpush.bf16.msra.mxu0 %v476
      %542 = vmatpush.bf16.msra.mxu0 %v475
      %543 = vmatpush.bf16.msra.mxu0 %v474
      %544 = vmatpush.bf16.msra.mxu0 %v473
      %545 = vmatmul.bf16.gmra.mxu0 %v337
      %v546 = vpop.f32.mrf.mxu0
      %v547 = vadd.f32 0.0, %v546
      %v548 = vpop.f32.mrf.mxu0
      %549 = vdwg.mxu0
      %550 = vmatpush.bf16.msra.mxu0 %v488
      %551 = vmatpush.bf16.msra.mxu0 %v487
      %552 = vmatpush.bf16.msra.mxu0 %v486
      %553 = vmatpush.bf16.msra.mxu0 %v485
      %554 = vmatpush.bf16.msra.mxu0 %v484
      %555 = vmatpush.bf16.msra.mxu0 %v483
      %556 = vmatpush.bf16.msra.mxu0 %v482
      %557 = vmatpush.bf16.msra.mxu0 %v481
      %558 = vmatmul.bf16.gmra.mxu0 %v338
      %v559 = vpop.f32.mrf.mxu0
      %v560 = vadd.f32 %v547, %v559
      %v561 = vpop.f32.mrf.mxu0
      %562 = vdwg.mxu0
      %563 = vmatpush.bf16.msra.mxu0 %v496
      %564 = vmatpush.bf16.msra.mxu0 %v495
      %565 = vmatpush.bf16.msra.mxu0 %v494
      %566 = vmatpush.bf16.msra.mxu0 %v493
      %567 = vmatpush.bf16.msra.mxu0 %v492
      %568 = vmatpush.bf16.msra.mxu0 %v491
      %569 = vmatpush.bf16.msra.mxu0 %v490
      %570 = vmatpush.bf16.msra.mxu0 %v489
      %571 = vmatmul.bf16.gmra.mxu0 %v339
      %v572 = vpop.f32.mrf.mxu0
      %v573 = vadd.f32 %v560, %v572
      %v574 = vpop.f32.mrf.mxu0
      %575 = vdwg.mxu0
      %576 = vmatpush.bf16.msra.mxu0 %v504
      %577 = vmatpush.bf16.msra.mxu0 %v503
      %578 = vmatpush.bf16.msra.mxu0 %v502
      %579 = vmatpush.bf16.msra.mxu0 %v501
      %580 = vmatpush.bf16.msra.mxu0 %v500
      %581 = vmatpush.bf16.msra.mxu0 %v499
      %582 = vmatpush.bf16.msra.mxu0 %v498
      %583 = vmatpush.bf16.msra.mxu0 %v497
      %584 = vmatmul.bf16.gmra.mxu0 %v340
      %v585 = vpop.f32.mrf.mxu0
      %v586 = vadd.f32 %v573, %v585
      %v587 = vpop.f32.mrf.mxu0
      %588 = vdwg.mxu0
      %v589 = vadd.f32 %v264, %v586
      %590 = vst [vmem:[#allocation2] sm:$0xff] %v589
      %p591 = scmp.eq.s32.totalorder %s21, 1
      // Predicated region
      $region37: #{_lambda_.21} parent=31 // pred_check
        %p592 = pneg %p591
      $region38: #{_lambda_.21} parent=31 // pred_check_branch
        %594 = sbr.rel (%p592) target = $region40
      $region39: #{_lambda_.21} parent=31 // pred_region
        %v595 = vld [vmem:[#allocation2] sm:$0xff]
        %v596 = vld [vmem:[%s251] sm:$0x1]
        %v598 = vperm.slane %v596, 0
        %v600 = vadd.f32 %v595, %v598
        %601 = vst [vmem:[%s258] sm:$0xff] %v600
      $region40: #{_lambda_.21} parent=31 // pred_fallthru
        _
      %p602 = scmp.lt.s32.totalorder %s19, 0
      %s603 = scalar_select %p602, %s19, 0
      %p604 = scmp.lt.s32.totalorder %s20, 0
      %s605 = scalar_select %p604, %s20, 0
      %s606 = sadd.s32 %s605, %s603
      %s607 = smul.addr %s606, 8
      %s608 = scalar_lea.vmem %s3, %s607
      // Predicated region
      $region41: #{_lambda_.21} parent=31 // pred_check
        %p609 = pneg %p135
      $region42: #{_lambda_.21} parent=31 // pred_check_branch
        %611 = sbr.rel (%p609) target = $region44
      $region43: #{_lambda_.21} parent=31 // pred_region
        _
      $region44: #{_lambda_.21} parent=31 // pred_fallthru
        _
      // Predicated region
      $region45: #{_lambda_.21} parent=31 // pred_check
        %p612 = pneg %p135
      $region46: #{_lambda_.21} parent=31 // pred_check_branch
        %614 = sbr.rel (%p612) target = $region48
      $region47: #{_lambda_.21} parent=31 // pred_region
        %p615 = scmp.lt.s32.totalorder %s19, 0
        %s616 = scalar_select %p615, %s19, 0
        %p617 = scmp.lt.s32.totalorder %s20, 0
        %s618 = scalar_select %p617, %s20, 0
        %s619 = sadd.s32 %s618, %s616
        %s620 = smul.addr %s619, 8
        %s621 = scalar_lea.vmem %s3, %s620
      $region48: #{_lambda_.21} parent=31 // pred_fallthru
        _
    $region32: #{_lambda_.21} parent=5 // pred_fallthru
      _
    %p622 = scmp.le.s32.totalorder 2, %s9
    // Predicated region
    $region49: #{_lambda_.21} parent=5 // pred_check
      %p623 = pneg %p622
    $region50: #{_lambda_.21} parent=5 // pred_check_branch
      %625 = sbr.rel (%p623) target = $region52
    $region51: #{_lambda_.21} parent=5 // pred_region
      %s626 = ssub.s32 %s9, 2
    $region52: #{_lambda_.21} parent=5 // pred_fallthru
      _
  $region6: #{_lambda_.21} parent=0 // loop_footer
    %s13 = sadd.s32 1, %s9
  $region7: #{_lambda_.21} parent=0 // loop_footer_branch
    %8 = sbr.rel target = $region3
  $region8: #{_lambda_.21} parent=0 // loop_exit
    _

// kernel: _lambda_.23
$region0: #{_lambda_.23}
  #allocation0 [shape = 'u32[]', space=smem, size = 0x4, offset = 0x4, fixed_abs, tag = 'smem constant byte address 0x4 - core index']
  #allocation1 [shape = 'u32[72,128]{1,0:T(1,128)}', space=vmem, size = 0x9000, scoped, tag = 'internal scratch']
  #allocation2 [shape = 'bf16[16,128]{1,0:T(8,128)(2,1)}', space=vmem, size = 0x1000, scoped, tag = 'scratch operand']
  %s0 = inlined_call_operand.vmem [shape: f32[16,128], index: 0, kind: input, shape index: {}]
  %s1 = inlined_call_operand.vmem [shape: f32[1,128], index: 1, kind: input, shape index: {}]
  %s2 = inlined_call_operand.vmem [shape: f32[1,128], index: 2, kind: input, shape index: {}]
  %s3 = inlined_call_operand.hbm [shape: bf16[128,384], index: 3, kind: input, shape index: {}]
  %s4 = inlined_call_operand.vmem [shape: f32[1,384], index: 4, kind: input, shape index: {}]
  %s5 = inlined_call_operand.vmem [shape: bf16[16,384], index: 5, kind: output, shape index: {}]
  %s6 = sld [smem:[#allocation0]]
  $region38: #{_lambda_.23} parent=0
    _
  %s8 = ssub.s32 1, %s6
  %s9 = scalar_select 0, %s8, %s6
  $region1: #{_lambda_.23} parent=0
    #allocation3 [shape = 'u8[98304]{0}', space=vmem, size = 0x18000, scoped, tag = 'input window, operand 3, single buffered']
    #allocation4 [shape = 's32[1]{0}', space=sflag, size = 0x4, scoped, tag = 'scoped memory for _lambda_.23']
    %10 = vsyncpa [#allocation4], 0
    // Predicated region
    $region2: #{_lambda_.23} parent=1 // pred_check
      _
    $region3: #{_lambda_.23} parent=1 // pred_check_branch
      %12 = sbr.rel (0) target = $region5
    $region4: #{_lambda_.23} parent=1 // pred_region
      _
    $region5: #{_lambda_.23} parent=1 // pred_fallthru
      _
    // Predicated region
    $region6: #{_lambda_.23} parent=1 // pred_check
      _
    $region7: #{_lambda_.23} parent=1 // pred_check_branch
      %14 = sbr.rel (0) target = $region9
    $region8: #{_lambda_.23} parent=1 // pred_region
      _
    $region9: #{_lambda_.23} parent=1 // pred_fallthru
      _
    // Predicated region
    $region10: #{_lambda_.23} parent=1 // pred_check
      _
    $region11: #{_lambda_.23} parent=1 // pred_check_branch
      %16 = sbr.rel (0) target = $region13
    $region12: #{_lambda_.23} parent=1 // pred_region
      _
    $region13: #{_lambda_.23} parent=1 // pred_fallthru
      _
    // Predicated region
    $region14: #{_lambda_.23} parent=1 // pred_check
      _
    $region15: #{_lambda_.23} parent=1 // pred_check_branch
      %18 = sbr.rel (0) target = $region17
    $region16: #{_lambda_.23} parent=1 // pred_region
      %20 = vsyncadd [#allocation4], 0
      %s21 = sshll.u32 %s3, 4
      %s22 = int_to_ptr.hbm [resolvable:$true] %s21
      %s23 = sshll.u32 [#allocation3], 4
      %s24 = int_to_ptr.vmem [resolvable:$true] %s23
      %29 = dma.hbm_to_vmem [thread:$0]  %s22, 3072, %s24, [#allocation4], 192, 192, 12
    $region17: #{_lambda_.23} parent=1 // pred_fallthru
      _
    // Predicated region
    $region18: #{_lambda_.23} parent=1 // pred_check
      _
    $region19: #{_lambda_.23} parent=1 // pred_check_branch
      %31 = sbr.rel (0) target = $region21
    $region20: #{_lambda_.23} parent=1 // pred_region
      _
    $region21: #{_lambda_.23} parent=1 // pred_fallthru
      _
    // Predicated region
    $region22: #{_lambda_.23} parent=1 // pred_check
      _
    $region23: #{_lambda_.23} parent=1 // pred_check_branch
      %33 = sbr.rel (0) target = $region25
    $region24: #{_lambda_.23} parent=1 // pred_region
      %35 = dma.done [#allocation4], 3072
    $region25: #{_lambda_.23} parent=1 // pred_fallthru
      _
    %p36 = scmp.eq.s32.totalorder 0, 0
    // Predicated region
    $region26: #{_lambda_.23} parent=1 // pred_check
      %p37 = pneg %p36
    $region27: #{_lambda_.23} parent=1 // pred_check_branch
      %39 = sbr.rel (%p37) target = $region29
    $region28: #{_lambda_.23} parent=1 // pred_region
      %v40 = vld [vmem:[%s0] sm:$0xff]
      %v41 = vld [vmem:[%s0 + $0x8] sm:$0xff]
      %42 = vadd.xlane.f32.xlu0 %v40
      %v43 = vpop.xlane.xlu0 %42
      %44 = vadd.xlane.f32.xlu0 %v41
      %v45 = vpop.xlane.xlu0 %44
      %v46 = vrcp.pop 128.0
      %v47 = vmul.f32 128.0, %v46
      %v48 = vsub.f32 1.0, %v47
      %v49 = vmul.f32 %v46, %v48
      %v50 = vadd.f32 %v46, %v49
      %vm51 = vweird.f32 %v46
      %v52 = vsel %vm51, %v46, %v50
      %v53 = vmul.f32 %v43, %v52
      %v54 = vmul.f32 %v45, %v52
      %v55 = vsub.f32 %v40, %v53
      %v56 = vsub.f32 %v41, %v54
      %v57 = vmul.f32 %v55, %v55
      %v58 = vmul.f32 %v56, %v56
      %59 = vadd.xlane.f32.xlu0 %v57
      %v60 = vpop.xlane.xlu0 %59
      %61 = vadd.xlane.f32.xlu0 %v58
      %v62 = vpop.xlane.xlu0 %61
      %v63 = vmul.f32 %v60, %v52
      %v64 = vmul.f32 %v62, %v52
      %v65 = vadd.f32 %v63, 1e-05
      %v66 = vadd.f32 %v64, 1e-05
      %v67 = vrsqrt.pop %v65
      %v68 = vmul.f32 %v67, %v65
      %v69 = vmul.f32 %v68, %v67
      %v70 = vmul.f32 0.5, %v69
      %v71 = vsub.f32 1.5, %v70
      %v72 = vmul.f32 %v67, %v71
      %vm73 = vweird.f32 %v65
      %vm74 = vweird.f32 %v67
      %vm75 = vmor %vm73, %vm74
      %v76 = vsel %vm75, %v67, %v72
      %v77 = vrsqrt.pop %v66
      %v78 = vmul.f32 %v77, %v66
      %v79 = vmul.f32 %v78, %v77
      %v80 = vmul.f32 0.5, %v79
      %v81 = vsub.f32 1.5, %v80
      %v82 = vmul.f32 %v77, %v81
      %vm83 = vweird.f32 %v66
      %vm84 = vweird.f32 %v77
      %vm85 = vmor %vm83, %vm84
      %v86 = vsel %vm85, %v77, %v82
      %v87 = vmul.f32 %v55, %v76
      %v88 = vmul.f32 %v56, %v86
      %v89 = vld [vmem:[%s1] sm:$0x1]
      %v91 = vperm.slane %v89, 0
      %v93 = vmul.f32 %v87, %v91
      %v94 = vmul.f32 %v88, %v91
      %v95 = vld [vmem:[%s2] sm:$0x1]
      %v97 = vperm.slane %v95, 0
      %v99 = vadd.f32 %v93, %v97
      %v100 = vadd.f32 %v94, %v97
      %v101 = vpack.c.bf16 %v99, %v99
      %v102 = vpack.c.bf16 %v100, %v100
      %103 = vst [vmem:[#allocation2] sm:$0xf] %v101
      %104 = vst [vmem:[#allocation2 + $0x4] sm:$0xf] %v102
    $region29: #{_lambda_.23} parent=1 // pred_fallthru
      _
    %v105 = vld [vmem:[#allocation2] sm:$0xf]
    %v106 = vld [vmem:[#allocation2 + $0x4] sm:$0xf]
    %v107 = vld [vmem:[#allocation3] sm:$0xff]
    %v108 = vld [vmem:[#allocation3 + $0x8] sm:$0xf]
    %v109 = vld [vmem:[#allocation3 + $0xc] sm:$0xff]
    %v110 = vld [vmem:[#allocation3 + $0x14] sm:$0xf]
    %v111 = vld [vmem:[#allocation3 + $0x18] sm:$0xff]
    %v112 = vld [vmem:[#allocation3 + $0x20] sm:$0xf]
    %v113 = vld [vmem:[#allocation3 + $0x24] sm:$0xff]
    %v114 = vld [vmem:[#allocation3 + $0x2c] sm:$0xf]
    %v115 = vld [vmem:[#allocation3 + $0x30] sm:$0xff]
    %v116 = vld [vmem:[#allocation3 + $0x38] sm:$0xf]
    %v117 = vld [vmem:[#allocation3 + $0x3c] sm:$0xff]
    %v118 = vld [vmem:[#allocation3 + $0x44] sm:$0xf]
    %v119 = vld [vmem:[#allocation3 + $0x48] sm:$0xff]
    %v120 = vld [vmem:[#allocation3 + $0x50] sm:$0xf]
    %v121 = vld [vmem:[#allocation3 + $0x54] sm:$0xff]
    %v122 = vld [vmem:[#allocation3 + $0x5c] sm:$0xf]
    %v123 = vld [vmem:[#allocation3 + $0x60] sm:$0xff]
    %v124 = vld [vmem:[#allocation3 + $0x68] sm:$0xf]
    %v125 = vld [vmem:[#allocation3 + $0x6c] sm:$0xff]
    %v126 = vld [vmem:[#allocation3 + $0x74] sm:$0xf]
    %v127 = vld [vmem:[#allocation3 + $0x78] sm:$0xff]
    %v128 = vld [vmem:[#allocation3 + $0x80] sm:$0xf]
    %v129 = vld [vmem:[#allocation3 + $0x84] sm:$0xff]
    %v130 = vld [vmem:[#allocation3 + $0x8c] sm:$0xf]
    %v131 = vld [vmem:[#allocation3 + $0x90] sm:$0xff]
    %v132 = vld [vmem:[#allocation3 + $0x98] sm:$0xf]
    %v133 = vld [vmem:[#allocation3 + $0x9c] sm:$0xff]
    %v134 = vld [vmem:[#allocation3 + $0xa4] sm:$0xf]
    %v135 = vld [vmem:[#allocation3 + $0xa8] sm:$0xff]
    %v136 = vld [vmem:[#allocation3 + $0xb0] sm:$0xf]
    %v137 = vld [vmem:[#allocation3 + $0xb4] sm:$0xff]
    %v138 = vld [vmem:[#allocation3 + $0xbc] sm:$0xf]
    %v139 = vld [vmem:[%s4] sm:$0x7]
    %v141 = vperm.slane %v139, 0
    %v142 = vperm.slane %v139, 1
    %v143 = vperm.slane %v139, 2
    %v149 = vunpack.c.l.b16 %v105
    %v150 = vunpack.c.l.b16 %v106
    %v151 = vpack.c.b16 %v150, %v149
    %v185 = vunpack.c.l.b16 %v107
    %v186 = vunpack.c.h.b16 %v107
    %v187 = vunpack.c.l.b16 %v108
    %v188 = vunpack.c.l.b16 %v109
    %v189 = vunpack.c.h.b16 %v109
    %v190 = vunpack.c.l.b16 %v110
    %v191 = vunpack.c.l.b16 %v111
    %v192 = vunpack.c.h.b16 %v111
    %v193 = vunpack.c.l.b16 %v112
    %v194 = vunpack.c.l.b16 %v113
    %v195 = vunpack.c.h.b16 %v113
    %v196 = vunpack.c.l.b16 %v114
    %v197 = vunpack.c.l.b16 %v115
    %v198 = vunpack.c.h.b16 %v115
    %v199 = vunpack.c.l.b16 %v116
    %v200 = vunpack.c.l.b16 %v117
    %v201 = vunpack.c.h.b16 %v117
    %v202 = vunpack.c.l.b16 %v118
    %v203 = vunpack.c.l.b16 %v119
    %v204 = vunpack.c.h.b16 %v119
    %v205 = vunpack.c.l.b16 %v120
    %v206 = vunpack.c.l.b16 %v121
    %v207 = vunpack.c.h.b16 %v121
    %v208 = vunpack.c.l.b16 %v122
    %v209 = vunpack.c.l.b16 %v123
    %v210 = vunpack.c.h.b16 %v123
    %v211 = vunpack.c.l.b16 %v124
    %v212 = vunpack.c.l.b16 %v125
    %v213 = vunpack.c.h.b16 %v125
    %v214 = vunpack.c.l.b16 %v126
    %v215 = vunpack.c.l.b16 %v127
    %v216 = vunpack.c.h.b16 %v127
    %v217 = vunpack.c.l.b16 %v128
    %v218 = vunpack.c.l.b16 %v129
    %v219 = vunpack.c.h.b16 %v129
    %v220 = vunpack.c.l.b16 %v130
    %v221 = vunpack.c.l.b16 %v131
    %v222 = vunpack.c.h.b16 %v131
    %v223 = vunpack.c.l.b16 %v132
    %v224 = vunpack.c.l.b16 %v133
    %v225 = vunpack.c.h.b16 %v133
    %v226 = vunpack.c.l.b16 %v134
    %v227 = vunpack.c.l.b16 %v135
    %v228 = vunpack.c.h.b16 %v135
    %v229 = vunpack.c.l.b16 %v136
    %v230 = vunpack.c.l.b16 %v137
    %v231 = vunpack.c.h.b16 %v137
    %v232 = vunpack.c.l.b16 %v138
    %v233 = vpack.c.b16 %v188, %v185
    %v234 = vpack.c.b16 %v189, %v186
    %v235 = vpack.c.b16 %v190, %v187
    %v236 = vpack.c.b16 %v194, %v191
    %v237 = vpack.c.b16 %v195, %v192
    %v238 = vpack.c.b16 %v196, %v193
    %v239 = vpack.c.b16 %v200, %v197
    %v240 = vpack.c.b16 %v201, %v198
    %v241 = vpack.c.b16 %v202, %v199
    %v242 = vpack.c.b16 %v206, %v203
    %v243 = vpack.c.b16 %v207, %v204
    %v244 = vpack.c.b16 %v208, %v205
    %v245 = vpack.c.b16 %v212, %v209
    %v246 = vpack.c.b16 %v213, %v210
    %v247 = vpack.c.b16 %v214, %v211
    %v248 = vpack.c.b16 %v218, %v215
    %v249 = vpack.c.b16 %v219, %v216
    %v250 = vpack.c.b16 %v220, %v217
    %v251 = vpack.c.b16 %v224, %v221
    %v252 = vpack.c.b16 %v225, %v222
    %v253 = vpack.c.b16 %v226, %v223
    %v254 = vpack.c.b16 %v230, %v227
    %v255 = vpack.c.b16 %v231, %v228
    %v256 = vpack.c.b16 %v232, %v229
    %281 = vmatpush.bf16.msra.mxu0 %v254
    %282 = vmatpush.bf16.msra.mxu0 %v251
    %283 = vmatpush.bf16.msra.mxu0 %v248
    %284 = vmatpush.bf16.msra.mxu0 %v245
    %285 = vmatpush.bf16.msra.mxu0 %v242
    %286 = vmatpush.bf16.msra.mxu0 %v239
    %287 = vmatpush.bf16.msra.mxu0 %v236
    %288 = vmatpush.bf16.msra.mxu0 %v233
    %289 = vmatmul.bf16.gmra.mxu0 %v151
    %v290 = vpop.f32.mrf.mxu0
    %v291 = vadd.f32 %v141, %v290
    %v292 = vpop.f32.mrf.mxu0
    %v293 = vadd.f32 %v141, %v292
    %294 = vdwg.mxu0
    %295 = vmatpush.bf16.msra.mxu0 %v255
    %296 = vmatpush.bf16.msra.mxu0 %v252
    %297 = vmatpush.bf16.msra.mxu0 %v249
    %298 = vmatpush.bf16.msra.mxu0 %v246
    %299 = vmatpush.bf16.msra.mxu0 %v243
    %300 = vmatpush.bf16.msra.mxu0 %v240
    %301 = vmatpush.bf16.msra.mxu0 %v237
    %302 = vmatpush.bf16.msra.mxu0 %v234
    %303 = vmatmul.bf16.gmra.mxu0 %v151
    %v304 = vpop.f32.mrf.mxu0
    %v305 = vadd.f32 %v142, %v304
    %v306 = vpop.f32.mrf.mxu0
    %v307 = vadd.f32 %v142, %v306
    %308 = vdwg.mxu0
    %309 = vmatpush.bf16.msra.mxu0 %v256
    %310 = vmatpush.bf16.msra.mxu0 %v253
    %311 = vmatpush.bf16.msra.mxu0 %v250
    %312 = vmatpush.bf16.msra.mxu0 %v247
    %313 = vmatpush.bf16.msra.mxu0 %v244
    %314 = vmatpush.bf16.msra.mxu0 %v241
    %315 = vmatpush.bf16.msra.mxu0 %v238
    %316 = vmatpush.bf16.msra.mxu0 %v235
    %317 = vmatmul.bf16.gmra.mxu0 %v151
    %v318 = vpop.f32.mrf.mxu0
    %v319 = vadd.f32 %v143, %v318
    %v320 = vpop.f32.mrf.mxu0
    %v321 = vadd.f32 %v143, %v320
    %322 = vdwg.mxu0
    %v323 = vpack.c.bf16 %v305, %v291
    %v324 = vpack.c.bf16 %v319, %v319
    %v325 = vpack.c.bf16 %v307, %v293
    %v326 = vpack.c.bf16 %v321, %v321
    %327 = vst [vmem:[%s5] sm:$0xff] %v323
    %328 = vst [vmem:[%s5 + $0x8] sm:$0xf] %v324
    %329 = vst [vmem:[%s5 + $0xc] sm:$0xff] %v325
    %330 = vst [vmem:[%s5 + $0x14] sm:$0xf] %v326
    // Predicated region
    $region30: #{_lambda_.23} parent=1 // pred_check
      _
    $region31: #{_lambda_.23} parent=1 // pred_check_branch
      %332 = sbr.rel (0) target = $region33
    $region32: #{_lambda_.23} parent=1 // pred_region
      _
    $region33: #{_lambda_.23} parent=1 // pred_fallthru
      _
    // Predicated region
    $region34: #{_lambda_.23} parent=1 // pred_check
      _
    $region35: #{_lambda_.23} parent=1 // pred_check_branch
      %334 = sbr.rel (0) target = $region37
    $region36: #{_lambda_.23} parent=1 // pred_region
      _
    $region37: #{_lambda_.23} parent=1 // pred_fallthru
      _
    %335 = vsyncpa [#allocation4], 1

// kernel: _lambda_.24
$region0: #{_lambda_.24}
  #allocation0 [shape = 'u32[]', space=smem, size = 0x4, offset = 0x4, fixed_abs, tag = 'smem constant byte address 0x4 - core index']
  #allocation1 [shape = 'u32[72,128]{1,0:T(1,128)}', space=vmem, size = 0x9000, scoped, tag = 'internal scratch']
  %s0 = inlined_call_operand.vmem [shape: bf16[2,5,384], index: 0, kind: input, shape index: {}]
  %s1 = inlined_call_operand.vmem [shape: bf16[2,5,128], index: 1, kind: output, shape index: {}]
  %s2 = sld [smem:[#allocation0]]
  $region37: #{_lambda_.24} parent=0
    _
  %s4 = ssub.s32 1, %s2
  %s5 = scalar_select 0, %s4, %s2
  loop: start=0, step=1, limit=4
  $region2: #{_lambda_.24} parent=0 // loop_pre_header
    _
  $region3: #{_lambda_.24} parent=0 // loop_header
    %s7 = sphi 0, %s11
    %p8 = scmp.ge.s32.totalorder %s7, 4
    %s17 = sphi 0, %s19
    %s20 = sphi 0, %s17
    %s21 = sphi 0, %s20
    %s37 = sphi 0, %s21
    %s43 = sphi 0, %s45
    %s46 = sphi 0, %s43
    %s47 = sphi 0, %s46
    %s63 = sphi 0, %s47
  $region4: #{_lambda_.24} parent=0 // loop_header_branch
    %10 = sbr.rel (%p8) target = $region8
  $region5: #{_lambda_.24} parent=0 // loop_body
    %s12 = ssub.s32 %s7, 1
    %s13 = ssub.s32 %s7, 2
    %s14 = sadd.s32 %s7, 1
    %s15 = ssub.s32 %s7, %s14
    %p16 = scmp.eq.s32.totalorder %s15, 0
    %s18 = sadd.s32 %s17, 1
    %s19 = scalar_select %p16, %s17, %s18
    %p22 = pneg %p16
    %p23 = scmp.eq.s32.totalorder %s7, 1
    %p24 = por %p22, %p23
    %p25 = scmp.ne.s32.totalorder %s17, %s20
    %p26 = scmp.eq.s32.totalorder %s7, 0
    %p27 = por %p25, %p26
    %p28 = scmp.ne.s32.totalorder %s17, %s20
    %p29 = scmp.eq.s32.totalorder %s12, 1
    %p30 = por %p28, %p29
    %p31 = scmp.ne.s32.totalorder %s20, %s21
    %p32 = scmp.eq.s32.totalorder %s12, 0
    %p33 = por %p31, %p32
    %p34 = scmp.ne.s32.totalorder %s20, %s21
    %p35 = scmp.eq.s32.totalorder %s13, 1
    %p36 = por %p34, %p35
    %p38 = scmp.ne.s32.totalorder %s21, %s37
    %p39 = scmp.eq.s32.totalorder %s13, 0
    %p40 = por %p38, %p39
    %s41 = ssub.s32 %s7, %s14
    %p42 = scmp.eq.s32.totalorder %s41, 0
    %s44 = sadd.s32 %s43, 1
    %s45 = scalar_select %p42, %s43, %s44
    %p48 = pneg %p42
    %p49 = scmp.eq.s32.totalorder %s7, 1
    %p50 = por %p48, %p49
    %p51 = scmp.ne.s32.totalorder %s43, %s46
    %p52 = scmp.eq.s32.totalorder %s7, 0
    %p53 = por %p51, %p52
    %p54 = scmp.ne.s32.totalorder %s43, %s46
    %p55 = scmp.eq.s32.totalorder %s12, 1
    %p56 = por %p54, %p55
    %p57 = scmp.ne.s32.totalorder %s46, %s47
    %p58 = scmp.eq.s32.totalorder %s12, 0
    %p59 = por %p57, %p58
    %p60 = scmp.ne.s32.totalorder %s46, %s47
    %p61 = scmp.eq.s32.totalorder %s13, 1
    %p62 = por %p60, %p61
    %p64 = scmp.ne.s32.totalorder %s47, %s63
    %p65 = scmp.eq.s32.totalorder %s13, 0
    %p66 = por %p64, %p65
    %p67 = scmp.le.s32.totalorder 1, %s7
    %p68 = scmp.lt.s32.totalorder %s7, 3
    %p69 = pnand %p67, %p68
    %p70 = pneg %p69
    // Predicated region
    $region9: #{_lambda_.24} parent=5 // pred_check
      _
    $region10: #{_lambda_.24} parent=5 // pred_check_branch
      %72 = sbr.rel (%p69) target = $region12
    $region11: #{_lambda_.24} parent=5 // pred_region
      %s73 = ssub.s32 %s7, 1
    $region12: #{_lambda_.24} parent=5 // pred_fallthru
      _
    %p74 = scmp.lt.s32.totalorder %s7, 2
    // Predicated region
    $region13: #{_lambda_.24} parent=5 // pred_check
      %p75 = pneg %p74
    $region14: #{_lambda_.24} parent=5 // pred_check_branch
      %77 = sbr.rel (%p75) target = $region16
    $region15: #{_lambda_.24} parent=5 // pred_region
      // Predicated region
      $region17: #{_lambda_.24} parent=15 // pred_check
        %p78 = pneg %p27
      $region18: #{_lambda_.24} parent=15 // pred_check_branch
        %80 = sbr.rel (%p78) target = $region20
      $region19: #{_lambda_.24} parent=15 // pred_region
        %p81 = scmp.lt.s32.totalorder %s7, 1
        %s82 = scalar_select %p81, %s7, 1
        %s83 = smul.addr %s82, 3
        %s84 = smul.addr %s83, 4
        %s85 = scalar_lea.vmem %s0, %s84
      $region20: #{_lambda_.24} parent=15 // pred_fallthru
        _
    $region16: #{_lambda_.24} parent=5 // pred_fallthru
      _
    %p86 = scmp.le.s32.totalorder 1, %s7
    %p87 = scmp.lt.s32.totalorder %s7, 3
    %p88 = pnand %p86, %p87
    %p89 = pneg %p88
    // Predicated region
    $region21: #{_lambda_.24} parent=5 // pred_check
      _
    $region22: #{_lambda_.24} parent=5 // pred_check_branch
      %91 = sbr.rel (%p88) target = $region24
    $region23: #{_lambda_.24} parent=5 // pred_region
      %s92 = ssub.s32 %s7, 1
      %p93 = scmp.lt.s32.totalorder %s12, 1
      %s94 = scalar_select %p93, %s12, 1
      %s95 = smul.addr %s94, 3
      %s96 = smul.addr %s95, 4
      %s97 = scalar_lea.vmem %s0, %s96
      %p98 = pneg %p33
      %p99 = pneg %p30
      %p100 = pneg %p59
      %p101 = pneg %p56
      %p102 = scmp.lt.s32.totalorder %s12, 1
      %s103 = scalar_select %p102, %s12, 1
      %s104 = smul.addr %s103, 4
      %s105 = scalar_lea.vmem %s1, %s104
      %p106 = scmp.lt.s32.totalorder %s12, 1
      %s107 = scalar_select %p106, %s12, 1
      %s108 = smul.addr %s107, 3
      %s109 = smul.addr %s108, 4
      %s110 = scalar_lea.vmem %s0, %s109
      %p111 = scmp.lt.s32.totalorder %s12, 1
      %s112 = scalar_select %p111, %s12, 1
      %s113 = smul.addr %s112, 4
      %s114 = scalar_lea.vmem %s1, %s113
      %v116 = vld [vmem:[%s110] sm:$0x77]
      %v117 = vld [vmem:[%s110 + $0x8] sm:$0x7]
      %119 = vrot.lane.b32.xlu0 %v116, 64
      %v120 = vpop.permute.xlu0 %119
      %v122 = vunpack.c.l.s4 1983009808
      %v123 = vunpack.c.0.s8 %v122
      %v124 = vperm.slane %v116, %v123
      %v126 = vunpack.c.l.s4 1934713408
      %v127 = vunpack.c.0.s8 %v126
      %v128 = vperm.slane %v124, %v127
      %v129 = vrot.slane %v128, 4
      %vm130 = vcmask 1047556
      %v131 = vsel %vm130, 0, %v129
      %v132 = vrot.slane %v124, 4
      %v133 = vsel %vm130, 0, %v132
      %v136 = vunpack.c.l.s4 1983009808
      %v137 = vunpack.c.0.s8 %v136
      %v138 = vperm.slane %v120, %v137
      %v140 = vunpack.c.l.s4 1934713408
      %v141 = vunpack.c.0.s8 %v140
      %v142 = vperm.slane %v138, %v141
      %v143 = vrot.slane %v142, 4
      %v144 = vsel %vm130, 0, %v143
      %v145 = vrot.slane %v138, 4
      %v146 = vsel %vm130, 0, %v145
      %v149 = vpack.i.b16 %v142, %v128
      %v151 = vshrl.u32 %v128, 16
      %v152 = vshrl.u32 %v142, 16
      %v153 = vpack.i.b16 %v152, %v151
      %v156 = vpack.i.b16 %v144, %v131
      %v157 = vshrl.u32 %v131, 16
      %v158 = vshrl.u32 %v144, 16
      %v159 = vpack.i.b16 %v158, %v157
      %v162 = vpack.i.b16 %v146, %v133
      %v164 = vrot.slane %v162, 4
      %v165 = vsel %vm130, %v164, %v149
      %v167 = vunpack.c.l.s4 1983009808
      %v168 = vunpack.c.0.s8 %v167
      %v169 = vperm.slane %v165, %v168
      %v171 = vrot.slane %v156, 4
      %v172 = vsel %vm130, %v171, %v169
      %v174 = vunpack.c.l.s4 1934713408
      %v175 = vunpack.c.0.s8 %v174
      %v176 = vperm.slane %v172, %v175
      %v179 = vrot.slane %v159, 4
      %v180 = vsel %vm130, %v179, %v153
      %v182 = vunpack.c.l.s4 1934713408
      %v183 = vunpack.c.0.s8 %v182
      %v184 = vperm.slane %v180, %v183
      %v187 = vpack.i.b16 %v184, %v176
      %v188 = vshrl.u32 %v176, 16
      %v189 = vshrl.u32 %v184, 16
      %v190 = vpack.i.b16 %v189, %v188
      %v191 = vrot.slane %v116, 4
      %v192 = vrot.slane %v120, 4
      %v195 = vunpack.c.l.s4 1983009808
      %v196 = vunpack.c.0.s8 %v195
      %v197 = vperm.slane %v191, %v196
      %v199 = vunpack.c.l.s4 1934713408
      %v200 = vunpack.c.0.s8 %v199
      %v201 = vperm.slane %v197, %v200
      %v202 = vrot.slane %v201, 4
      %v203 = vsel %vm130, 0, %v202
      %v204 = vrot.slane %v197, 4
      %v205 = vsel %vm130, 0, %v204
      %v208 = vunpack.c.l.s4 1983009808
      %v209 = vunpack.c.0.s8 %v208
      %v210 = vperm.slane %v192, %v209
      %v212 = vunpack.c.l.s4 1934713408
      %v213 = vunpack.c.0.s8 %v212
      %v214 = vperm.slane %v210, %v213
      %v215 = vrot.slane %v214, 4
      %v216 = vsel %vm130, 0, %v215
      %v217 = vrot.slane %v210, 4
      %v218 = vsel %vm130, 0, %v217
      %v221 = vpack.i.b16 %v214, %v201
      %v223 = vshrl.u32 %v201, 16
      %v224 = vshrl.u32 %v214, 16
      %v225 = vpack.i.b16 %v224, %v223
      %v228 = vpack.i.b16 %v216, %v203
      %v229 = vshrl.u32 %v203, 16
      %v230 = vshrl.u32 %v216, 16
      %v231 = vpack.i.b16 %v230, %v229
      %v234 = vpack.i.b16 %v218, %v205
      %v236 = vrot.slane %v234, 4
      %v237 = vsel %vm130, %v236, %v221
      %v239 = vunpack.c.l.s4 1983009808
      %v240 = vunpack.c.0.s8 %v239
      %v241 = vperm.slane %v237, %v240
      %v243 = vrot.slane %v228, 4
      %v244 = vsel %vm130, %v243, %v241
      %v246 = vunpack.c.l.s4 1934713408
      %v247 = vunpack.c.0.s8 %v246
      %v248 = vperm.slane %v244, %v247
      %v251 = vrot.slane %v231, 4
      %v252 = vsel %vm130, %v251, %v225
      %v254 = vunpack.c.l.s4 1934713408
      %v255 = vunpack.c.0.s8 %v254
      %v256 = vperm.slane %v252, %v255
      %v259 = vpack.i.b16 %v256, %v248
      %v260 = vshrl.u32 %v248, 16
      %v261 = vshrl.u32 %v256, 16
      %v262 = vpack.i.b16 %v261, %v260
      %264 = vrot.lane.b32.xlu0 %v117, 64
      %v265 = vpop.permute.xlu0 %264
      %v267 = vunpack.c.l.s4 1983009808
      %v268 = vunpack.c.0.s8 %v267
      %v269 = vperm.slane %v117, %v268
      %v271 = vunpack.c.l.s4 1934713408
      %v272 = vunpack.c.0.s8 %v271
      %v273 = vperm.slane %v269, %v272
      %v274 = vrot.slane %v273, 4
      %v275 = vsel %vm130, 0, %v274
      %v276 = vrot.slane %v269, 4
      %v277 = vsel %vm130, 0, %v276
      %v280 = vunpack.c.l.s4 1983009808
      %v281 = vunpack.c.0.s8 %v280
      %v282 = vperm.slane %v265, %v281
      %v284 = vunpack.c.l.s4 1934713408
      %v285 = vunpack.c.0.s8 %v284
      %v286 = vperm.slane %v282, %v285
      %v287 = vrot.slane %v286, 4
      %v288 = vsel %vm130, 0, %v287
      %v289 = vrot.slane %v282, 4
      %v290 = vsel %vm130, 0, %v289
      %v293 = vpack.i.b16 %v286, %v273
      %v295 = vshrl.u32 %v273, 16
      %v296 = vshrl.u32 %v286, 16
      %v297 = vpack.i.b16 %v296, %v295
      %v300 = vpack.i.b16 %v288, %v275
      %v301 = vshrl.u32 %v275, 16
      %v302 = vshrl.u32 %v288, 16
      %v303 = vpack.i.b16 %v302, %v301
      %v306 = vpack.i.b16 %v290, %v277
      %v308 = vrot.slane %v306, 4
      %v309 = vsel %vm130, %v308, %v293
      %v311 = vunpack.c.l.s4 1983009808
      %v312 = vunpack.c.0.s8 %v311
      %v313 = vperm.slane %v309, %v312
      %v315 = vrot.slane %v300, 4
      %v316 = vsel %vm130, %v315, %v313
      %v318 = vunpack.c.l.s4 1934713408
      %v319 = vunpack.c.0.s8 %v318
      %v320 = vperm.slane %v316, %v319
      %v323 = vrot.slane %v303, 4
      %v324 = vsel %vm130, %v323, %v297
      %v326 = vunpack.c.l.s4 1934713408
      %v327 = vunpack.c.0.s8 %v326
      %v328 = vperm.slane %v324, %v327
      %v331 = vpack.i.b16 %v328, %v320
      %v332 = vshrl.u32 %v320, 16
      %v333 = vshrl.u32 %v328, 16
      %v334 = vpack.i.b16 %v333, %v332
      %vm335 = vcmask 523264
      %v337 = vsel %vm335, %v187, 0
      %v340 = vsel %vm335, %v259, 0
      %342 = vmatpush.bf16.xpose.msra.mxu0 0
      %343 = vmatpush.bf16.xpose.msra.mxu0 0
      %344 = vmatpush.bf16.xpose.msra.mxu0 0
      %345 = vmatpush.bf16.xpose.msra.mxu0 0
      %346 = vmatpush.bf16.xpose.msra.mxu0 0
      %347 = vmatpush.bf16.xpose.msra.mxu0 0
      %348 = vmatpush.bf16.xpose.msra.mxu0 0
      %349 = vmatpush.bf16.xpose.msra.mxu0 %v340
      %350 = vmatmul.bf16.gmra.mxu0 %v337
      %v351 = vpop.f32.mrf.mxu0
      %v352 = vadd.f32 0.0, %v351
      %v353 = vpop.f32.mrf.mxu0
      %354 = vdwg.mxu0
      %v356 = vsel %vm335, %v190, 0
      %v359 = vsel %vm335, %v262, 0
      %361 = vmatpush.bf16.xpose.msra.mxu0 0
      %362 = vmatpush.bf16.xpose.msra.mxu0 0
      %363 = vmatpush.bf16.xpose.msra.mxu0 0
      %364 = vmatpush.bf16.xpose.msra.mxu0 0
      %365 = vmatpush.bf16.xpose.msra.mxu0 0
      %366 = vmatpush.bf16.xpose.msra.mxu0 0
      %367 = vmatpush.bf16.xpose.msra.mxu0 0
      %368 = vmatpush.bf16.xpose.msra.mxu0 %v359
      %369 = vmatmul.bf16.gmra.mxu0 %v356
      %v370 = vpop.f32.mrf.mxu0
      %v371 = vadd.f32 0.0, %v370
      %v372 = vpop.f32.mrf.mxu0
      %373 = vdwg.mxu0
      %v374 = vmul.f32 %v352, 0.125
      %v375 = vmul.f32 %v371, 0.125
      %vm376 = vcmask 36864
      %v377 = vsel %vm376, %v374, -inf
      %378 = vmax.xlane.f32.xlu0 %v377
      %v379 = vpop.xlane.xlu0 %378
      %v380 = vsel %vm376, %v375, -inf
      %381 = vmax.xlane.f32.xlu0 %v380
      %v382 = vpop.xlane.xlu0 %381
      %v383 = vsub.f32 %v374, %v379
      %v384 = vsub.f32 %v375, %v382
      %v385 = vmul.f32 %v383, 1.442695
      %v386 = vpow.pop %v385
      %v387 = vmul.f32 %v384, 1.442695
      %v388 = vpow.pop %v387
      %v389 = vsel %vm376, %v386, 0.0
      %390 = vadd.xlane.f32.xlu0 %v389
      %v391 = vpop.xlane.xlu0 %390
      %v392 = vsel %vm376, %v388, 0.0
      %393 = vadd.xlane.f32.xlu0 %v392
      %v394 = vpop.xlane.xlu0 %393
      %v395 = vrcp.pop %v391
      %v396 = vrcp.pop %v394
      %v397 = vmul.f32 %v386, %v395
      %v398 = vmul.f32 %v388, %v396
      %v399 = vpack.c.bf16 %v397, %v397
      %v400 = vpack.c.bf16 %v398, %v398
      %vm401 = vcmask 39936
      %v403 = vsel %vm401, %v399, 0
      %vm405 = vcmask 1041408
      %vm406 = vcmask 1042432
      %v407 = vsel %vm405, 4294967295, 65535
      %v408 = vsel %vm406, %v407, 0
      %v410 = vand.u32 %v331, %v408
      %412 = vmatpush.bf16.msra.mxu0 0
      %413 = vmatpush.bf16.msra.mxu0 0
      %414 = vmatpush.bf16.msra.mxu0 0
      %415 = vmatpush.bf16.msra.mxu0 0
      %416 = vmatpush.bf16.msra.mxu0 0
      %417 = vmatpush.bf16.msra.mxu0 0
      %418 = vmatpush.bf16.msra.mxu0 0
      %419 = vmatpush.bf16.msra.mxu0 %v410
      %420 = vmatmul.bf16.gmra.mxu0 %v403
      %v421 = vpop.f32.mrf.mxu0
      %v422 = vadd.f32 0.0, %v421
      %v423 = vpop.f32.mrf.mxu0
      %424 = vdwg.mxu0
      %v426 = vsel %vm401, %v400, 0
      %v429 = vand.u32 %v334, %v408
      %431 = vmatpush.bf16.msra.mxu0 0
      %432 = vmatpush.bf16.msra.mxu0 0
      %433 = vmatpush.bf16.msra.mxu0 0
      %434 = vmatpush.bf16.msra.mxu0 0
      %435 = vmatpush.bf16.msra.mxu0 0
      %436 = vmatpush.bf16.msra.mxu0 0
      %437 = vmatpush.bf16.msra.mxu0 0
      %438 = vmatpush.bf16.msra.mxu0 %v429
      %439 = vmatmul.bf16.gmra.mxu0 %v426
      %v440 = vpop.f32.mrf.mxu0
      %v441 = vadd.f32 0.0, %v440
      %v442 = vpop.f32.mrf.mxu0
      %443 = vdwg.mxu0
      %v445 = vunpack.c.l.s4 1983009808
      %v446 = vunpack.c.0.s8 %v445
      %v447 = vperm.slane %v422, %v446
      %v448 = vrot.slane %v422, 4
      %vm449 = vcmask 1047556
      %v450 = vsel %vm449, 0.0, %v448
      %v452 = vunpack.c.l.s4 1983009808
      %v453 = vunpack.c.0.s8 %v452
      %v454 = vperm.slane %v441, %v453
      %v455 = vrot.slane %v441, 4
      %v456 = vsel %vm449, 0.0, %v455
      %v457 = vrot.slane %v454, 4
      %v458 = vsel %vm449, %v457, %v447
      %v459 = vrot.slane %v447, 4
      %v460 = vsel %vm449, %v454, %v459
      %v462 = vunpack.c.l.s4 1934713408
      %v463 = vunpack.c.0.s8 %v462
      %v464 = vperm.slane %v458, %v463
      %v466 = vunpack.c.l.s4 1934713408
      %v467 = vunpack.c.0.s8 %v466
      %v468 = vperm.slane %v460, %v467
      %v469 = vrot.slane %v456, 4
      %v470 = vsel %vm449, %v469, %v450
      %v471 = vrot.slane %v464, 4
      %v472 = vsel %vm449, 0.0, %v471
      %v473 = vrot.slane %v468, 4
      %v474 = vsel %vm449, 0.0, %v473
      %v475 = vsel %vm449, %v473, %v464
      %v477 = vunpack.c.l.s4 1983009808
      %v478 = vunpack.c.0.s8 %v477
      %v479 = vperm.slane %v475, %v478
      %v480 = vrot.slane %v474, 4
      %v481 = vsel %vm449, %v480, %v472
      %v483 = vunpack.c.l.s4 1983009808
      %v484 = vunpack.c.0.s8 %v483
      %v485 = vperm.slane %v481, %v484
      %v486 = vrot.slane %v485, 4
      %v487 = vsel %vm449, %v486, %v479
      %v489 = vunpack.c.l.s4 1934713408
      %v490 = vunpack.c.0.s8 %v489
      %v491 = vperm.slane %v487, %v490
      %v493 = vunpack.c.l.s4 1934713408
      %v494 = vunpack.c.0.s8 %v493
      %v495 = vperm.slane %v470, %v494
      %v497 = vunpack.c.l.s4 1934713408
      %v498 = vunpack.c.0.s8 %v497
      %v499 = vperm.slane %v495, %v498
      %v500 = vrot.slane %v499, 4
      %v501 = vsel %vm449, %v500, %v491
      %v502 = vrot.slane %v491, 4
      %v503 = vsel %vm449, %v499, %v502
      %505 = vrot.lane.b32.xlu0 %v503, 64
      %v506 = vpop.permute.xlu0 %505
      %v508 = vsel %vm335, %v501, %v506
      %v509 = vpack.c.bf16 %v508, %v508
      %vm510 = vcmask 1042432
      %vm511 = vsmask.f32 2304
      %vm512 = vmand %vm510, %vm511
      %v513 = vld [vmem:[%s114] sm:$0x7]
      %v514 = vsel %vm512, %v509, %v513
      %515 = vst [vmem:[%s114] sm:$0x7] %v514
      %p516 = scmp.lt.s32.totalorder %s12, 1
      %s517 = scalar_select %p516, %s12, 1
      %s518 = smul.addr %s517, 4
      %s519 = scalar_lea.vmem %s1, %s518
      // Predicated region
      $region25: #{_lambda_.24} parent=23 // pred_check
        %p520 = pneg %p56
      $region26: #{_lambda_.24} parent=23 // pred_check_branch
        %522 = sbr.rel (%p520) target = $region28
      $region27: #{_lambda_.24} parent=23 // pred_region
        _
      $region28: #{_lambda_.24} parent=23 // pred_fallthru
        _
    $region24: #{_lambda_.24} parent=5 // pred_fallthru
      _
    %p523 = scmp.le.s32.totalorder 2, %s7
    // Predicated region
    $region29: #{_lambda_.24} parent=5 // pred_check
      %p524 = pneg %p523
    $region30: #{_lambda_.24} parent=5 // pred_check_branch
      %526 = sbr.rel (%p524) target = $region32
    $region31: #{_lambda_.24} parent=5 // pred_region
      %s527 = ssub.s32 %s7, 2
      // Predicated region
      $region33: #{_lambda_.24} parent=31 // pred_check
        %p528 = pneg %p62
      $region34: #{_lambda_.24} parent=31 // pred_check_branch
        %530 = sbr.rel (%p528) target = $region36
      $region35: #{_lambda_.24} parent=31 // pred_region
        %p531 = scmp.lt.s32.totalorder %s13, 1
        %s532 = scalar_select %p531, %s13, 1
        %s533 = smul.addr %s532, 4
        %s534 = scalar_lea.vmem %s1, %s533
      $region36: #{_lambda_.24} parent=31 // pred_fallthru
        _
    $region32: #{_lambda_.24} parent=5 // pred_fallthru
      _
  $region6: #{_lambda_.24} parent=0 // loop_footer
    %s11 = sadd.s32 1, %s7
  $region7: #{_lambda_.24} parent=0 // loop_footer_branch
    %6 = sbr.rel target = $region3
  $region8: #{_lambda_.24} parent=0 // loop_exit
    _

// kernel: _lambda_.25
$region0: #{_lambda_.25}
  #allocation0 [shape = 'u32[]', space=smem, size = 0x4, offset = 0x4, fixed_abs, tag = 'smem constant byte address 0x4 - core index']
  #allocation1 [shape = 'u32[72,128]{1,0:T(1,128)}', space=vmem, size = 0x9000, scoped, tag = 'internal scratch']
  #allocation2 [shape = 'f32[16,128]{1,0:T(8,128)}', space=vmem, size = 0x2000, scoped, tag = 'scratch operand']
  %s0 = inlined_call_operand.vmem [shape: bf16[16,128], index: 0, kind: input, shape index: {}]
  %s1 = inlined_call_operand.hbm [shape: bf16[128,128], index: 1, kind: input, shape index: {}]
  %s2 = inlined_call_operand.vmem [shape: f32[1,128], index: 2, kind: input, shape index: {}]
  %s3 = inlined_call_operand.vmem [shape: f32[16,128], index: 3, kind: output, shape index: {}]
  %s4 = sld [smem:[#allocation0]]
  $region34: #{_lambda_.25} parent=0
    _
  %s6 = ssub.s32 1, %s4
  %s7 = scalar_select 0, %s6, %s4
  $region1: #{_lambda_.25} parent=0
    #allocation3 [shape = 'u8[32768]{0}', space=vmem, size = 0x8000, scoped, tag = 'input window, operand 1, single buffered']
    #allocation4 [shape = 's32[1]{0}', space=sflag, size = 0x4, scoped, tag = 'scoped memory for _lambda_.25']
    %8 = vsyncpa [#allocation4], 0
    // Predicated region
    $region2: #{_lambda_.25} parent=1 // pred_check
      _
    $region3: #{_lambda_.25} parent=1 // pred_check_branch
      %10 = sbr.rel (0) target = $region5
    $region4: #{_lambda_.25} parent=1 // pred_region
      _
    $region5: #{_lambda_.25} parent=1 // pred_fallthru
      _
    // Predicated region
    $region6: #{_lambda_.25} parent=1 // pred_check
      _
    $region7: #{_lambda_.25} parent=1 // pred_check_branch
      %12 = sbr.rel (0) target = $region9
    $region8: #{_lambda_.25} parent=1 // pred_region
      %14 = vsyncadd [#allocation4], 0
      %s15 = sshll.u32 %s1, 4
      %s16 = int_to_ptr.hbm [resolvable:$true] %s15
      %s17 = sshll.u32 [#allocation3], 4
      %s18 = int_to_ptr.vmem [resolvable:$true] %s17
      %23 = dma.hbm_to_vmem [thread:$0]  %s16, 1024, %s18, [#allocation4], 64, 64, 4
    $region9: #{_lambda_.25} parent=1 // pred_fallthru
      _
    // Predicated region
    $region10: #{_lambda_.25} parent=1 // pred_check
      _
    $region11: #{_lambda_.25} parent=1 // pred_check_branch
      %25 = sbr.rel (0) target = $region13
    $region12: #{_lambda_.25} parent=1 // pred_region
      _
    $region13: #{_lambda_.25} parent=1 // pred_fallthru
      _
    // Predicated region
    $region14: #{_lambda_.25} parent=1 // pred_check
      _
    $region15: #{_lambda_.25} parent=1 // pred_check_branch
      %27 = sbr.rel (0) target = $region17
    $region16: #{_lambda_.25} parent=1 // pred_region
      %29 = dma.done [#allocation4], 1024
    $region17: #{_lambda_.25} parent=1 // pred_fallthru
      _
    %p30 = scmp.eq.s32.totalorder 0, 0
    // Predicated region
    $region18: #{_lambda_.25} parent=1 // pred_check
      %p31 = pneg %p30
    $region19: #{_lambda_.25} parent=1 // pred_check_branch
      %33 = sbr.rel (%p31) target = $region21
    $region20: #{_lambda_.25} parent=1 // pred_region
      %34 = vst [vmem:[#allocation2] sm:$0xff] 0.0
      %35 = vst [vmem:[#allocation2 + $0x8] sm:$0xff] 0.0
    $region21: #{_lambda_.25} parent=1 // pred_fallthru
      _
    %v36 = vld [vmem:[#allocation2] sm:$0xff]
    %v37 = vld [vmem:[#allocation2 + $0x8] sm:$0xff]
    %v38 = vld [vmem:[%s0] sm:$0xf]
    %v39 = vld [vmem:[%s0 + $0x4] sm:$0xf]
    %v40 = vld [vmem:[#allocation3] sm:$0xf]
    %v41 = vld [vmem:[#allocation3 + $0x4] sm:$0xf]
    %v42 = vld [vmem:[#allocation3 + $0x8] sm:$0xf]
    %v43 = vld [vmem:[#allocation3 + $0xc] sm:$0xf]
    %v44 = vld [vmem:[#allocation3 + $0x10] sm:$0xf]
    %v45 = vld [vmem:[#allocation3 + $0x14] sm:$0xf]
    %v46 = vld [vmem:[#allocation3 + $0x18] sm:$0xf]
    %v47 = vld [vmem:[#allocation3 + $0x1c] sm:$0xf]
    %v48 = vld [vmem:[#allocation3 + $0x20] sm:$0xf]
    %v49 = vld [vmem:[#allocation3 + $0x24] sm:$0xf]
    %v50 = vld [vmem:[#allocation3 + $0x28] sm:$0xf]
    %v51 = vld [vmem:[#allocation3 + $0x2c] sm:$0xf]
    %v52 = vld [vmem:[#allocation3 + $0x30] sm:$0xf]
    %v53 = vld [vmem:[#allocation3 + $0x34] sm:$0xf]
    %v54 = vld [vmem:[#allocation3 + $0x38] sm:$0xf]
    %v55 = vld [vmem:[#allocation3 + $0x3c] sm:$0xf]
    %v58 = vunpack.c.l.b16 %v38
    %v59 = vunpack.c.l.b16 %v39
    %v60 = vpack.c.b16 %v59, %v58
    %v78 = vunpack.c.l.b16 %v40
    %v79 = vunpack.c.l.b16 %v41
    %v80 = vunpack.c.l.b16 %v42
    %v81 = vunpack.c.l.b16 %v43
    %v82 = vunpack.c.l.b16 %v44
    %v83 = vunpack.c.l.b16 %v45
    %v84 = vunpack.c.l.b16 %v46
    %v85 = vunpack.c.l.b16 %v47
    %v86 = vunpack.c.l.b16 %v48
    %v87 = vunpack.c.l.b16 %v49
    %v88 = vunpack.c.l.b16 %v50
    %v89 = vunpack.c.l.b16 %v51
    %v90 = vunpack.c.l.b16 %v52
    %v91 = vunpack.c.l.b16 %v53
    %v92 = vunpack.c.l.b16 %v54
    %v93 = vunpack.c.l.b16 %v55
    %v94 = vpack.c.b16 %v79, %v78
    %v95 = vpack.c.b16 %v81, %v80
    %v96 = vpack.c.b16 %v83, %v82
    %v97 = vpack.c.b16 %v85, %v84
    %v98 = vpack.c.b16 %v87, %v86
    %v99 = vpack.c.b16 %v89, %v88
    %v100 = vpack.c.b16 %v91, %v90
    %v101 = vpack.c.b16 %v93, %v92
    %110 = vmatpush.bf16.msra.mxu0 %v101
    %111 = vmatpush.bf16.msra.mxu0 %v100
    %112 = vmatpush.bf16.msra.mxu0 %v99
    %113 = vmatpush.bf16.msra.mxu0 %v98
    %114 = vmatpush.bf16.msra.mxu0 %v97
    %115 = vmatpush.bf16.msra.mxu0 %v96
    %116 = vmatpush.bf16.msra.mxu0 %v95
    %117 = vmatpush.bf16.msra.mxu0 %v94
    %118 = vmatmul.bf16.gmra.mxu0 %v60
    %v119 = vpop.f32.mrf.mxu0
    %v120 = vadd.f32 0.0, %v119
    %v121 = vpop.f32.mrf.mxu0
    %v122 = vadd.f32 0.0, %v121
    %123 = vdwg.mxu0
    %v124 = vadd.f32 %v36, %v120
    %v125 = vadd.f32 %v37, %v122
    %126 = vst [vmem:[#allocation2] sm:$0xff] %v124
    %127 = vst [vmem:[#allocation2 + $0x8] sm:$0xff] %v125
    // Predicated region
    $region22: #{_lambda_.25} parent=1 // pred_check
      %p128 = pneg %p30
    $region23: #{_lambda_.25} parent=1 // pred_check_branch
      %130 = sbr.rel (%p128) target = $region25
    $region24: #{_lambda_.25} parent=1 // pred_region
      %v131 = vld [vmem:[#allocation2] sm:$0xff]
      %v132 = vld [vmem:[#allocation2 + $0x8] sm:$0xff]
      %v133 = vld [vmem:[%s2] sm:$0x1]
      %v135 = vperm.slane %v133, 0
      %v137 = vadd.f32 %v131, %v135
      %v138 = vadd.f32 %v132, %v135
      %139 = vst [vmem:[%s3] sm:$0xff] %v137
      %140 = vst [vmem:[%s3 + $0x8] sm:$0xff] %v138
    $region25: #{_lambda_.25} parent=1 // pred_fallthru
      _
    // Predicated region
    $region26: #{_lambda_.25} parent=1 // pred_check
      _
    $region27: #{_lambda_.25} parent=1 // pred_check_branch
      %142 = sbr.rel (0) target = $region29
    $region28: #{_lambda_.25} parent=1 // pred_region
      _
    $region29: #{_lambda_.25} parent=1 // pred_fallthru
      _
    // Predicated region
    $region30: #{_lambda_.25} parent=1 // pred_check
      _
    $region31: #{_lambda_.25} parent=1 // pred_check_branch
      %144 = sbr.rel (0) target = $region33
    $region32: #{_lambda_.25} parent=1 // pred_region
      _
    $region33: #{_lambda_.25} parent=1 // pred_fallthru
      _
    %145 = vsyncpa [#allocation4], 1

// kernel: _lambda_.31
$region0: #{_lambda_.31}
  #allocation0 [shape = 'u32[]', space=smem, size = 0x4, offset = 0x4, fixed_abs, tag = 'smem constant byte address 0x4 - core index']
  #allocation1 [shape = 'u32[72,128]{1,0:T(1,128)}', space=vmem, size = 0x9000, scoped, tag = 'internal scratch']
  #allocation2 [shape = 'bf16[8,128]{1,0:T(8,128)(2,1)}', space=vmem, size = 0x800, scoped, tag = 'scratch operand']
  %s0 = inlined_call_operand.vmem [shape: f32[8,128], index: 0, kind: input, shape index: {}]
  %s1 = inlined_call_operand.vmem [shape: f32[1,128], index: 1, kind: input, shape index: {}]
  %s2 = inlined_call_operand.vmem [shape: f32[1,128], index: 2, kind: input, shape index: {}, may-alias: {2,4}]
  %s3 = inlined_call_operand.hbm [shape: bf16[128,128], index: 3, kind: input, shape index: {}]
  %s4 = inlined_call_operand.vmem [shape: f32[1,128], index: 4, kind: input, shape index: {}, may-alias: {2,4}]
  %s5 = inlined_call_operand.vmem [shape: f32[8,128], index: 5, kind: output, shape index: {}]
  %s6 = sld [smem:[#allocation0]]
  $region38: #{_lambda_.31} parent=0
    _
  %s8 = ssub.s32 1, %s6
  %s9 = scalar_select 0, %s8, %s6
  $region1: #{_lambda_.31} parent=0
    #allocation3 [shape = 'u8[32768]{0}', space=vmem, size = 0x8000, scoped, tag = 'input window, operand 3, single buffered']
    #allocation4 [shape = 's32[1]{0}', space=sflag, size = 0x4, scoped, tag = 'scoped memory for _lambda_.31']
    %10 = vsyncpa [#allocation4], 0
    // Predicated region
    $region2: #{_lambda_.31} parent=1 // pred_check
      _
    $region3: #{_lambda_.31} parent=1 // pred_check_branch
      %12 = sbr.rel (0) target = $region5
    $region4: #{_lambda_.31} parent=1 // pred_region
      _
    $region5: #{_lambda_.31} parent=1 // pred_fallthru
      _
    // Predicated region
    $region6: #{_lambda_.31} parent=1 // pred_check
      _
    $region7: #{_lambda_.31} parent=1 // pred_check_branch
      %14 = sbr.rel (0) target = $region9
    $region8: #{_lambda_.31} parent=1 // pred_region
      _
    $region9: #{_lambda_.31} parent=1 // pred_fallthru
      _
    // Predicated region
    $region10: #{_lambda_.31} parent=1 // pred_check
      _
    $region11: #{_lambda_.31} parent=1 // pred_check_branch
      %16 = sbr.rel (0) target = $region13
    $region12: #{_lambda_.31} parent=1 // pred_region
      _
    $region13: #{_lambda_.31} parent=1 // pred_fallthru
      _
    // Predicated region
    $region14: #{_lambda_.31} parent=1 // pred_check
      _
    $region15: #{_lambda_.31} parent=1 // pred_check_branch
      %18 = sbr.rel (0) target = $region17
    $region16: #{_lambda_.31} parent=1 // pred_region
      %20 = vsyncadd [#allocation4], 0
      %s21 = sshll.u32 %s3, 4
      %s22 = int_to_ptr.hbm [resolvable:$true] %s21
      %s23 = sshll.u32 [#allocation3], 4
      %s24 = int_to_ptr.vmem [resolvable:$true] %s23
      %29 = dma.hbm_to_vmem [thread:$0]  %s22, 1024, %s24, [#allocation4], 64, 64, 4
    $region17: #{_lambda_.31} parent=1 // pred_fallthru
      _
    // Predicated region
    $region18: #{_lambda_.31} parent=1 // pred_check
      _
    $region19: #{_lambda_.31} parent=1 // pred_check_branch
      %31 = sbr.rel (0) target = $region21
    $region20: #{_lambda_.31} parent=1 // pred_region
      _
    $region21: #{_lambda_.31} parent=1 // pred_fallthru
      _
    // Predicated region
    $region22: #{_lambda_.31} parent=1 // pred_check
      _
    $region23: #{_lambda_.31} parent=1 // pred_check_branch
      %33 = sbr.rel (0) target = $region25
    $region24: #{_lambda_.31} parent=1 // pred_region
      %35 = dma.done [#allocation4], 1024
    $region25: #{_lambda_.31} parent=1 // pred_fallthru
      _
    %p36 = scmp.eq.s32.totalorder 0, 0
    // Predicated region
    $region26: #{_lambda_.31} parent=1 // pred_check
      %p37 = pneg %p36
    $region27: #{_lambda_.31} parent=1 // pred_check_branch
      %39 = sbr.rel (%p37) target = $region29
    $region28: #{_lambda_.31} parent=1 // pred_region
      %v40 = vld [vmem:[%s0] sm:$0xff]
      %41 = vadd.xlane.f32.xlu0 %v40
      %v42 = vpop.xlane.xlu0 %41
      %v43 = vrcp.pop 128.0
      %v44 = vmul.f32 128.0, %v43
      %v45 = vsub.f32 1.0, %v44
      %v46 = vmul.f32 %v43, %v45
      %v47 = vadd.f32 %v43, %v46
      %vm48 = vweird.f32 %v43
      %v49 = vsel %vm48, %v43, %v47
      %v50 = vmul.f32 %v42, %v49
      %v51 = vsub.f32 %v40, %v50
      %v52 = vmul.f32 %v51, %v51
      %53 = vadd.xlane.f32.xlu0 %v52
      %v54 = vpop.xlane.xlu0 %53
      %v55 = vmul.f32 %v54, %v49
      %v56 = vadd.f32 %v55, 1e-05
      %v57 = vrsqrt.pop %v56
      %v58 = vmul.f32 %v57, %v56
      %v59 = vmul.f32 %v58, %v57
      %v60 = vmul.f32 0.5, %v59
      %v61 = vsub.f32 1.5, %v60
      %v62 = vmul.f32 %v57, %v61
      %vm63 = vweird.f32 %v56
      %vm64 = vweird.f32 %v57
      %vm65 = vmor %vm63, %vm64
      %v66 = vsel %vm65, %v57, %v62
      %v67 = vmul.f32 %v51, %v66
      %v68 = vld [vmem:[%s1] sm:$0x1]
      %v70 = vperm.slane %v68, 0
      %v72 = vmul.f32 %v67, %v70
      %v73 = vld [vmem:[%s2] sm:$0x1]
      %v75 = vperm.slane %v73, 0
      %v77 = vadd.f32 %v72, %v75
      %v78 = vpack.c.bf16 %v77, %v77
      %79 = vst [vmem:[#allocation2] sm:$0xf] %v78
    $region29: #{_lambda_.31} parent=1 // pred_fallthru
      _
    %v80 = vld [vmem:[#allocation2] sm:$0xf]
    %v81 = vld [vmem:[#allocation3] sm:$0xf]
    %v82 = vld [vmem:[#allocation3 + $0x4] sm:$0xf]
    %v83 = vld [vmem:[#allocation3 + $0x8] sm:$0xf]
    %v84 = vld [vmem:[#allocation3 + $0xc] sm:$0xf]
    %v85 = vld [vmem:[#allocation3 + $0x10] sm:$0xf]
    %v86 = vld [vmem:[#allocation3 + $0x14] sm:$0xf]
    %v87 = vld [vmem:[#allocation3 + $0x18] sm:$0xf]
    %v88 = vld [vmem:[#allocation3 + $0x1c] sm:$0xf]
    %v89 = vld [vmem:[#allocation3 + $0x20] sm:$0xf]
    %v90 = vld [vmem:[#allocation3 + $0x24] sm:$0xf]
    %v91 = vld [vmem:[#allocation3 + $0x28] sm:$0xf]
    %v92 = vld [vmem:[#allocation3 + $0x2c] sm:$0xf]
    %v93 = vld [vmem:[#allocation3 + $0x30] sm:$0xf]
    %v94 = vld [vmem:[#allocation3 + $0x34] sm:$0xf]
    %v95 = vld [vmem:[#allocation3 + $0x38] sm:$0xf]
    %v96 = vld [vmem:[#allocation3 + $0x3c] sm:$0xf]
    %v97 = vld [vmem:[%s4] sm:$0x1]
    %v99 = vperm.slane %v97, 0
    %v117 = vunpack.c.l.b16 %v81
    %v118 = vunpack.c.l.b16 %v82
    %v119 = vunpack.c.l.b16 %v83
    %v120 = vunpack.c.l.b16 %v84
    %v121 = vunpack.c.l.b16 %v85
    %v122 = vunpack.c.l.b16 %v86
    %v123 = vunpack.c.l.b16 %v87
    %v124 = vunpack.c.l.b16 %v88
    %v125 = vunpack.c.l.b16 %v89
    %v126 = vunpack.c.l.b16 %v90
    %v127 = vunpack.c.l.b16 %v91
    %v128 = vunpack.c.l.b16 %v92
    %v129 = vunpack.c.l.b16 %v93
    %v130 = vunpack.c.l.b16 %v94
    %v131 = vunpack.c.l.b16 %v95
    %v132 = vunpack.c.l.b16 %v96
    %v133 = vpack.c.b16 %v118, %v117
    %v134 = vpack.c.b16 %v120, %v119
    %v135 = vpack.c.b16 %v122, %v121
    %v136 = vpack.c.b16 %v124, %v123
    %v137 = vpack.c.b16 %v126, %v125
    %v138 = vpack.c.b16 %v128, %v127
    %v139 = vpack.c.b16 %v130, %v129
    %v140 = vpack.c.b16 %v132, %v131
    %149 = vmatpush.bf16.msra.mxu0 %v140
    %150 = vmatpush.bf16.msra.mxu0 %v139
    %151 = vmatpush.bf16.msra.mxu0 %v138
    %152 = vmatpush.bf16.msra.mxu0 %v137
    %153 = vmatpush.bf16.msra.mxu0 %v136
    %154 = vmatpush.bf16.msra.mxu0 %v135
    %155 = vmatpush.bf16.msra.mxu0 %v134
    %156 = vmatpush.bf16.msra.mxu0 %v133
    %157 = vmatmul.bf16.gmra.mxu0 %v80
    %v158 = vpop.f32.mrf.mxu0
    %v159 = vadd.f32 %v99, %v158
    %v160 = vpop.f32.mrf.mxu0
    %161 = vdwg.mxu0
    %162 = vst [vmem:[%s5] sm:$0xff] %v159
    // Predicated region
    $region30: #{_lambda_.31} parent=1 // pred_check
      _
    $region31: #{_lambda_.31} parent=1 // pred_check_branch
      %164 = sbr.rel (0) target = $region33
    $region32: #{_lambda_.31} parent=1 // pred_region
      _
    $region33: #{_lambda_.31} parent=1 // pred_fallthru
      _
    // Predicated region
    $region34: #{_lambda_.31} parent=1 // pred_check
      _
    $region35: #{_lambda_.31} parent=1 // pred_check_branch
      %166 = sbr.rel (0) target = $region37
    $region36: #{_lambda_.31} parent=1 // pred_region
      _
    $region37: #{_lambda_.31} parent=1 // pred_fallthru
      _
    %167 = vsyncpa [#allocation4], 1

// kernel: _lambda_.26
$region0: #{_lambda_.26}
  #allocation0 [shape = 'u32[]', space=smem, size = 0x4, offset = 0x4, fixed_abs, tag = 'smem constant byte address 0x4 - core index']
  #allocation1 [shape = 'u32[72,128]{1,0:T(1,128)}', space=vmem, size = 0x9000, scoped, tag = 'internal scratch']
  #allocation2 [shape = 'bf16[16,128]{1,0:T(8,128)(2,1)}', space=vmem, size = 0x1000, scoped, tag = 'scratch operand']
  #allocation3 [shape = 'f32[16,128]{1,0:T(8,128)}', space=vmem, size = 0x2000, scoped, tag = 'scratch operand']
  %s0 = inlined_call_operand.vmem [shape: f32[16,128], index: 0, kind: input, shape index: {}]
  %s1 = inlined_call_operand.vmem [shape: f32[1,128], index: 1, kind: input, shape index: {}]
  %s2 = inlined_call_operand.vmem [shape: f32[1,128], index: 2, kind: input, shape index: {}, may-alias: {2,6}]
  %s3 = inlined_call_operand.hbm [shape: bf16[128,512], index: 3, kind: input, shape index: {}]
  %s4 = inlined_call_operand.vmem [shape: f32[1,512], index: 4, kind: input, shape index: {}]
  %s5 = inlined_call_operand.hbm [shape: bf16[512,128], index: 5, kind: input, shape index: {}]
  %s6 = inlined_call_operand.vmem [shape: f32[1,128], index: 6, kind: input, shape index: {}, may-alias: {2,6}]
  %s7 = inlined_call_operand.vmem [shape: f32[16,128], index: 7, kind: output, shape index: {}]
  %s8 = sld [smem:[#allocation0]]
  $region54: #{_lambda_.26} parent=0
    _
  %s10 = ssub.s32 1, %s8
  %s11 = scalar_select 0, %s10, %s8
  $region1: #{_lambda_.26} parent=0
    #allocation4 [shape = 'u8[131072]{0}', space=vmem, size = 0x20000, scoped, tag = 'input window, operand 3, single buffered']
    #allocation5 [shape = 's32[1]{0}', space=sflag, size = 0x4, scoped, tag = 'scoped memory for _lambda_.26']
    #allocation6 [shape = 'u8[131072]{0}', space=vmem, size = 0x20000, scoped, tag = 'input window, operand 5, single buffered']
    #allocation7 [shape = 's32[1]{0}', space=sflag, size = 0x4, scoped, tag = 'scoped memory for _lambda_.26']
    %12 = vsyncpa [#allocation5], 0
    %13 = vsyncpa [#allocation7], 0
    // Predicated region
    $region2: #{_lambda_.26} parent=1 // pred_check
      _
    $region3: #{_lambda_.26} parent=1 // pred_check_branch
      %15 = sbr.rel (0) target = $region5
    $region4: #{_lambda_.26} parent=1 // pred_region
      _
    $region5: #{_lambda_.26} parent=1 // pred_fallthru
      _
    // Predicated region
    $region6: #{_lambda_.26} parent=1 // pred_check
      _
    $region7: #{_lambda_.26} parent=1 // pred_check_branch
      %17 = sbr.rel (0) target = $region9
    $region8: #{_lambda_.26} parent=1 // pred_region
      _
    $region9: #{_lambda_.26} parent=1 // pred_fallthru
      _
    // Predicated region
    $region10: #{_lambda_.26} parent=1 // pred_check
      _
    $region11: #{_lambda_.26} parent=1 // pred_check_branch
      %19 = sbr.rel (0) target = $region13
    $region12: #{_lambda_.26} parent=1 // pred_region
      _
    $region13: #{_lambda_.26} parent=1 // pred_fallthru
      _
    // Predicated region
    $region14: #{_lambda_.26} parent=1 // pred_check
      _
    $region15: #{_lambda_.26} parent=1 // pred_check_branch
      %21 = sbr.rel (0) target = $region17
    $region16: #{_lambda_.26} parent=1 // pred_region
      %23 = vsyncadd [#allocation5], 0
      %s24 = sshll.u32 %s3, 4
      %s25 = int_to_ptr.hbm [resolvable:$true] %s24
      %s26 = sshll.u32 [#allocation4], 4
      %s27 = int_to_ptr.vmem [resolvable:$true] %s26
      %32 = dma.hbm_to_vmem [thread:$0]  %s25, 4096, %s27, [#allocation5], 256, 256, 16
    $region17: #{_lambda_.26} parent=1 // pred_fallthru
      _
    // Predicated region
    $region18: #{_lambda_.26} parent=1 // pred_check
      _
    $region19: #{_lambda_.26} parent=1 // pred_check_branch
      %34 = sbr.rel (0) target = $region21
    $region20: #{_lambda_.26} parent=1 // pred_region
      _
    $region21: #{_lambda_.26} parent=1 // pred_fallthru
      _
    // Predicated region
    $region22: #{_lambda_.26} parent=1 // pred_check
      _
    $region23: #{_lambda_.26} parent=1 // pred_check_branch
      %36 = sbr.rel (0) target = $region25
    $region24: #{_lambda_.26} parent=1 // pred_region
      %38 = vsyncadd [#allocation7], 0
      %s39 = sshll.u32 %s5, 4
      %s40 = int_to_ptr.hbm [resolvable:$true] %s39
      %s41 = sshll.u32 [#allocation6], 4
      %s42 = int_to_ptr.vmem [resolvable:$true] %s41
      %47 = dma.hbm_to_vmem [thread:$0]  %s40, 4096, %s42, [#allocation7], 64, 64, 4
    $region25: #{_lambda_.26} parent=1 // pred_fallthru
      _
    // Predicated region
    $region26: #{_lambda_.26} parent=1 // pred_check
      _
    $region27: #{_lambda_.26} parent=1 // pred_check_branch
      %49 = sbr.rel (0) target = $region29
    $region28: #{_lambda_.26} parent=1 // pred_region
      _
    $region29: #{_lambda_.26} parent=1 // pred_fallthru
      _
    // Predicated region
    $region30: #{_lambda_.26} parent=1 // pred_check
      _
    $region31: #{_lambda_.26} parent=1 // pred_check_branch
      %51 = sbr.rel (0) target = $region33
    $region32: #{_lambda_.26} parent=1 // pred_region
      %53 = dma.done [#allocation5], 4096
    $region33: #{_lambda_.26} parent=1 // pred_fallthru
      _
    // Predicated region
    $region34: #{_lambda_.26} parent=1 // pred_check
      _
    $region35: #{_lambda_.26} parent=1 // pred_check_branch
      %55 = sbr.rel (0) target = $region37
    $region36: #{_lambda_.26} parent=1 // pred_region
      %57 = dma.done [#allocation7], 4096
    $region37: #{_lambda_.26} parent=1 // pred_fallthru
      _
    %p58 = scmp.eq.s32.totalorder 0, 0
    // Predicated region
    $region38: #{_lambda_.26} parent=1 // pred_check
      %p59 = pneg %p58
    $region39: #{_lambda_.26} parent=1 // pred_check_branch
      %61 = sbr.rel (%p59) target = $region41
    $region40: #{_lambda_.26} parent=1 // pred_region
      %62 = vst [vmem:[#allocation3] sm:$0xff] 0.0
      %63 = vst [vmem:[#allocation3 + $0x8] sm:$0xff] 0.0
      %v64 = vld [vmem:[%s0] sm:$0xff]
      %v65 = vld [vmem:[%s0 + $0x8] sm:$0xff]
      %66 = vadd.xlane.f32.xlu0 %v64
      %v67 = vpop.xlane.xlu0 %66
      %68 = vadd.xlane.f32.xlu0 %v65
      %v69 = vpop.xlane.xlu0 %68
      %v70 = vrcp.pop 128.0
      %v71 = vmul.f32 128.0, %v70
      %v72 = vsub.f32 1.0, %v71
      %v73 = vmul.f32 %v70, %v72
      %v74 = vadd.f32 %v70, %v73
      %vm75 = vweird.f32 %v70
      %v76 = vsel %vm75, %v70, %v74
      %v77 = vmul.f32 %v67, %v76
      %v78 = vmul.f32 %v69, %v76
      %v79 = vsub.f32 %v64, %v77
      %v80 = vsub.f32 %v65, %v78
      %v81 = vmul.f32 %v79, %v79
      %v82 = vmul.f32 %v80, %v80
      %83 = vadd.xlane.f32.xlu0 %v81
      %v84 = vpop.xlane.xlu0 %83
      %85 = vadd.xlane.f32.xlu0 %v82
      %v86 = vpop.xlane.xlu0 %85
      %v87 = vmul.f32 %v84, %v76
      %v88 = vmul.f32 %v86, %v76
      %v89 = vadd.f32 %v87, 1e-05
      %v90 = vadd.f32 %v88, 1e-05
      %v91 = vrsqrt.pop %v89
      %v92 = vmul.f32 %v91, %v89
      %v93 = vmul.f32 %v92, %v91
      %v94 = vmul.f32 0.5, %v93
      %v95 = vsub.f32 1.5, %v94
      %v96 = vmul.f32 %v91, %v95
      %vm97 = vweird.f32 %v89
      %vm98 = vweird.f32 %v91
      %vm99 = vmor %vm97, %vm98
      %v100 = vsel %vm99, %v91, %v96
      %v101 = vrsqrt.pop %v90
      %v102 = vmul.f32 %v101, %v90
      %v103 = vmul.f32 %v102, %v101
      %v104 = vmul.f32 0.5, %v103
      %v105 = vsub.f32 1.5, %v104
      %v106 = vmul.f32 %v101, %v105
      %vm107 = vweird.f32 %v90
      %vm108 = vweird.f32 %v101
      %vm109 = vmor %vm107, %vm108
      %v110 = vsel %vm109, %v101, %v106
      %v111 = vmul.f32 %v79, %v100
      %v112 = vmul.f32 %v80, %v110
      %v113 = vld [vmem:[%s1] sm:$0x1]
      %v115 = vperm.slane %v113, 0
      %v117 = vmul.f32 %v111, %v115
      %v118 = vmul.f32 %v112, %v115
      %v119 = vld [vmem:[%s2] sm:$0x1]
      %v121 = vperm.slane %v119, 0
      %v123 = vadd.f32 %v117, %v121
      %v124 = vadd.f32 %v118, %v121
      %v125 = vpack.c.bf16 %v123, %v123
      %v126 = vpack.c.bf16 %v124, %v124
      %127 = vst [vmem:[#allocation2] sm:$0xf] %v125
      %128 = vst [vmem:[#allocation2 + $0x4] sm:$0xf] %v126
    $region41: #{_lambda_.26} parent=1 // pred_fallthru
      _
    %v129 = vld [vmem:[#allocation2] sm:$0xf]
    %v130 = vld [vmem:[#allocation2 + $0x4] sm:$0xf]
    %v131 = vld [vmem:[#allocation4] sm:$0xff]
    %v132 = vld [vmem:[#allocation4 + $0x8] sm:$0xff]
    %v133 = vld [vmem:[#allocation4 + $0x10] sm:$0xff]
    %v134 = vld [vmem:[#allocation4 + $0x18] sm:$0xff]
    %v135 = vld [vmem:[#allocation4 + $0x20] sm:$0xff]
    %v136 = vld [vmem:[#allocation4 + $0x28] sm:$0xff]
    %v137 = vld [vmem:[#allocation4 + $0x30] sm:$0xff]
    %v138 = vld [vmem:[#allocation4 + $0x38] sm:$0xff]
    %v139 = vld [vmem:[#allocation4 + $0x40] sm:$0xff]
    %v140 = vld [vmem:[#allocation4 + $0x48] sm:$0xff]
    %v141 = vld [vmem:[#allocation4 + $0x50] sm:$0xff]
    %v142 = vld [vmem:[#allocation4 + $0x58] sm:$0xff]
    %v143 = vld [vmem:[#allocation4 + $0x60] sm:$0xff]
    %v144 = vld [vmem:[#allocation4 + $0x68] sm:$0xff]
    %v145 = vld [vmem:[#allocation4 + $0x70] sm:$0xff]
    %v146 = vld [vmem:[#allocation4 + $0x78] sm:$0xff]
    %v147 = vld [vmem:[#allocation4 + $0x80] sm:$0xff]
    %v148 = vld [vmem:[#allocation4 + $0x88] sm:$0xff]
    %v149 = vld [vmem:[#allocation4 + $0x90] sm:$0xff]
    %v150 = vld [vmem:[#allocation4 + $0x98] sm:$0xff]
    %v151 = vld [vmem:[#allocation4 + $0xa0] sm:$0xff]
    %v152 = vld [vmem:[#allocation4 + $0xa8] sm:$0xff]
    %v153 = vld [vmem:[#allocation4 + $0xb0] sm:$0xff]
    %v154 = vld [vmem:[#allocation4 + $0xb8] sm:$0xff]
    %v155 = vld [vmem:[#allocation4 + $0xc0] sm:$0xff]
    %v156 = vld [vmem:[#allocation4 + $0xc8] sm:$0xff]
    %v157 = vld [vmem:[#allocation4 + $0xd0] sm:$0xff]
    %v158 = vld [vmem:[#allocation4 + $0xd8] sm:$0xff]
    %v159 = vld [vmem:[#allocation4 + $0xe0] sm:$0xff]
    %v160 = vld [vmem:[#allocation4 + $0xe8] sm:$0xff]
    %v161 = vld [vmem:[#allocation4 + $0xf0] sm:$0xff]
    %v162 = vld [vmem:[#allocation4 + $0xf8] sm:$0xff]
    %v163 = vld [vmem:[%s4] sm:$0xf]
    %v165 = vperm.slane %v163, 0
    %v166 = vperm.slane %v163, 1
    %v167 = vperm.slane %v163, 2
    %v168 = vperm.slane %v163, 3
    %v175 = vunpack.c.l.b16 %v129
    %v176 = vunpack.c.l.b16 %v130
    %v177 = vpack.c.b16 %v176, %v175
    %v211 = vunpack.c.l.b16 %v131
    %v212 = vunpack.c.h.b16 %v131
    %v213 = vunpack.c.l.b16 %v132
    %v214 = vunpack.c.h.b16 %v132
    %v215 = vunpack.c.l.b16 %v133
    %v216 = vunpack.c.h.b16 %v133
    %v217 = vunpack.c.l.b16 %v134
    %v218 = vunpack.c.h.b16 %v134
    %v219 = vunpack.c.l.b16 %v135
    %v220 = vunpack.c.h.b16 %v135
    %v221 = vunpack.c.l.b16 %v136
    %v222 = vunpack.c.h.b16 %v136
    %v223 = vunpack.c.l.b16 %v137
    %v224 = vunpack.c.h.b16 %v137
    %v225 = vunpack.c.l.b16 %v138
    %v226 = vunpack.c.h.b16 %v138
    %v227 = vunpack.c.l.b16 %v139
    %v228 = vunpack.c.h.b16 %v139
    %v229 = vunpack.c.l.b16 %v140
    %v230 = vunpack.c.h.b16 %v140
    %v231 = vunpack.c.l.b16 %v141
    %v232 = vunpack.c.h.b16 %v141
    %v233 = vunpack.c.l.b16 %v142
    %v234 = vunpack.c.h.b16 %v142
    %v235 = vunpack.c.l.b16 %v143
    %v236 = vunpack.c.h.b16 %v143
    %v237 = vunpack.c.l.b16 %v144
    %v238 = vunpack.c.h.b16 %v144
    %v239 = vunpack.c.l.b16 %v145
    %v240 = vunpack.c.h.b16 %v145
    %v241 = vunpack.c.l.b16 %v146
    %v242 = vunpack.c.h.b16 %v146
    %v243 = vunpack.c.l.b16 %v147
    %v244 = vunpack.c.h.b16 %v147
    %v245 = vunpack.c.l.b16 %v148
    %v246 = vunpack.c.h.b16 %v148
    %v247 = vunpack.c.l.b16 %v149
    %v248 = vunpack.c.h.b16 %v149
    %v249 = vunpack.c.l.b16 %v150
    %v250 = vunpack.c.h.b16 %v150
    %v251 = vunpack.c.l.b16 %v151
    %v252 = vunpack.c.h.b16 %v151
    %v253 = vunpack.c.l.b16 %v152
    %v254 = vunpack.c.h.b16 %v152
    %v255 = vunpack.c.l.b16 %v153
    %v256 = vunpack.c.h.b16 %v153
    %v257 = vunpack.c.l.b16 %v154
    %v258 = vunpack.c.h.b16 %v154
    %v259 = vunpack.c.l.b16 %v155
    %v260 = vunpack.c.h.b16 %v155
    %v261 = vunpack.c.l.b16 %v156
    %v262 = vunpack.c.h.b16 %v156
    %v263 = vunpack.c.l.b16 %v157
    %v264 = vunpack.c.h.b16 %v157
    %v265 = vunpack.c.l.b16 %v158
    %v266 = vunpack.c.h.b16 %v158
    %v267 = vunpack.c.l.b16 %v159
    %v268 = vunpack.c.h.b16 %v159
    %v269 = vunpack.c.l.b16 %v160
    %v270 = vunpack.c.h.b16 %v160
    %v271 = vunpack.c.l.b16 %v161
    %v272 = vunpack.c.h.b16 %v161
    %v273 = vunpack.c.l.b16 %v162
    %v274 = vunpack.c.h.b16 %v162
    %v275 = vpack.c.b16 %v215, %v211
    %v276 = vpack.c.b16 %v216, %v212
    %v277 = vpack.c.b16 %v217, %v213
    %v278 = vpack.c.b16 %v218, %v214
    %v279 = vpack.c.b16 %v223, %v219
    %v280 = vpack.c.b16 %v224, %v220
    %v281 = vpack.c.b16 %v225, %v221
    %v282 = vpack.c.b16 %v226, %v222
    %v283 = vpack.c.b16 %v231, %v227
    %v284 = vpack.c.b16 %v232, %v228
    %v285 = vpack.c.b16 %v233, %v229
    %v286 = vpack.c.b16 %v234, %v230
    %v287 = vpack.c.b16 %v239, %v235
    %v288 = vpack.c.b16 %v240, %v236
    %v289 = vpack.c.b16 %v241, %v237
    %v290 = vpack.c.b16 %v242, %v238
    %v291 = vpack.c.b16 %v247, %v243
    %v292 = vpack.c.b16 %v248, %v244
    %v293 = vpack.c.b16 %v249, %v245
    %v294 = vpack.c.b16 %v250, %v246
    %v295 = vpack.c.b16 %v255, %v251
    %v296 = vpack.c.b16 %v256, %v252
    %v297 = vpack.c.b16 %v257, %v253
    %v298 = vpack.c.b16 %v258, %v254
    %v299 = vpack.c.b16 %v263, %v259
    %v300 = vpack.c.b16 %v264, %v260
    %v301 = vpack.c.b16 %v265, %v261
    %v302 = vpack.c.b16 %v266, %v262
    %v303 = vpack.c.b16 %v271, %v267
    %v304 = vpack.c.b16 %v272, %v268
    %v305 = vpack.c.b16 %v273, %v269
    %v306 = vpack.c.b16 %v274, %v270
    %339 = vmatpush.bf16.msra.mxu0 %v303
    %340 = vmatpush.bf16.msra.mxu0 %v299
    %341 = vmatpush.bf16.msra.mxu0 %v295
    %342 = vmatpush.bf16.msra.mxu0 %v291
    %343 = vmatpush.bf16.msra.mxu0 %v287
    %344 = vmatpush.bf16.msra.mxu0 %v283
    %345 = vmatpush.bf16.msra.mxu0 %v279
    %346 = vmatpush.bf16.msra.mxu0 %v275
    %347 = vmatmul.bf16.gmra.mxu0 %v177
    %v348 = vpop.f32.mrf.mxu0
    %v349 = vadd.f32 %v165, %v348
    %v350 = vpop.f32.mrf.mxu0
    %v351 = vadd.f32 %v165, %v350
    %352 = vdwg.mxu0
    %353 = vmatpush.bf16.msra.mxu0 %v304
    %354 = vmatpush.bf16.msra.mxu0 %v300
    %355 = vmatpush.bf16.msra.mxu0 %v296
    %356 = vmatpush.bf16.msra.mxu0 %v292
    %357 = vmatpush.bf16.msra.mxu0 %v288
    %358 = vmatpush.bf16.msra.mxu0 %v284
    %359 = vmatpush.bf16.msra.mxu0 %v280
    %360 = vmatpush.bf16.msra.mxu0 %v276
    %361 = vmatmul.bf16.gmra.mxu0 %v177
    %v362 = vpop.f32.mrf.mxu0
    %v363 = vadd.f32 %v166, %v362
    %v364 = vpop.f32.mrf.mxu0
    %v365 = vadd.f32 %v166, %v364
    %366 = vdwg.mxu0
    %367 = vmatpush.bf16.msra.mxu0 %v305
    %368 = vmatpush.bf16.msra.mxu0 %v301
    %369 = vmatpush.bf16.msra.mxu0 %v297
    %370 = vmatpush.bf16.msra.mxu0 %v293
    %371 = vmatpush.bf16.msra.mxu0 %v289
    %372 = vmatpush.bf16.msra.mxu0 %v285
    %373 = vmatpush.bf16.msra.mxu0 %v281
    %374 = vmatpush.bf16.msra.mxu0 %v277
    %375 = vmatmul.bf16.gmra.mxu0 %v177
    %v376 = vpop.f32.mrf.mxu0
    %v377 = vadd.f32 %v167, %v376
    %v378 = vpop.f32.mrf.mxu0
    %v379 = vadd.f32 %v167, %v378
    %380 = vdwg.mxu0
    %381 = vmatpush.bf16.msra.mxu0 %v306
    %382 = vmatpush.bf16.msra.mxu0 %v302
    %383 = vmatpush.bf16.msra.mxu0 %v298
    %384 = vmatpush.bf16.msra.mxu0 %v294
    %385 = vmatpush.bf16.msra.mxu0 %v290
    %386 = vmatpush.bf16.msra.mxu0 %v286
    %387 = vmatpush.bf16.msra.mxu0 %v282
    %388 = vmatpush.bf16.msra.mxu0 %v278
    %389 = vmatmul.bf16.gmra.mxu0 %v177
    %v390 = vpop.f32.mrf.mxu0
    %v391 = vadd.f32 %v168, %v390
    %v392 = vpop.f32.mrf.mxu0
    %v393 = vadd.f32 %v168, %v392
    %394 = vdwg.mxu0
    %v395 = vmul.f32 %v349, 1.702
    %v396 = vmul.f32 %v363, 1.702
    %v397 = vmul.f32 %v377, 1.702
    %v398 = vmul.f32 %v391, 1.702
    %v399 = vmul.f32 %v351, 1.702
    %v400 = vmul.f32 %v365, 1.702
    %v401 = vmul.f32 %v379, 1.702
    %v402 = vmul.f32 %v393, 1.702
    %v403 = vxor.u32 %v395, 2147483648
    %v404 = vxor.u32 %v396, 2147483648
    %v405 = vxor.u32 %v397, 2147483648
    %v406 = vxor.u32 %v398, 2147483648
    %v407 = vxor.u32 %v399, 2147483648
    %v408 = vxor.u32 %v400, 2147483648
    %v409 = vxor.u32 %v401, 2147483648
    %v410 = vxor.u32 %v402, 2147483648
    %v411 = vmul.f32 %v403, 1.442695
    %v412 = vpow.pop %v411
    %v413 = vmul.f32 %v404, 1.442695
    %v414 = vpow.pop %v413
    %v415 = vmul.f32 %v405, 1.442695
    %v416 = vpow.pop %v415
    %v417 = vmul.f32 %v406, 1.442695
    %v418 = vpow.pop %v417
    %v419 = vmul.f32 %v407, 1.442695
    %v420 = vpow.pop %v419
    %v421 = vmul.f32 %v408, 1.442695
    %v422 = vpow.pop %v421
    %v423 = vmul.f32 %v409, 1.442695
    %v424 = vpow.pop %v423
    %v425 = vmul.f32 %v410, 1.442695
    %v426 = vpow.pop %v425
    %v427 = vadd.f32 %v412, 1.0
    %v428 = vadd.f32 %v414, 1.0
    %v429 = vadd.f32 %v416, 1.0
    %v430 = vadd.f32 %v418, 1.0
    %v431 = vadd.f32 %v420, 1.0
    %v432 = vadd.f32 %v422, 1.0
    %v433 = vadd.f32 %v424, 1.0
    %v434 = vadd.f32 %v426, 1.0
    %v435 = vrcp.pop %v427
    %v436 = vmul.f32 %v427, %v435
    %v437 = vsub.f32 1.0, %v436
    %v438 = vmul.f32 %v435, %v437
    %v439 = vadd.f32 %v435, %v438
    %vm440 = vweird.f32 %v427
    %vm441 = vweird.f32 %v435
    %vm442 = vmor %vm440, %vm441
    %v443 = vsel %vm442, %v435, %v439
    %v444 = vand.u32 2147483647, %v427
    %vm445 = vcmp.eq.f32.partialorder %v444, 8.507059e+37
    %v446 = vand.u32 %v427, 2147483648
    %v447 = vor.u32 1.1754944e-38, %v446
    %v448 = vsel %vm445, %v447, %v443
    %v449 = vmul.f32 1.0, %v448
    %v450 = vrcp.pop %v428
    %v451 = vmul.f32 %v428, %v450
    %v452 = vsub.f32 1.0, %v451
    %v453 = vmul.f32 %v450, %v452
    %v454 = vadd.f32 %v450, %v453
    %vm455 = vweird.f32 %v428
    %vm456 = vweird.f32 %v450
    %vm457 = vmor %vm455, %vm456
    %v458 = vsel %vm457, %v450, %v454
    %v459 = vand.u32 2147483647, %v428
    %vm460 = vcmp.eq.f32.partialorder %v459, 8.507059e+37
    %v461 = vand.u32 %v428, 2147483648
    %v462 = vor.u32 1.1754944e-38, %v461
    %v463 = vsel %vm460, %v462, %v458
    %v464 = vmul.f32 1.0, %v463
    %v465 = vrcp.pop %v429
    %v466 = vmul.f32 %v429, %v465
    %v467 = vsub.f32 1.0, %v466
    %v468 = vmul.f32 %v465, %v467
    %v469 = vadd.f32 %v465, %v468
    %vm470 = vweird.f32 %v429
    %vm471 = vweird.f32 %v465
    %vm472 = vmor %vm470, %vm471
    %v473 = vsel %vm472, %v465, %v469
    %v474 = vand.u32 2147483647, %v429
    %vm475 = vcmp.eq.f32.partialorder %v474, 8.507059e+37
    %v476 = vand.u32 %v429, 2147483648
    %v477 = vor.u32 1.1754944e-38, %v476
    %v478 = vsel %vm475, %v477, %v473
    %v479 = vmul.f32 1.0, %v478
    %v480 = vrcp.pop %v430
    %v481 = vmul.f32 %v430, %v480
    %v482 = vsub.f32 1.0, %v481
    %v483 = vmul.f32 %v480, %v482
    %v484 = vadd.f32 %v480, %v483
    %vm485 = vweird.f32 %v430
    %vm486 = vweird.f32 %v480
    %vm487 = vmor %vm485, %vm486
    %v488 = vsel %vm487, %v480, %v484
    %v489 = vand.u32 2147483647, %v430
    %vm490 = vcmp.eq.f32.partialorder %v489, 8.507059e+37
    %v491 = vand.u32 %v430, 2147483648
    %v492 = vor.u32 1.1754944e-38, %v491
    %v493 = vsel %vm490, %v492, %v488
    %v494 = vmul.f32 1.0, %v493
    %v495 = vrcp.pop %v431
    %v496 = vmul.f32 %v431, %v495
    %v497 = vsub.f32 1.0, %v496
    %v498 = vmul.f32 %v495, %v497
    %v499 = vadd.f32 %v495, %v498
    %vm500 = vweird.f32 %v431
    %vm501 = vweird.f32 %v495
    %vm502 = vmor %vm500, %vm501
    %v503 = vsel %vm502, %v495, %v499
    %v504 = vand.u32 2147483647, %v431
    %vm505 = vcmp.eq.f32.partialorder %v504, 8.507059e+37
    %v506 = vand.u32 %v431, 2147483648
    %v507 = vor.u32 1.1754944e-38, %v506
    %v508 = vsel %vm505, %v507, %v503
    %v509 = vmul.f32 1.0, %v508
    %v510 = vrcp.pop %v432
    %v511 = vmul.f32 %v432, %v510
    %v512 = vsub.f32 1.0, %v511
    %v513 = vmul.f32 %v510, %v512
    %v514 = vadd.f32 %v510, %v513
    %vm515 = vweird.f32 %v432
    %vm516 = vweird.f32 %v510
    %vm517 = vmor %vm515, %vm516
    %v518 = vsel %vm517, %v510, %v514
    %v519 = vand.u32 2147483647, %v432
    %vm520 = vcmp.eq.f32.partialorder %v519, 8.507059e+37
    %v521 = vand.u32 %v432, 2147483648
    %v522 = vor.u32 1.1754944e-38, %v521
    %v523 = vsel %vm520, %v522, %v518
    %v524 = vmul.f32 1.0, %v523
    %v525 = vrcp.pop %v433
    %v526 = vmul.f32 %v433, %v525
    %v527 = vsub.f32 1.0, %v526
    %v528 = vmul.f32 %v525, %v527
    %v529 = vadd.f32 %v525, %v528
    %vm530 = vweird.f32 %v433
    %vm531 = vweird.f32 %v525
    %vm532 = vmor %vm530, %vm531
    %v533 = vsel %vm532, %v525, %v529
    %v534 = vand.u32 2147483647, %v433
    %vm535 = vcmp.eq.f32.partialorder %v534, 8.507059e+37
    %v536 = vand.u32 %v433, 2147483648
    %v537 = vor.u32 1.1754944e-38, %v536
    %v538 = vsel %vm535, %v537, %v533
    %v539 = vmul.f32 1.0, %v538
    %v540 = vrcp.pop %v434
    %v541 = vmul.f32 %v434, %v540
    %v542 = vsub.f32 1.0, %v541
    %v543 = vmul.f32 %v540, %v542
    %v544 = vadd.f32 %v540, %v543
    %vm545 = vweird.f32 %v434
    %vm546 = vweird.f32 %v540
    %vm547 = vmor %vm545, %vm546
    %v548 = vsel %vm547, %v540, %v544
    %v549 = vand.u32 2147483647, %v434
    %vm550 = vcmp.eq.f32.partialorder %v549, 8.507059e+37
    %v551 = vand.u32 %v434, 2147483648
    %v552 = vor.u32 1.1754944e-38, %v551
    %v553 = vsel %vm550, %v552, %v548
    %v554 = vmul.f32 1.0, %v553
    %v555 = vmul.f32 %v349, %v449
    %v556 = vmul.f32 %v363, %v464
    %v557 = vmul.f32 %v377, %v479
    %v558 = vmul.f32 %v391, %v494
    %v559 = vmul.f32 %v351, %v509
    %v560 = vmul.f32 %v365, %v524
    %v561 = vmul.f32 %v379, %v539
    %v562 = vmul.f32 %v393, %v554
    %v563 = vld [vmem:[#allocation3] sm:$0xff]
    %v564 = vld [vmem:[#allocation3 + $0x8] sm:$0xff]
    %v565 = vpack.c.bf16 %v559, %v555
    %v566 = vpack.c.bf16 %v560, %v556
    %v567 = vpack.c.bf16 %v561, %v557
    %v568 = vpack.c.bf16 %v562, %v558
    %v569 = vld [vmem:[#allocation6] sm:$0xf]
    %v570 = vld [vmem:[#allocation6 + $0x4] sm:$0xf]
    %v571 = vld [vmem:[#allocation6 + $0x8] sm:$0xf]
    %v572 = vld [vmem:[#allocation6 + $0xc] sm:$0xf]
    %v573 = vld [vmem:[#allocation6 + $0x10] sm:$0xf]
    %v574 = vld [vmem:[#allocation6 + $0x14] sm:$0xf]
    %v575 = vld [vmem:[#allocation6 + $0x18] sm:$0xf]
    %v576 = vld [vmem:[#allocation6 + $0x1c] sm:$0xf]
    %v577 = vld [vmem:[#allocation6 + $0x20] sm:$0xf]
    %v578 = vld [vmem:[#allocation6 + $0x24] sm:$0xf]
    %v579 = vld [vmem:[#allocation6 + $0x28] sm:$0xf]
    %v580 = vld [vmem:[#allocation6 + $0x2c] sm:$0xf]
    %v581 = vld [vmem:[#allocation6 + $0x30] sm:$0xf]
    %v582 = vld [vmem:[#allocation6 + $0x34] sm:$0xf]
    %v583 = vld [vmem:[#allocation6 + $0x38] sm:$0xf]
    %v584 = vld [vmem:[#allocation6 + $0x3c] sm:$0xf]
    %v585 = vld [vmem:[#allocation6 + $0x40] sm:$0xf]
    %v586 = vld [vmem:[#allocation6 + $0x44] sm:$0xf]
    %v587 = vld [vmem:[#allocation6 + $0x48] sm:$0xf]
    %v588 = vld [vmem:[#allocation6 + $0x4c] sm:$0xf]
    %v589 = vld [vmem:[#allocation6 + $0x50] sm:$0xf]
    %v590 = vld [vmem:[#allocation6 + $0x54] sm:$0xf]
    %v591 = vld [vmem:[#allocation6 + $0x58] sm:$0xf]
    %v592 = vld [vmem:[#allocation6 + $0x5c] sm:$0xf]
    %v593 = vld [vmem:[#allocation6 + $0x60] sm:$0xf]
    %v594 = vld [vmem:[#allocation6 + $0x64] sm:$0xf]
    %v595 = vld [vmem:[#allocation6 + $0x68] sm:$0xf]
    %v596 = vld [vmem:[#allocation6 + $0x6c] sm:$0xf]
    %v597 = vld [vmem:[#allocation6 + $0x70] sm:$0xf]
    %v598 = vld [vmem:[#allocation6 + $0x74] sm:$0xf]
    %v599 = vld [vmem:[#allocation6 + $0x78] sm:$0xf]
    %v600 = vld [vmem:[#allocation6 + $0x7c] sm:$0xf]
    %v601 = vld [vmem:[#allocation6 + $0x80] sm:$0xf]
    %v602 = vld [vmem:[#allocation6 + $0x84] sm:$0xf]
    %v603 = vld [vmem:[#allocation6 + $0x88] sm:$0xf]
    %v604 = vld [vmem:[#allocation6 + $0x8c] sm:$0xf]
    %v605 = vld [vmem:[#allocation6 + $0x90] sm:$0xf]
    %v606 = vld [vmem:[#allocation6 + $0x94] sm:$0xf]
    %v607 = vld [vmem:[#allocation6 + $0x98] sm:$0xf]
    %v608 = vld [vmem:[#allocation6 + $0x9c] sm:$0xf]
    %v609 = vld [vmem:[#allocation6 + $0xa0] sm:$0xf]
    %v610 = vld [vmem:[#allocation6 + $0xa4] sm:$0xf]
    %v611 = vld [vmem:[#allocation6 + $0xa8] sm:$0xf]
    %v612 = vld [vmem:[#allocation6 + $0xac] sm:$0xf]
    %v613 = vld [vmem:[#allocation6 + $0xb0] sm:$0xf]
    %v614 = vld [vmem:[#allocation6 + $0xb4] sm:$0xf]
    %v615 = vld [vmem:[#allocation6 + $0xb8] sm:$0xf]
    %v616 = vld [vmem:[#allocation6 + $0xbc] sm:$0xf]
    %v617 = vld [vmem:[#allocation6 + $0xc0] sm:$0xf]
    %v618 = vld [vmem:[#allocation6 + $0xc4] sm:$0xf]
    %v619 = vld [vmem:[#allocation6 + $0xc8] sm:$0xf]
    %v620 = vld [vmem:[#allocation6 + $0xcc] sm:$0xf]
    %v621 = vld [vmem:[#allocation6 + $0xd0] sm:$0xf]
    %v622 = vld [vmem:[#allocation6 + $0xd4] sm:$0xf]
    %v623 = vld [vmem:[#allocation6 + $0xd8] sm:$0xf]
    %v624 = vld [vmem:[#allocation6 + $0xdc] sm:$0xf]
    %v625 = vld [vmem:[#allocation6 + $0xe0] sm:$0xf]
    %v626 = vld [vmem:[#allocation6 + $0xe4] sm:$0xf]
    %v627 = vld [vmem:[#allocation6 + $0xe8] sm:$0xf]
    %v628 = vld [vmem:[#allocation6 + $0xec] sm:$0xf]
    %v629 = vld [vmem:[#allocation6 + $0xf0] sm:$0xf]
    %v630 = vld [vmem:[#allocation6 + $0xf4] sm:$0xf]
    %v631 = vld [vmem:[#allocation6 + $0xf8] sm:$0xf]
    %v632 = vld [vmem:[#allocation6 + $0xfc] sm:$0xf]
    %v697 = vunpack.c.l.b16 %v569
    %v698 = vunpack.c.l.b16 %v570
    %v699 = vunpack.c.l.b16 %v571
    %v700 = vunpack.c.l.b16 %v572
    %v701 = vunpack.c.l.b16 %v573
    %v702 = vunpack.c.l.b16 %v574
    %v703 = vunpack.c.l.b16 %v575
    %v704 = vunpack.c.l.b16 %v576
    %v705 = vunpack.c.l.b16 %v577
    %v706 = vunpack.c.l.b16 %v578
    %v707 = vunpack.c.l.b16 %v579
    %v708 = vunpack.c.l.b16 %v580
    %v709 = vunpack.c.l.b16 %v581
    %v710 = vunpack.c.l.b16 %v582
    %v711 = vunpack.c.l.b16 %v583
    %v712 = vunpack.c.l.b16 %v584
    %v713 = vunpack.c.l.b16 %v585
    %v714 = vunpack.c.l.b16 %v586
    %v715 = vunpack.c.l.b16 %v587
    %v716 = vunpack.c.l.b16 %v588
    %v717 = vunpack.c.l.b16 %v589
    %v718 = vunpack.c.l.b16 %v590
    %v719 = vunpack.c.l.b16 %v591
    %v720 = vunpack.c.l.b16 %v592
    %v721 = vunpack.c.l.b16 %v593
    %v722 = vunpack.c.l.b16 %v594
    %v723 = vunpack.c.l.b16 %v595
    %v724 = vunpack.c.l.b16 %v596
    %v725 = vunpack.c.l.b16 %v597
    %v726 = vunpack.c.l.b16 %v598
    %v727 = vunpack.c.l.b16 %v599
    %v728 = vunpack.c.l.b16 %v600
    %v729 = vunpack.c.l.b16 %v601
    %v730 = vunpack.c.l.b16 %v602
    %v731 = vunpack.c.l.b16 %v603
    %v732 = vunpack.c.l.b16 %v604
    %v733 = vunpack.c.l.b16 %v605
    %v734 = vunpack.c.l.b16 %v606
    %v735 = vunpack.c.l.b16 %v607
    %v736 = vunpack.c.l.b16 %v608
    %v737 = vunpack.c.l.b16 %v609
    %v738 = vunpack.c.l.b16 %v610
    %v739 = vunpack.c.l.b16 %v611
    %v740 = vunpack.c.l.b16 %v612
    %v741 = vunpack.c.l.b16 %v613
    %v742 = vunpack.c.l.b16 %v614
    %v743 = vunpack.c.l.b16 %v615
    %v744 = vunpack.c.l.b16 %v616
    %v745 = vunpack.c.l.b16 %v617
    %v746 = vunpack.c.l.b16 %v618
    %v747 = vunpack.c.l.b16 %v619
    %v748 = vunpack.c.l.b16 %v620
    %v749 = vunpack.c.l.b16 %v621
    %v750 = vunpack.c.l.b16 %v622
    %v751 = vunpack.c.l.b16 %v623
    %v752 = vunpack.c.l.b16 %v624
    %v753 = vunpack.c.l.b16 %v625
    %v754 = vunpack.c.l.b16 %v626
    %v755 = vunpack.c.l.b16 %v627
    %v756 = vunpack.c.l.b16 %v628
    %v757 = vunpack.c.l.b16 %v629
    %v758 = vunpack.c.l.b16 %v630
    %v759 = vunpack.c.l.b16 %v631
    %v760 = vunpack.c.l.b16 %v632
    %v761 = vpack.c.b16 %v698, %v697
    %v762 = vpack.c.b16 %v700, %v699
    %v763 = vpack.c.b16 %v702, %v701
    %v764 = vpack.c.b16 %v704, %v703
    %v765 = vpack.c.b16 %v706, %v705
    %v766 = vpack.c.b16 %v708, %v707
    %v767 = vpack.c.b16 %v710, %v709
    %v768 = vpack.c.b16 %v712, %v711
    %v769 = vpack.c.b16 %v714, %v713
    %v770 = vpack.c.b16 %v716, %v715
    %v771 = vpack.c.b16 %v718, %v717
    %v772 = vpack.c.b16 %v720, %v719
    %v773 = vpack.c.b16 %v722, %v721
    %v774 = vpack.c.b16 %v724, %v723
    %v775 = vpack.c.b16 %v726, %v725
    %v776 = vpack.c.b16 %v728, %v727
    %v777 = vpack.c.b16 %v730, %v729
    %v778 = vpack.c.b16 %v732, %v731
    %v779 = vpack.c.b16 %v734, %v733
    %v780 = vpack.c.b16 %v736, %v735
    %v781 = vpack.c.b16 %v738, %v737
    %v782 = vpack.c.b16 %v740, %v739
    %v783 = vpack.c.b16 %v742, %v741
    %v784 = vpack.c.b16 %v744, %v743
    %v785 = vpack.c.b16 %v746, %v745
    %v786 = vpack.c.b16 %v748, %v747
    %v787 = vpack.c.b16 %v750, %v749
    %v788 = vpack.c.b16 %v752, %v751
    %v789 = vpack.c.b16 %v754, %v753
    %v790 = vpack.c.b16 %v756, %v755
    %v791 = vpack.c.b16 %v758, %v757
    %v792 = vpack.c.b16 %v760, %v759
    %825 = vmatpush.bf16.msra.mxu0 %v768
    %826 = vmatpush.bf16.msra.mxu0 %v767
    %827 = vmatpush.bf16.msra.mxu0 %v766
    %828 = vmatpush.bf16.msra.mxu0 %v765
    %829 = vmatpush.bf16.msra.mxu0 %v764
    %830 = vmatpush.bf16.msra.mxu0 %v763
    %831 = vmatpush.bf16.msra.mxu0 %v762
    %832 = vmatpush.bf16.msra.mxu0 %v761
    %833 = vmatmul.bf16.gmra.mxu0 %v565
    %v834 = vpop.f32.mrf.mxu0
    %v835 = vadd.f32 0.0, %v834
    %v836 = vpop.f32.mrf.mxu0
    %v837 = vadd.f32 0.0, %v836
    %838 = vdwg.mxu0
    %839 = vmatpush.bf16.msra.mxu0 %v776
    %840 = vmatpush.bf16.msra.mxu0 %v775
    %841 = vmatpush.bf16.msra.mxu0 %v774
    %842 = vmatpush.bf16.msra.mxu0 %v773
    %843 = vmatpush.bf16.msra.mxu0 %v772
    %844 = vmatpush.bf16.msra.mxu0 %v771
    %845 = vmatpush.bf16.msra.mxu0 %v770
    %846 = vmatpush.bf16.msra.mxu0 %v769
    %847 = vmatmul.bf16.gmra.mxu0 %v566
    %v848 = vpop.f32.mrf.mxu0
    %v849 = vadd.f32 %v835, %v848
    %v850 = vpop.f32.mrf.mxu0
    %v851 = vadd.f32 %v837, %v850
    %852 = vdwg.mxu0
    %853 = vmatpush.bf16.msra.mxu0 %v784
    %854 = vmatpush.bf16.msra.mxu0 %v783
    %855 = vmatpush.bf16.msra.mxu0 %v782
    %856 = vmatpush.bf16.msra.mxu0 %v781
    %857 = vmatpush.bf16.msra.mxu0 %v780
    %858 = vmatpush.bf16.msra.mxu0 %v779
    %859 = vmatpush.bf16.msra.mxu0 %v778
    %860 = vmatpush.bf16.msra.mxu0 %v777
    %861 = vmatmul.bf16.gmra.mxu0 %v567
    %v862 = vpop.f32.mrf.mxu0
    %v863 = vadd.f32 %v849, %v862
    %v864 = vpop.f32.mrf.mxu0
    %v865 = vadd.f32 %v851, %v864
    %866 = vdwg.mxu0
    %867 = vmatpush.bf16.msra.mxu0 %v792
    %868 = vmatpush.bf16.msra.mxu0 %v791
    %869 = vmatpush.bf16.msra.mxu0 %v790
    %870 = vmatpush.bf16.msra.mxu0 %v789
    %871 = vmatpush.bf16.msra.mxu0 %v788
    %872 = vmatpush.bf16.msra.mxu0 %v787
    %873 = vmatpush.bf16.msra.mxu0 %v786
    %874 = vmatpush.bf16.msra.mxu0 %v785
    %875 = vmatmul.bf16.gmra.mxu0 %v568
    %v876 = vpop.f32.mrf.mxu0
    %v877 = vadd.f32 %v863, %v876
    %v878 = vpop.f32.mrf.mxu0
    %v879 = vadd.f32 %v865, %v878
    %880 = vdwg.mxu0
    %v881 = vadd.f32 %v563, %v877
    %v882 = vadd.f32 %v564, %v879
    %883 = vst [vmem:[#allocation3] sm:$0xff] %v881
    %884 = vst [vmem:[#allocation3 + $0x8] sm:$0xff] %v882
    // Predicated region
    $region42: #{_lambda_.26} parent=1 // pred_check
      %p885 = pneg %p58
    $region43: #{_lambda_.26} parent=1 // pred_check_branch
      %887 = sbr.rel (%p885) target = $region45
    $region44: #{_lambda_.26} parent=1 // pred_region
      %v888 = vld [vmem:[#allocation3] sm:$0xff]
      %v889 = vld [vmem:[#allocation3 + $0x8] sm:$0xff]
      %v890 = vld [vmem:[%s6] sm:$0x1]
      %v892 = vperm.slane %v890, 0
      %v894 = vadd.f32 %v888, %v892
      %v895 = vadd.f32 %v889, %v892
      %896 = vst [vmem:[%s7] sm:$0xff] %v894
      %897 = vst [vmem:[%s7 + $0x8] sm:$0xff] %v895
    $region45: #{_lambda_.26} parent=1 // pred_fallthru
      _
    // Predicated region
    $region46: #{_lambda_.26} parent=1 // pred_check
      _
    $region47: #{_lambda_.26} parent=1 // pred_check_branch
      %899 = sbr.rel (0) target = $region49
    $region48: #{_lambda_.26} parent=1 // pred_region
      _
    $region49: #{_lambda_.26} parent=1 // pred_fallthru
      _
    // Predicated region
    $region50: #{_lambda_.26} parent=1 // pred_check
      _
    $region51: #{_lambda_.26} parent=1 // pred_check_branch
      %901 = sbr.rel (0) target = $region53
    $region52: #{_lambda_.26} parent=1 // pred_region
      _
    $region53: #{_lambda_.26} parent=1 // pred_fallthru
      _
    %902 = vsyncpa [#allocation5], 1
    %903 = vsyncpa [#allocation7], 1

// kernel: _lambda_.32
$region0: #{_lambda_.32}
  #allocation0 [shape = 'u32[]', space=smem, size = 0x4, offset = 0x4, fixed_abs, tag = 'smem constant byte address 0x4 - core index']
  #allocation1 [shape = 'u32[72,128]{1,0:T(1,128)}', space=vmem, size = 0x9000, scoped, tag = 'internal scratch']
  #allocation2 [shape = 'bf16[16,128]{1,0:T(8,128)(2,1)}', space=vmem, size = 0x1000, scoped, tag = 'scratch operand']
  %s0 = inlined_call_operand.vmem [shape: f32[16,128], index: 0, kind: input, shape index: {}]
  %s1 = inlined_call_operand.vmem [shape: f32[1,128], index: 1, kind: input, shape index: {}]
  %s2 = inlined_call_operand.vmem [shape: f32[1,128], index: 2, kind: input, shape index: {}]
  %s3 = inlined_call_operand.vmem [shape: bf16[128,384], index: 3, kind: input, shape index: {}]
  %s4 = inlined_call_operand.vmem [shape: f32[1,384], index: 4, kind: input, shape index: {}]
  %s5 = inlined_call_operand.vmem [shape: bf16[16,384], index: 5, kind: output, shape index: {}]
  %s6 = sld [smem:[#allocation0]]
  $region34: #{_lambda_.32} parent=0
    _
  %s8 = ssub.s32 1, %s6
  %s9 = scalar_select 0, %s8, %s6
  // Predicated region
  $region2: #{_lambda_.32} parent=0 // pred_check
    _
  $region3: #{_lambda_.32} parent=0 // pred_check_branch
    %11 = sbr.rel (0) target = $region5
  $region4: #{_lambda_.32} parent=0 // pred_region
    _
  $region5: #{_lambda_.32} parent=0 // pred_fallthru
    _
  // Predicated region
  $region6: #{_lambda_.32} parent=0 // pred_check
    _
  $region7: #{_lambda_.32} parent=0 // pred_check_branch
    %13 = sbr.rel (0) target = $region9
  $region8: #{_lambda_.32} parent=0 // pred_region
    _
  $region9: #{_lambda_.32} parent=0 // pred_fallthru
    _
  // Predicated region
  $region10: #{_lambda_.32} parent=0 // pred_check
    _
  $region11: #{_lambda_.32} parent=0 // pred_check_branch
    %15 = sbr.rel (0) target = $region13
  $region12: #{_lambda_.32} parent=0 // pred_region
    _
  $region13: #{_lambda_.32} parent=0 // pred_fallthru
    _
  // Predicated region
  $region14: #{_lambda_.32} parent=0 // pred_check
    _
  $region15: #{_lambda_.32} parent=0 // pred_check_branch
    %17 = sbr.rel (0) target = $region17
  $region16: #{_lambda_.32} parent=0 // pred_region
    _
  $region17: #{_lambda_.32} parent=0 // pred_fallthru
    _
  // Predicated region
  $region18: #{_lambda_.32} parent=0 // pred_check
    _
  $region19: #{_lambda_.32} parent=0 // pred_check_branch
    %19 = sbr.rel (0) target = $region21
  $region20: #{_lambda_.32} parent=0 // pred_region
    _
  $region21: #{_lambda_.32} parent=0 // pred_fallthru
    _
  %p20 = scmp.eq.s32.totalorder 0, 0
  // Predicated region
  $region22: #{_lambda_.32} parent=0 // pred_check
    %p21 = pneg %p20
  $region23: #{_lambda_.32} parent=0 // pred_check_branch
    %23 = sbr.rel (%p21) target = $region25
  $region24: #{_lambda_.32} parent=0 // pred_region
    %v24 = vld [vmem:[%s0] sm:$0xff]
    %v25 = vld [vmem:[%s0 + $0x8] sm:$0xff]
    %26 = vadd.xlane.f32.xlu0 %v24
    %v27 = vpop.xlane.xlu0 %26
    %28 = vadd.xlane.f32.xlu0 %v25
    %v29 = vpop.xlane.xlu0 %28
    %v30 = vrcp.pop 128.0
    %v31 = vmul.f32 128.0, %v30
    %v32 = vsub.f32 1.0, %v31
    %v33 = vmul.f32 %v30, %v32
    %v34 = vadd.f32 %v30, %v33
    %vm35 = vweird.f32 %v30
    %v36 = vsel %vm35, %v30, %v34
    %v37 = vmul.f32 %v27, %v36
    %v38 = vmul.f32 %v29, %v36
    %v39 = vsub.f32 %v24, %v37
    %v40 = vsub.f32 %v25, %v38
    %v41 = vmul.f32 %v39, %v39
    %v42 = vmul.f32 %v40, %v40
    %43 = vadd.xlane.f32.xlu0 %v41
    %v44 = vpop.xlane.xlu0 %43
    %45 = vadd.xlane.f32.xlu0 %v42
    %v46 = vpop.xlane.xlu0 %45
    %v47 = vmul.f32 %v44, %v36
    %v48 = vmul.f32 %v46, %v36
    %v49 = vadd.f32 %v47, 1e-05
    %v50 = vadd.f32 %v48, 1e-05
    %v51 = vrsqrt.pop %v49
    %v52 = vmul.f32 %v51, %v49
    %v53 = vmul.f32 %v52, %v51
    %v54 = vmul.f32 0.5, %v53
    %v55 = vsub.f32 1.5, %v54
    %v56 = vmul.f32 %v51, %v55
    %vm57 = vweird.f32 %v49
    %vm58 = vweird.f32 %v51
    %vm59 = vmor %vm57, %vm58
    %v60 = vsel %vm59, %v51, %v56
    %v61 = vrsqrt.pop %v50
    %v62 = vmul.f32 %v61, %v50
    %v63 = vmul.f32 %v62, %v61
    %v64 = vmul.f32 0.5, %v63
    %v65 = vsub.f32 1.5, %v64
    %v66 = vmul.f32 %v61, %v65
    %vm67 = vweird.f32 %v50
    %vm68 = vweird.f32 %v61
    %vm69 = vmor %vm67, %vm68
    %v70 = vsel %vm69, %v61, %v66
    %v71 = vmul.f32 %v39, %v60
    %v72 = vmul.f32 %v40, %v70
    %v73 = vld [vmem:[%s1] sm:$0x1]
    %v75 = vperm.slane %v73, 0
    %v77 = vmul.f32 %v71, %v75
    %v78 = vmul.f32 %v72, %v75
    %v79 = vld [vmem:[%s2] sm:$0x1]
    %v81 = vperm.slane %v79, 0
    %v83 = vadd.f32 %v77, %v81
    %v84 = vadd.f32 %v78, %v81
    %v85 = vpack.c.bf16 %v83, %v83
    %v86 = vpack.c.bf16 %v84, %v84
    %87 = vst [vmem:[#allocation2] sm:$0xf] %v85
    %88 = vst [vmem:[#allocation2 + $0x4] sm:$0xf] %v86
  $region25: #{_lambda_.32} parent=0 // pred_fallthru
    _
  %v89 = vld [vmem:[#allocation2] sm:$0xf]
  %v90 = vld [vmem:[#allocation2 + $0x4] sm:$0xf]
  %v91 = vld [vmem:[%s3] sm:$0xff]
  %v92 = vld [vmem:[%s3 + $0x8] sm:$0xf]
  %v93 = vld [vmem:[%s3 + $0xc] sm:$0xff]
  %v94 = vld [vmem:[%s3 + $0x14] sm:$0xf]
  %v95 = vld [vmem:[%s3 + $0x18] sm:$0xff]
  %v96 = vld [vmem:[%s3 + $0x20] sm:$0xf]
  %v97 = vld [vmem:[%s3 + $0x24] sm:$0xff]
  %v98 = vld [vmem:[%s3 + $0x2c] sm:$0xf]
  %v99 = vld [vmem:[%s3 + $0x30] sm:$0xff]
  %v100 = vld [vmem:[%s3 + $0x38] sm:$0xf]
  %v101 = vld [vmem:[%s3 + $0x3c] sm:$0xff]
  %v102 = vld [vmem:[%s3 + $0x44] sm:$0xf]
  %v103 = vld [vmem:[%s3 + $0x48] sm:$0xff]
  %v104 = vld [vmem:[%s3 + $0x50] sm:$0xf]
  %v105 = vld [vmem:[%s3 + $0x54] sm:$0xff]
  %v106 = vld [vmem:[%s3 + $0x5c] sm:$0xf]
  %v107 = vld [vmem:[%s3 + $0x60] sm:$0xff]
  %v108 = vld [vmem:[%s3 + $0x68] sm:$0xf]
  %v109 = vld [vmem:[%s3 + $0x6c] sm:$0xff]
  %v110 = vld [vmem:[%s3 + $0x74] sm:$0xf]
  %v111 = vld [vmem:[%s3 + $0x78] sm:$0xff]
  %v112 = vld [vmem:[%s3 + $0x80] sm:$0xf]
  %v113 = vld [vmem:[%s3 + $0x84] sm:$0xff]
  %v114 = vld [vmem:[%s3 + $0x8c] sm:$0xf]
  %v115 = vld [vmem:[%s3 + $0x90] sm:$0xff]
  %v116 = vld [vmem:[%s3 + $0x98] sm:$0xf]
  %v117 = vld [vmem:[%s3 + $0x9c] sm:$0xff]
  %v118 = vld [vmem:[%s3 + $0xa4] sm:$0xf]
  %v119 = vld [vmem:[%s3 + $0xa8] sm:$0xff]
  %v120 = vld [vmem:[%s3 + $0xb0] sm:$0xf]
  %v121 = vld [vmem:[%s3 + $0xb4] sm:$0xff]
  %v122 = vld [vmem:[%s3 + $0xbc] sm:$0xf]
  %v123 = vld [vmem:[%s4] sm:$0x7]
  %v125 = vperm.slane %v123, 0
  %v126 = vperm.slane %v123, 1
  %v127 = vperm.slane %v123, 2
  %v133 = vunpack.c.l.b16 %v89
  %v134 = vunpack.c.l.b16 %v90
  %v135 = vpack.c.b16 %v134, %v133
  %v169 = vunpack.c.l.b16 %v91
  %v170 = vunpack.c.h.b16 %v91
  %v171 = vunpack.c.l.b16 %v92
  %v172 = vunpack.c.l.b16 %v93
  %v173 = vunpack.c.h.b16 %v93
  %v174 = vunpack.c.l.b16 %v94
  %v175 = vunpack.c.l.b16 %v95
  %v176 = vunpack.c.h.b16 %v95
  %v177 = vunpack.c.l.b16 %v96
  %v178 = vunpack.c.l.b16 %v97
  %v179 = vunpack.c.h.b16 %v97
  %v180 = vunpack.c.l.b16 %v98
  %v181 = vunpack.c.l.b16 %v99
  %v182 = vunpack.c.h.b16 %v99
  %v183 = vunpack.c.l.b16 %v100
  %v184 = vunpack.c.l.b16 %v101
  %v185 = vunpack.c.h.b16 %v101
  %v186 = vunpack.c.l.b16 %v102
  %v187 = vunpack.c.l.b16 %v103
  %v188 = vunpack.c.h.b16 %v103
  %v189 = vunpack.c.l.b16 %v104
  %v190 = vunpack.c.l.b16 %v105
  %v191 = vunpack.c.h.b16 %v105
  %v192 = vunpack.c.l.b16 %v106
  %v193 = vunpack.c.l.b16 %v107
  %v194 = vunpack.c.h.b16 %v107
  %v195 = vunpack.c.l.b16 %v108
  %v196 = vunpack.c.l.b16 %v109
  %v197 = vunpack.c.h.b16 %v109
  %v198 = vunpack.c.l.b16 %v110
  %v199 = vunpack.c.l.b16 %v111
  %v200 = vunpack.c.h.b16 %v111
  %v201 = vunpack.c.l.b16 %v112
  %v202 = vunpack.c.l.b16 %v113
  %v203 = vunpack.c.h.b16 %v113
  %v204 = vunpack.c.l.b16 %v114
  %v205 = vunpack.c.l.b16 %v115
  %v206 = vunpack.c.h.b16 %v115
  %v207 = vunpack.c.l.b16 %v116
  %v208 = vunpack.c.l.b16 %v117
  %v209 = vunpack.c.h.b16 %v117
  %v210 = vunpack.c.l.b16 %v118
  %v211 = vunpack.c.l.b16 %v119
  %v212 = vunpack.c.h.b16 %v119
  %v213 = vunpack.c.l.b16 %v120
  %v214 = vunpack.c.l.b16 %v121
  %v215 = vunpack.c.h.b16 %v121
  %v216 = vunpack.c.l.b16 %v122
  %v217 = vpack.c.b16 %v172, %v169
  %v218 = vpack.c.b16 %v173, %v170
  %v219 = vpack.c.b16 %v174, %v171
  %v220 = vpack.c.b16 %v178, %v175
  %v221 = vpack.c.b16 %v179, %v176
  %v222 = vpack.c.b16 %v180, %v177
  %v223 = vpack.c.b16 %v184, %v181
  %v224 = vpack.c.b16 %v185, %v182
  %v225 = vpack.c.b16 %v186, %v183
  %v226 = vpack.c.b16 %v190, %v187
  %v227 = vpack.c.b16 %v191, %v188
  %v228 = vpack.c.b16 %v192, %v189
  %v229 = vpack.c.b16 %v196, %v193
  %v230 = vpack.c.b16 %v197, %v194
  %v231 = vpack.c.b16 %v198, %v195
  %v232 = vpack.c.b16 %v202, %v199
  %v233 = vpack.c.b16 %v203, %v200
  %v234 = vpack.c.b16 %v204, %v201
  %v235 = vpack.c.b16 %v208, %v205
  %v236 = vpack.c.b16 %v209, %v206
  %v237 = vpack.c.b16 %v210, %v207
  %v238 = vpack.c.b16 %v214, %v211
  %v239 = vpack.c.b16 %v215, %v212
  %v240 = vpack.c.b16 %v216, %v213
  %265 = vmatpush.bf16.msra.mxu0 %v238
  %266 = vmatpush.bf16.msra.mxu0 %v235
  %267 = vmatpush.bf16.msra.mxu0 %v232
  %268 = vmatpush.bf16.msra.mxu0 %v229
  %269 = vmatpush.bf16.msra.mxu0 %v226
  %270 = vmatpush.bf16.msra.mxu0 %v223
  %271 = vmatpush.bf16.msra.mxu0 %v220
  %272 = vmatpush.bf16.msra.mxu0 %v217
  %273 = vmatmul.bf16.gmra.mxu0 %v135
  %v274 = vpop.f32.mrf.mxu0
  %v275 = vadd.f32 %v125, %v274
  %v276 = vpop.f32.mrf.mxu0
  %v277 = vadd.f32 %v125, %v276
  %278 = vdwg.mxu0
  %279 = vmatpush.bf16.msra.mxu0 %v239
  %280 = vmatpush.bf16.msra.mxu0 %v236
  %281 = vmatpush.bf16.msra.mxu0 %v233
  %282 = vmatpush.bf16.msra.mxu0 %v230
  %283 = vmatpush.bf16.msra.mxu0 %v227
  %284 = vmatpush.bf16.msra.mxu0 %v224
  %285 = vmatpush.bf16.msra.mxu0 %v221
  %286 = vmatpush.bf16.msra.mxu0 %v218
  %287 = vmatmul.bf16.gmra.mxu0 %v135
  %v288 = vpop.f32.mrf.mxu0
  %v289 = vadd.f32 %v126, %v288
  %v290 = vpop.f32.mrf.mxu0
  %v291 = vadd.f32 %v126, %v290
  %292 = vdwg.mxu0
  %293 = vmatpush.bf16.msra.mxu0 %v240
  %294 = vmatpush.bf16.msra.mxu0 %v237
  %295 = vmatpush.bf16.msra.mxu0 %v234
  %296 = vmatpush.bf16.msra.mxu0 %v231
  %297 = vmatpush.bf16.msra.mxu0 %v228
  %298 = vmatpush.bf16.msra.mxu0 %v225
  %299 = vmatpush.bf16.msra.mxu0 %v222
  %300 = vmatpush.bf16.msra.mxu0 %v219
  %301 = vmatmul.bf16.gmra.mxu0 %v135
  %v302 = vpop.f32.mrf.mxu0
  %v303 = vadd.f32 %v127, %v302
  %v304 = vpop.f32.mrf.mxu0
  %v305 = vadd.f32 %v127, %v304
  %306 = vdwg.mxu0
  %v307 = vpack.c.bf16 %v289, %v275
  %v308 = vpack.c.bf16 %v303, %v303
  %v309 = vpack.c.bf16 %v291, %v277
  %v310 = vpack.c.bf16 %v305, %v305
  %311 = vst [vmem:[%s5] sm:$0xff] %v307
  %312 = vst [vmem:[%s5 + $0x8] sm:$0xf] %v308
  %313 = vst [vmem:[%s5 + $0xc] sm:$0xff] %v309
  %314 = vst [vmem:[%s5 + $0x14] sm:$0xf] %v310
  // Predicated region
  $region26: #{_lambda_.32} parent=0 // pred_check
    _
  $region27: #{_lambda_.32} parent=0 // pred_check_branch
    %316 = sbr.rel (0) target = $region29
  $region28: #{_lambda_.32} parent=0 // pred_region
    _
  $region29: #{_lambda_.32} parent=0 // pred_fallthru
    _
  // Predicated region
  $region30: #{_lambda_.32} parent=0 // pred_check
    _
  $region31: #{_lambda_.32} parent=0 // pred_check_branch
    %318 = sbr.rel (0) target = $region33
  $region32: #{_lambda_.32} parent=0 // pred_region
    _
  $region33: #{_lambda_.32} parent=0 // pred_fallthru
    _

// kernel: _lambda_.33
$region0: #{_lambda_.33}
  #allocation0 [shape = 'u32[]', space=smem, size = 0x4, offset = 0x4, fixed_abs, tag = 'smem constant byte address 0x4 - core index']
  #allocation1 [shape = 'u32[72,128]{1,0:T(1,128)}', space=vmem, size = 0x9000, scoped, tag = 'internal scratch']
  %s0 = inlined_call_operand.vmem [shape: bf16[2,8,384], index: 0, kind: input, shape index: {}]
  %s1 = inlined_call_operand.vmem [shape: bf16[2,8,128], index: 1, kind: output, shape index: {}]
  %s2 = sld [smem:[#allocation0]]
  $region37: #{_lambda_.33} parent=0
    _
  %s4 = ssub.s32 1, %s2
  %s5 = scalar_select 0, %s4, %s2
  loop: start=0, step=1, limit=4
  $region2: #{_lambda_.33} parent=0 // loop_pre_header
    _
  $region3: #{_lambda_.33} parent=0 // loop_header
    %s7 = sphi 0, %s11
    %p8 = scmp.ge.s32.totalorder %s7, 4
    %s17 = sphi 0, %s19
    %s20 = sphi 0, %s17
    %s21 = sphi 0, %s20
    %s37 = sphi 0, %s21
    %s43 = sphi 0, %s45
    %s46 = sphi 0, %s43
    %s47 = sphi 0, %s46
    %s63 = sphi 0, %s47
  $region4: #{_lambda_.33} parent=0 // loop_header_branch
    %10 = sbr.rel (%p8) target = $region8
  $region5: #{_lambda_.33} parent=0 // loop_body
    %s12 = ssub.s32 %s7, 1
    %s13 = ssub.s32 %s7, 2
    %s14 = sadd.s32 %s7, 1
    %s15 = ssub.s32 %s7, %s14
    %p16 = scmp.eq.s32.totalorder %s15, 0
    %s18 = sadd.s32 %s17, 1
    %s19 = scalar_select %p16, %s17, %s18
    %p22 = pneg %p16
    %p23 = scmp.eq.s32.totalorder %s7, 1
    %p24 = por %p22, %p23
    %p25 = scmp.ne.s32.totalorder %s17, %s20
    %p26 = scmp.eq.s32.totalorder %s7, 0
    %p27 = por %p25, %p26
    %p28 = scmp.ne.s32.totalorder %s17, %s20
    %p29 = scmp.eq.s32.totalorder %s12, 1
    %p30 = por %p28, %p29
    %p31 = scmp.ne.s32.totalorder %s20, %s21
    %p32 = scmp.eq.s32.totalorder %s12, 0
    %p33 = por %p31, %p32
    %p34 = scmp.ne.s32.totalorder %s20, %s21
    %p35 = scmp.eq.s32.totalorder %s13, 1
    %p36 = por %p34, %p35
    %p38 = scmp.ne.s32.totalorder %s21, %s37
    %p39 = scmp.eq.s32.totalorder %s13, 0
    %p40 = por %p38, %p39
    %s41 = ssub.s32 %s7, %s14
    %p42 = scmp.eq.s32.totalorder %s41, 0
    %s44 = sadd.s32 %s43, 1
    %s45 = scalar_select %p42, %s43, %s44
    %p48 = pneg %p42
    %p49 = scmp.eq.s32.totalorder %s7, 1
    %p50 = por %p48, %p49
    %p51 = scmp.ne.s32.totalorder %s43, %s46
    %p52 = scmp.eq.s32.totalorder %s7, 0
    %p53 = por %p51, %p52
    %p54 = scmp.ne.s32.totalorder %s43, %s46
    %p55 = scmp.eq.s32.totalorder %s12, 1
    %p56 = por %p54, %p55
    %p57 = scmp.ne.s32.totalorder %s46, %s47
    %p58 = scmp.eq.s32.totalorder %s12, 0
    %p59 = por %p57, %p58
    %p60 = scmp.ne.s32.totalorder %s46, %s47
    %p61 = scmp.eq.s32.totalorder %s13, 1
    %p62 = por %p60, %p61
    %p64 = scmp.ne.s32.totalorder %s47, %s63
    %p65 = scmp.eq.s32.totalorder %s13, 0
    %p66 = por %p64, %p65
    %p67 = scmp.le.s32.totalorder 1, %s7
    %p68 = scmp.lt.s32.totalorder %s7, 3
    %p69 = pnand %p67, %p68
    %p70 = pneg %p69
    // Predicated region
    $region9: #{_lambda_.33} parent=5 // pred_check
      _
    $region10: #{_lambda_.33} parent=5 // pred_check_branch
      %72 = sbr.rel (%p69) target = $region12
    $region11: #{_lambda_.33} parent=5 // pred_region
      %s73 = ssub.s32 %s7, 1
    $region12: #{_lambda_.33} parent=5 // pred_fallthru
      _
    %p74 = scmp.lt.s32.totalorder %s7, 2
    // Predicated region
    $region13: #{_lambda_.33} parent=5 // pred_check
      %p75 = pneg %p74
    $region14: #{_lambda_.33} parent=5 // pred_check_branch
      %77 = sbr.rel (%p75) target = $region16
    $region15: #{_lambda_.33} parent=5 // pred_region
      // Predicated region
      $region17: #{_lambda_.33} parent=15 // pred_check
        %p78 = pneg %p27
      $region18: #{_lambda_.33} parent=15 // pred_check_branch
        %80 = sbr.rel (%p78) target = $region20
      $region19: #{_lambda_.33} parent=15 // pred_region
        %p81 = scmp.lt.s32.totalorder %s7, 1
        %s82 = scalar_select %p81, %s7, 1
        %s83 = smul.addr %s82, 3
        %s84 = smul.addr %s83, 4
        %s85 = scalar_lea.vmem %s0, %s84
      $region20: #{_lambda_.33} parent=15 // pred_fallthru
        _
    $region16: #{_lambda_.33} parent=5 // pred_fallthru
      _
    %p86 = scmp.le.s32.totalorder 1, %s7
    %p87 = scmp.lt.s32.totalorder %s7, 3
    %p88 = pnand %p86, %p87
    %p89 = pneg %p88
    // Predicated region
    $region21: #{_lambda_.33} parent=5 // pred_check
      _
    $region22: #{_lambda_.33} parent=5 // pred_check_branch
      %91 = sbr.rel (%p88) target = $region24
    $region23: #{_lambda_.33} parent=5 // pred_region
      %s92 = ssub.s32 %s7, 1
      %p93 = scmp.lt.s32.totalorder %s12, 1
      %s94 = scalar_select %p93, %s12, 1
      %s95 = smul.addr %s94, 3
      %s96 = smul.addr %s95, 4
      %s97 = scalar_lea.vmem %s0, %s96
      %p98 = pneg %p33
      %p99 = pneg %p30
      %p100 = pneg %p59
      %p101 = pneg %p56
      %p102 = scmp.lt.s32.totalorder %s12, 1
      %s103 = scalar_select %p102, %s12, 1
      %s104 = smul.addr %s103, 4
      %s105 = scalar_lea.vmem %s1, %s104
      %p106 = scmp.lt.s32.totalorder %s12, 1
      %s107 = scalar_select %p106, %s12, 1
      %s108 = smul.addr %s107, 3
      %s109 = smul.addr %s108, 4
      %s110 = scalar_lea.vmem %s0, %s109
      %p111 = scmp.lt.s32.totalorder %s12, 1
      %s112 = scalar_select %p111, %s12, 1
      %s113 = smul.addr %s112, 4
      %s114 = scalar_lea.vmem %s1, %s113
      %v116 = vld [vmem:[%s110] sm:$0xff]
      %v117 = vld [vmem:[%s110 + $0x8] sm:$0xf]
      %119 = vrot.lane.b32.xlu0 %v116, 64
      %v120 = vpop.permute.xlu0 %119
      %v123 = vpack.i.b16 %v120, %v116
      %v124 = vshrl.u32 %v116, 16
      %v125 = vshrl.u32 %v120, 16
      %v126 = vpack.i.b16 %v125, %v124
      %v129 = vunpack.c.l.s4 1983009808
      %v130 = vunpack.c.0.s8 %v129
      %v131 = vperm.slane %v123, %v130
      %v132 = vrot.slane %v131, 4
      %vm133 = vcmask 1047556
      %v134 = vsel %vm133, 0, %v132
      %v136 = vunpack.c.l.s4 1934713408
      %v137 = vunpack.c.0.s8 %v136
      %v138 = vperm.slane %v131, %v137
      %v140 = vunpack.c.l.s4 1934713408
      %v141 = vunpack.c.0.s8 %v140
      %v142 = vperm.slane %v134, %v141
      %v143 = vrot.slane %v138, 4
      %v144 = vsel %vm133, 0, %v143
      %v145 = vrot.slane %v142, 4
      %v146 = vsel %vm133, 0, %v145
      %v149 = vunpack.c.l.s4 1983009808
      %v150 = vunpack.c.0.s8 %v149
      %v151 = vperm.slane %v126, %v150
      %v152 = vrot.slane %v151, 4
      %v153 = vsel %vm133, 0, %v152
      %v155 = vunpack.c.l.s4 1934713408
      %v156 = vunpack.c.0.s8 %v155
      %v157 = vperm.slane %v151, %v156
      %v159 = vunpack.c.l.s4 1934713408
      %v160 = vunpack.c.0.s8 %v159
      %v161 = vperm.slane %v153, %v160
      %v162 = vrot.slane %v157, 4
      %v163 = vsel %vm133, 0, %v162
      %v164 = vrot.slane %v161, 4
      %v165 = vsel %vm133, 0, %v164
      %v166 = vsel %vm133, %v145, %v138
      %v168 = vunpack.c.l.s4 1983009808
      %v169 = vunpack.c.0.s8 %v168
      %v170 = vperm.slane %v166, %v169
      %v171 = vrot.slane %v146, 4
      %v172 = vsel %vm133, %v171, %v144
      %v174 = vunpack.c.l.s4 1983009808
      %v175 = vunpack.c.0.s8 %v174
      %v176 = vperm.slane %v172, %v175
      %v177 = vrot.slane %v176, 4
      %v178 = vsel %vm133, %v177, %v170
      %v180 = vunpack.c.l.s4 1934713408
      %v181 = vunpack.c.0.s8 %v180
      %v182 = vperm.slane %v178, %v181
      %v183 = vsel %vm133, %v164, %v157
      %v185 = vunpack.c.l.s4 1983009808
      %v186 = vunpack.c.0.s8 %v185
      %v187 = vperm.slane %v183, %v186
      %v188 = vrot.slane %v165, 4
      %v189 = vsel %vm133, %v188, %v163
      %v191 = vunpack.c.l.s4 1983009808
      %v192 = vunpack.c.0.s8 %v191
      %v193 = vperm.slane %v189, %v192
      %v194 = vrot.slane %v193, 4
      %v195 = vsel %vm133, %v194, %v187
      %v197 = vunpack.c.l.s4 1934713408
      %v198 = vunpack.c.0.s8 %v197
      %v199 = vperm.slane %v195, %v198
      %v202 = vpack.i.b16 %v199, %v182
      %v203 = vshrl.u32 %v182, 16
      %v204 = vshrl.u32 %v199, 16
      %v205 = vpack.i.b16 %v204, %v203
      %v206 = vrot.slane %v116, 4
      %v207 = vrot.slane %v120, 4
      %v210 = vpack.i.b16 %v207, %v206
      %v211 = vshrl.u32 %v206, 16
      %v212 = vshrl.u32 %v207, 16
      %v213 = vpack.i.b16 %v212, %v211
      %v216 = vunpack.c.l.s4 1983009808
      %v217 = vunpack.c.0.s8 %v216
      %v218 = vperm.slane %v210, %v217
      %v219 = vrot.slane %v218, 4
      %v220 = vsel %vm133, 0, %v219
      %v222 = vunpack.c.l.s4 1934713408
      %v223 = vunpack.c.0.s8 %v222
      %v224 = vperm.slane %v218, %v223
      %v226 = vunpack.c.l.s4 1934713408
      %v227 = vunpack.c.0.s8 %v226
      %v228 = vperm.slane %v220, %v227
      %v229 = vrot.slane %v224, 4
      %v230 = vsel %vm133, 0, %v229
      %v231 = vrot.slane %v228, 4
      %v232 = vsel %vm133, 0, %v231
      %v235 = vunpack.c.l.s4 1983009808
      %v236 = vunpack.c.0.s8 %v235
      %v237 = vperm.slane %v213, %v236
      %v238 = vrot.slane %v237, 4
      %v239 = vsel %vm133, 0, %v238
      %v241 = vunpack.c.l.s4 1934713408
      %v242 = vunpack.c.0.s8 %v241
      %v243 = vperm.slane %v237, %v242
      %v245 = vunpack.c.l.s4 1934713408
      %v246 = vunpack.c.0.s8 %v245
      %v247 = vperm.slane %v239, %v246
      %v248 = vrot.slane %v243, 4
      %v249 = vsel %vm133, 0, %v248
      %v250 = vrot.slane %v247, 4
      %v251 = vsel %vm133, 0, %v250
      %v252 = vsel %vm133, %v231, %v224
      %v254 = vunpack.c.l.s4 1983009808
      %v255 = vunpack.c.0.s8 %v254
      %v256 = vperm.slane %v252, %v255
      %v257 = vrot.slane %v232, 4
      %v258 = vsel %vm133, %v257, %v230
      %v260 = vunpack.c.l.s4 1983009808
      %v261 = vunpack.c.0.s8 %v260
      %v262 = vperm.slane %v258, %v261
      %v263 = vrot.slane %v262, 4
      %v264 = vsel %vm133, %v263, %v256
      %v266 = vunpack.c.l.s4 1934713408
      %v267 = vunpack.c.0.s8 %v266
      %v268 = vperm.slane %v264, %v267
      %v269 = vsel %vm133, %v250, %v243
      %v271 = vunpack.c.l.s4 1983009808
      %v272 = vunpack.c.0.s8 %v271
      %v273 = vperm.slane %v269, %v272
      %v274 = vrot.slane %v251, 4
      %v275 = vsel %vm133, %v274, %v249
      %v277 = vunpack.c.l.s4 1983009808
      %v278 = vunpack.c.0.s8 %v277
      %v279 = vperm.slane %v275, %v278
      %v280 = vrot.slane %v279, 4
      %v281 = vsel %vm133, %v280, %v273
      %v283 = vunpack.c.l.s4 1934713408
      %v284 = vunpack.c.0.s8 %v283
      %v285 = vperm.slane %v281, %v284
      %v288 = vpack.i.b16 %v285, %v268
      %v289 = vshrl.u32 %v268, 16
      %v290 = vshrl.u32 %v285, 16
      %v291 = vpack.i.b16 %v290, %v289
      %293 = vrot.lane.b32.xlu0 %v117, 64
      %v294 = vpop.permute.xlu0 %293
      %v297 = vpack.i.b16 %v294, %v117
      %v298 = vshrl.u32 %v117, 16
      %v299 = vshrl.u32 %v294, 16
      %v300 = vpack.i.b16 %v299, %v298
      %v303 = vunpack.c.l.s4 1983009808
      %v304 = vunpack.c.0.s8 %v303
      %v305 = vperm.slane %v297, %v304
      %v306 = vrot.slane %v305, 4
      %v307 = vsel %vm133, 0, %v306
      %v309 = vunpack.c.l.s4 1934713408
      %v310 = vunpack.c.0.s8 %v309
      %v311 = vperm.slane %v305, %v310
      %v313 = vunpack.c.l.s4 1934713408
      %v314 = vunpack.c.0.s8 %v313
      %v315 = vperm.slane %v307, %v314
      %v316 = vrot.slane %v311, 4
      %v317 = vsel %vm133, 0, %v316
      %v318 = vrot.slane %v315, 4
      %v319 = vsel %vm133, 0, %v318
      %v322 = vunpack.c.l.s4 1983009808
      %v323 = vunpack.c.0.s8 %v322
      %v324 = vperm.slane %v300, %v323
      %v325 = vrot.slane %v324, 4
      %v326 = vsel %vm133, 0, %v325
      %v328 = vunpack.c.l.s4 1934713408
      %v329 = vunpack.c.0.s8 %v328
      %v330 = vperm.slane %v324, %v329
      %v332 = vunpack.c.l.s4 1934713408
      %v333 = vunpack.c.0.s8 %v332
      %v334 = vperm.slane %v326, %v333
      %v335 = vrot.slane %v330, 4
      %v336 = vsel %vm133, 0, %v335
      %v337 = vrot.slane %v334, 4
      %v338 = vsel %vm133, 0, %v337
      %v339 = vsel %vm133, %v318, %v311
      %v341 = vunpack.c.l.s4 1983009808
      %v342 = vunpack.c.0.s8 %v341
      %v343 = vperm.slane %v339, %v342
      %v344 = vrot.slane %v319, 4
      %v345 = vsel %vm133, %v344, %v317
      %v347 = vunpack.c.l.s4 1983009808
      %v348 = vunpack.c.0.s8 %v347
      %v349 = vperm.slane %v345, %v348
      %v350 = vrot.slane %v349, 4
      %v351 = vsel %vm133, %v350, %v343
      %v353 = vunpack.c.l.s4 1934713408
      %v354 = vunpack.c.0.s8 %v353
      %v355 = vperm.slane %v351, %v354
      %v356 = vsel %vm133, %v337, %v330
      %v358 = vunpack.c.l.s4 1983009808
      %v359 = vunpack.c.0.s8 %v358
      %v360 = vperm.slane %v356, %v359
      %v361 = vrot.slane %v338, 4
      %v362 = vsel %vm133, %v361, %v336
      %v364 = vunpack.c.l.s4 1983009808
      %v365 = vunpack.c.0.s8 %v364
      %v366 = vperm.slane %v362, %v365
      %v367 = vrot.slane %v366, 4
      %v368 = vsel %vm133, %v367, %v360
      %v370 = vunpack.c.l.s4 1934713408
      %v371 = vunpack.c.0.s8 %v370
      %v372 = vperm.slane %v368, %v371
      %v375 = vpack.i.b16 %v372, %v355
      %v376 = vshrl.u32 %v355, 16
      %v377 = vshrl.u32 %v372, 16
      %v378 = vpack.i.b16 %v377, %v376
      %vm379 = vcmask 523264
      %v381 = vsel %vm379, %v202, 0
      %v384 = vsel %vm379, %v288, 0
      %386 = vmatpush.bf16.xpose.msra.mxu0 0
      %387 = vmatpush.bf16.xpose.msra.mxu0 0
      %388 = vmatpush.bf16.xpose.msra.mxu0 0
      %389 = vmatpush.bf16.xpose.msra.mxu0 0
      %390 = vmatpush.bf16.xpose.msra.mxu0 0
      %391 = vmatpush.bf16.xpose.msra.mxu0 0
      %392 = vmatpush.bf16.xpose.msra.mxu0 0
      %393 = vmatpush.bf16.xpose.msra.mxu0 %v384
      %394 = vmatmul.bf16.gmra.mxu0 %v381
      %v395 = vpop.f32.mrf.mxu0
      %v396 = vadd.f32 0.0, %v395
      %v397 = vpop.f32.mrf.mxu0
      %398 = vdwg.mxu0
      %v400 = vsel %vm379, %v205, 0
      %v403 = vsel %vm379, %v291, 0
      %405 = vmatpush.bf16.xpose.msra.mxu0 0
      %406 = vmatpush.bf16.xpose.msra.mxu0 0
      %407 = vmatpush.bf16.xpose.msra.mxu0 0
      %408 = vmatpush.bf16.xpose.msra.mxu0 0
      %409 = vmatpush.bf16.xpose.msra.mxu0 0
      %410 = vmatpush.bf16.xpose.msra.mxu0 0
      %411 = vmatpush.bf16.xpose.msra.mxu0 0
      %412 = vmatpush.bf16.xpose.msra.mxu0 %v403
      %413 = vmatmul.bf16.gmra.mxu0 %v400
      %v414 = vpop.f32.mrf.mxu0
      %v415 = vadd.f32 0.0, %v414
      %v416 = vpop.f32.mrf.mxu0
      %417 = vdwg.mxu0
      %v418 = vmul.f32 %v396, 0.125
      %v419 = vmul.f32 %v415, 0.125
      %v420 = vlaneseq
      %v421 = vshrl.u32 %v420, 7
      %v422 = vlaneseq
      %v423 = vand.u32 %v422, 127
      %vm424 = vcmp.gt.s32.totalorder %v423, %v421
      %v425 = vsel %vm424, 1, 0
      %vm426 = vcmp.eq.s32.totalorder %v425, 1
      %v427 = vsel %vm426, -1e+30, %v418
      %v428 = vsel %vm426, -1e+30, %v419
      %vm429 = vcmask 64512
      %v430 = vsel %vm429, %v427, -inf
      %431 = vmax.xlane.f32.xlu0 %v430
      %v432 = vpop.xlane.xlu0 %431
      %v433 = vsel %vm429, %v428, -inf
      %434 = vmax.xlane.f32.xlu0 %v433
      %v435 = vpop.xlane.xlu0 %434
      %v436 = vsub.f32 %v427, %v432
      %v437 = vsub.f32 %v428, %v435
      %v438 = vmul.f32 %v436, 1.442695
      %v439 = vpow.pop %v438
      %v440 = vmul.f32 %v437, 1.442695
      %v441 = vpow.pop %v440
      %v442 = vsel %vm429, %v439, 0.0
      %443 = vadd.xlane.f32.xlu0 %v442
      %v444 = vpop.xlane.xlu0 %443
      %v445 = vsel %vm429, %v441, 0.0
      %446 = vadd.xlane.f32.xlu0 %v445
      %v447 = vpop.xlane.xlu0 %446
      %v448 = vrcp.pop %v444
      %v449 = vrcp.pop %v447
      %v450 = vmul.f32 %v439, %v448
      %v451 = vmul.f32 %v441, %v449
      %v452 = vpack.c.bf16 %v450, %v450
      %v453 = vpack.c.bf16 %v451, %v451
      %v455 = vsel %vm429, %v452, 0
      %vm457 = vcmask 1043456
      %v459 = vsel %vm457, %v375, 0
      %461 = vmatpush.bf16.msra.mxu0 0
      %462 = vmatpush.bf16.msra.mxu0 0
      %463 = vmatpush.bf16.msra.mxu0 0
      %464 = vmatpush.bf16.msra.mxu0 0
      %465 = vmatpush.bf16.msra.mxu0 0
      %466 = vmatpush.bf16.msra.mxu0 0
      %467 = vmatpush.bf16.msra.mxu0 0
      %468 = vmatpush.bf16.msra.mxu0 %v459
      %469 = vmatmul.bf16.gmra.mxu0 %v455
      %v470 = vpop.f32.mrf.mxu0
      %v471 = vadd.f32 0.0, %v470
      %v472 = vpop.f32.mrf.mxu0
      %473 = vdwg.mxu0
      %v475 = vsel %vm429, %v453, 0
      %v478 = vsel %vm457, %v378, 0
      %480 = vmatpush.bf16.msra.mxu0 0
      %481 = vmatpush.bf16.msra.mxu0 0
      %482 = vmatpush.bf16.msra.mxu0 0
      %483 = vmatpush.bf16.msra.mxu0 0
      %484 = vmatpush.bf16.msra.mxu0 0
      %485 = vmatpush.bf16.msra.mxu0 0
      %486 = vmatpush.bf16.msra.mxu0 0
      %487 = vmatpush.bf16.msra.mxu0 %v478
      %488 = vmatmul.bf16.gmra.mxu0 %v475
      %v489 = vpop.f32.mrf.mxu0
      %v490 = vadd.f32 0.0, %v489
      %v491 = vpop.f32.mrf.mxu0
      %492 = vdwg.mxu0
      %v493 = vrot.slane %v471, 4
      %vm494 = vcmask 1047556
      %v495 = vsel %vm494, 0.0, %v493
      %v497 = vunpack.c.l.s4 1983009808
      %v498 = vunpack.c.0.s8 %v497
      %v499 = vperm.slane %v471, %v498
      %v501 = vunpack.c.l.s4 1983009808
      %v502 = vunpack.c.0.s8 %v501
      %v503 = vperm.slane %v495, %v502
      %v504 = vrot.slane %v490, 4
      %v505 = vsel %vm494, 0.0, %v504
      %v507 = vunpack.c.l.s4 1983009808
      %v508 = vunpack.c.0.s8 %v507
      %v509 = vperm.slane %v490, %v508
      %v511 = vunpack.c.l.s4 1983009808
      %v512 = vunpack.c.0.s8 %v511
      %v513 = vperm.slane %v505, %v512
      %v514 = vrot.slane %v509, 4
      %v515 = vsel %vm494, %v514, %v499
      %v516 = vrot.slane %v499, 4
      %v517 = vsel %vm494, %v509, %v516
      %v519 = vunpack.c.l.s4 1934713408
      %v520 = vunpack.c.0.s8 %v519
      %v521 = vperm.slane %v515, %v520
      %v523 = vunpack.c.l.s4 1934713408
      %v524 = vunpack.c.0.s8 %v523
      %v525 = vperm.slane %v517, %v524
      %v526 = vrot.slane %v513, 4
      %v527 = vsel %vm494, %v526, %v503
      %v528 = vrot.slane %v503, 4
      %v529 = vsel %vm494, %v513, %v528
      %v531 = vunpack.c.l.s4 1934713408
      %v532 = vunpack.c.0.s8 %v531
      %v533 = vperm.slane %v527, %v532
      %v535 = vunpack.c.l.s4 1934713408
      %v536 = vunpack.c.0.s8 %v535
      %v537 = vperm.slane %v529, %v536
      %v538 = vrot.slane %v521, 4
      %v539 = vsel %vm494, 0.0, %v538
      %v540 = vrot.slane %v525, 4
      %v541 = vsel %vm494, 0.0, %v540
      %v542 = vrot.slane %v533, 4
      %v543 = vsel %vm494, 0.0, %v542
      %v544 = vrot.slane %v537, 4
      %v545 = vsel %vm494, 0.0, %v544
      %v546 = vsel %vm494, %v540, %v521
      %v548 = vunpack.c.l.s4 1983009808
      %v549 = vunpack.c.0.s8 %v548
      %v550 = vperm.slane %v546, %v549
      %v551 = vrot.slane %v541, 4
      %v552 = vsel %vm494, %v551, %v539
      %v554 = vunpack.c.l.s4 1983009808
      %v555 = vunpack.c.0.s8 %v554
      %v556 = vperm.slane %v552, %v555
      %v557 = vsel %vm494, %v544, %v533
      %v559 = vunpack.c.l.s4 1983009808
      %v560 = vunpack.c.0.s8 %v559
      %v561 = vperm.slane %v557, %v560
      %v562 = vrot.slane %v545, 4
      %v563 = vsel %vm494, %v562, %v543
      %v565 = vunpack.c.l.s4 1983009808
      %v566 = vunpack.c.0.s8 %v565
      %v567 = vperm.slane %v563, %v566
      %v568 = vrot.slane %v556, 4
      %v569 = vsel %vm494, %v568, %v550
      %v571 = vunpack.c.l.s4 1934713408
      %v572 = vunpack.c.0.s8 %v571
      %v573 = vperm.slane %v569, %v572
      %v574 = vrot.slane %v567, 4
      %v575 = vsel %vm494, %v574, %v561
      %v577 = vunpack.c.l.s4 1934713408
      %v578 = vunpack.c.0.s8 %v577
      %v579 = vperm.slane %v575, %v578
      %v580 = vrot.slane %v579, 4
      %v581 = vsel %vm494, %v580, %v573
      %v582 = vrot.slane %v573, 4
      %v583 = vsel %vm494, %v579, %v582
      %585 = vrot.lane.b32.xlu0 %v583, 64
      %v586 = vpop.permute.xlu0 %585
      %v588 = vsel %vm379, %v581, %v586
      %v589 = vpack.c.bf16 %v588, %v588
      %590 = vst [vmem:[%s114] sm:$0xf] %v589
      %p591 = scmp.lt.s32.totalorder %s12, 1
      %s592 = scalar_select %p591, %s12, 1
      %s593 = smul.addr %s592, 4
      %s594 = scalar_lea.vmem %s1, %s593
      // Predicated region
      $region25: #{_lambda_.33} parent=23 // pred_check
        %p595 = pneg %p56
      $region26: #{_lambda_.33} parent=23 // pred_check_branch
        %597 = sbr.rel (%p595) target = $region28
      $region27: #{_lambda_.33} parent=23 // pred_region
        _
      $region28: #{_lambda_.33} parent=23 // pred_fallthru
        _
    $region24: #{_lambda_.33} parent=5 // pred_fallthru
      _
    %p598 = scmp.le.s32.totalorder 2, %s7
    // Predicated region
    $region29: #{_lambda_.33} parent=5 // pred_check
      %p599 = pneg %p598
    $region30: #{_lambda_.33} parent=5 // pred_check_branch
      %601 = sbr.rel (%p599) target = $region32
    $region31: #{_lambda_.33} parent=5 // pred_region
      %s602 = ssub.s32 %s7, 2
      // Predicated region
      $region33: #{_lambda_.33} parent=31 // pred_check
        %p603 = pneg %p62
      $region34: #{_lambda_.33} parent=31 // pred_check_branch
        %605 = sbr.rel (%p603) target = $region36
      $region35: #{_lambda_.33} parent=31 // pred_region
        %p606 = scmp.lt.s32.totalorder %s13, 1
        %s607 = scalar_select %p606, %s13, 1
        %s608 = smul.addr %s607, 4
        %s609 = scalar_lea.vmem %s1, %s608
      $region36: #{_lambda_.33} parent=31 // pred_fallthru
        _
    $region32: #{_lambda_.33} parent=5 // pred_fallthru
      _
  $region6: #{_lambda_.33} parent=0 // loop_footer
    %s11 = sadd.s32 1, %s7
  $region7: #{_lambda_.33} parent=0 // loop_footer_branch
    %6 = sbr.rel target = $region3
  $region8: #{_lambda_.33} parent=0 // loop_exit
    _

// kernel: _lambda_.34
$region0: #{_lambda_.34}
  #allocation0 [shape = 'u32[]', space=smem, size = 0x4, offset = 0x4, fixed_abs, tag = 'smem constant byte address 0x4 - core index']
  #allocation1 [shape = 'u32[72,128]{1,0:T(1,128)}', space=vmem, size = 0x9000, scoped, tag = 'internal scratch']
  #allocation2 [shape = 'f32[16,128]{1,0:T(8,128)}', space=vmem, size = 0x2000, scoped, tag = 'scratch operand']
  %s0 = inlined_call_operand.vmem [shape: bf16[16,128], index: 0, kind: input, shape index: {}]
  %s1 = inlined_call_operand.vmem [shape: bf16[128,128], index: 1, kind: input, shape index: {}]
  %s2 = inlined_call_operand.vmem [shape: f32[1,128], index: 2, kind: input, shape index: {}]
  %s3 = inlined_call_operand.vmem [shape: f32[16,128], index: 3, kind: output, shape index: {}]
  %s4 = sld [smem:[#allocation0]]
  $region30: #{_lambda_.34} parent=0
    _
  %s6 = ssub.s32 1, %s4
  %s7 = scalar_select 0, %s6, %s4
  // Predicated region
  $region2: #{_lambda_.34} parent=0 // pred_check
    _
  $region3: #{_lambda_.34} parent=0 // pred_check_branch
    %9 = sbr.rel (0) target = $region5
  $region4: #{_lambda_.34} parent=0 // pred_region
    _
  $region5: #{_lambda_.34} parent=0 // pred_fallthru
    _
  // Predicated region
  $region6: #{_lambda_.34} parent=0 // pred_check
    _
  $region7: #{_lambda_.34} parent=0 // pred_check_branch
    %11 = sbr.rel (0) target = $region9
  $region8: #{_lambda_.34} parent=0 // pred_region
    _
  $region9: #{_lambda_.34} parent=0 // pred_fallthru
    _
  // Predicated region
  $region10: #{_lambda_.34} parent=0 // pred_check
    _
  $region11: #{_lambda_.34} parent=0 // pred_check_branch
    %13 = sbr.rel (0) target = $region13
  $region12: #{_lambda_.34} parent=0 // pred_region
    _
  $region13: #{_lambda_.34} parent=0 // pred_fallthru
    _
  %p14 = scmp.eq.s32.totalorder 0, 0
  // Predicated region
  $region14: #{_lambda_.34} parent=0 // pred_check
    %p15 = pneg %p14
  $region15: #{_lambda_.34} parent=0 // pred_check_branch
    %17 = sbr.rel (%p15) target = $region17
  $region16: #{_lambda_.34} parent=0 // pred_region
    %18 = vst [vmem:[#allocation2] sm:$0xff] 0.0
    %19 = vst [vmem:[#allocation2 + $0x8] sm:$0xff] 0.0
  $region17: #{_lambda_.34} parent=0 // pred_fallthru
    _
  %v20 = vld [vmem:[#allocation2] sm:$0xff]
  %v21 = vld [vmem:[#allocation2 + $0x8] sm:$0xff]
  %v22 = vld [vmem:[%s0] sm:$0xf]
  %v23 = vld [vmem:[%s0 + $0x4] sm:$0xf]
  %v24 = vld [vmem:[%s1] sm:$0xf]
  %v25 = vld [vmem:[%s1 + $0x4] sm:$0xf]
  %v26 = vld [vmem:[%s1 + $0x8] sm:$0xf]
  %v27 = vld [vmem:[%s1 + $0xc] sm:$0xf]
  %v28 = vld [vmem:[%s1 + $0x10] sm:$0xf]
  %v29 = vld [vmem:[%s1 + $0x14] sm:$0xf]
  %v30 = vld [vmem:[%s1 + $0x18] sm:$0xf]
  %v31 = vld [vmem:[%s1 + $0x1c] sm:$0xf]
  %v32 = vld [vmem:[%s1 + $0x20] sm:$0xf]
  %v33 = vld [vmem:[%s1 + $0x24] sm:$0xf]
  %v34 = vld [vmem:[%s1 + $0x28] sm:$0xf]
  %v35 = vld [vmem:[%s1 + $0x2c] sm:$0xf]
  %v36 = vld [vmem:[%s1 + $0x30] sm:$0xf]
  %v37 = vld [vmem:[%s1 + $0x34] sm:$0xf]
  %v38 = vld [vmem:[%s1 + $0x38] sm:$0xf]
  %v39 = vld [vmem:[%s1 + $0x3c] sm:$0xf]
  %v42 = vunpack.c.l.b16 %v22
  %v43 = vunpack.c.l.b16 %v23
  %v44 = vpack.c.b16 %v43, %v42
  %v62 = vunpack.c.l.b16 %v24
  %v63 = vunpack.c.l.b16 %v25
  %v64 = vunpack.c.l.b16 %v26
  %v65 = vunpack.c.l.b16 %v27
  %v66 = vunpack.c.l.b16 %v28
  %v67 = vunpack.c.l.b16 %v29
  %v68 = vunpack.c.l.b16 %v30
  %v69 = vunpack.c.l.b16 %v31
  %v70 = vunpack.c.l.b16 %v32
  %v71 = vunpack.c.l.b16 %v33
  %v72 = vunpack.c.l.b16 %v34
  %v73 = vunpack.c.l.b16 %v35
  %v74 = vunpack.c.l.b16 %v36
  %v75 = vunpack.c.l.b16 %v37
  %v76 = vunpack.c.l.b16 %v38
  %v77 = vunpack.c.l.b16 %v39
  %v78 = vpack.c.b16 %v63, %v62
  %v79 = vpack.c.b16 %v65, %v64
  %v80 = vpack.c.b16 %v67, %v66
  %v81 = vpack.c.b16 %v69, %v68
  %v82 = vpack.c.b16 %v71, %v70
  %v83 = vpack.c.b16 %v73, %v72
  %v84 = vpack.c.b16 %v75, %v74
  %v85 = vpack.c.b16 %v77, %v76
  %94 = vmatpush.bf16.msra.mxu0 %v85
  %95 = vmatpush.bf16.msra.mxu0 %v84
  %96 = vmatpush.bf16.msra.mxu0 %v83
  %97 = vmatpush.bf16.msra.mxu0 %v82
  %98 = vmatpush.bf16.msra.mxu0 %v81
  %99 = vmatpush.bf16.msra.mxu0 %v80
  %100 = vmatpush.bf16.msra.mxu0 %v79
  %101 = vmatpush.bf16.msra.mxu0 %v78
  %102 = vmatmul.bf16.gmra.mxu0 %v44
  %v103 = vpop.f32.mrf.mxu0
  %v104 = vadd.f32 0.0, %v103
  %v105 = vpop.f32.mrf.mxu0
  %v106 = vadd.f32 0.0, %v105
  %107 = vdwg.mxu0
  %v108 = vadd.f32 %v20, %v104
  %v109 = vadd.f32 %v21, %v106
  %110 = vst [vmem:[#allocation2] sm:$0xff] %v108
  %111 = vst [vmem:[#allocation2 + $0x8] sm:$0xff] %v109
  // Predicated region
  $region18: #{_lambda_.34} parent=0 // pred_check
    %p112 = pneg %p14
  $region19: #{_lambda_.34} parent=0 // pred_check_branch
    %114 = sbr.rel (%p112) target = $region21
  $region20: #{_lambda_.34} parent=0 // pred_region
    %v115 = vld [vmem:[#allocation2] sm:$0xff]
    %v116 = vld [vmem:[#allocation2 + $0x8] sm:$0xff]
    %v117 = vld [vmem:[%s2] sm:$0x1]
    %v119 = vperm.slane %v117, 0
    %v121 = vadd.f32 %v115, %v119
    %v122 = vadd.f32 %v116, %v119
    %123 = vst [vmem:[%s3] sm:$0xff] %v121
    %124 = vst [vmem:[%s3 + $0x8] sm:$0xff] %v122
  $region21: #{_lambda_.34} parent=0 // pred_fallthru
    _
  // Predicated region
  $region22: #{_lambda_.34} parent=0 // pred_check
    _
  $region23: #{_lambda_.34} parent=0 // pred_check_branch
    %126 = sbr.rel (0) target = $region25
  $region24: #{_lambda_.34} parent=0 // pred_region
    _
  $region25: #{_lambda_.34} parent=0 // pred_fallthru
    _
  // Predicated region
  $region26: #{_lambda_.34} parent=0 // pred_check
    _
  $region27: #{_lambda_.34} parent=0 // pred_check_branch
    %128 = sbr.rel (0) target = $region29
  $region28: #{_lambda_.34} parent=0 // pred_region
    _
  $region29: #{_lambda_.34} parent=0 // pred_fallthru
    _

// kernel: _lambda_.40
$region0: #{_lambda_.40}
  #allocation0 [shape = 'u32[]', space=smem, size = 0x4, offset = 0x4, fixed_abs, tag = 'smem constant byte address 0x4 - core index']
  #allocation1 [shape = 'u32[72,128]{1,0:T(1,128)}', space=vmem, size = 0x9000, scoped, tag = 'internal scratch']
  #allocation2 [shape = 'bf16[8,128]{1,0:T(8,128)(2,1)}', space=vmem, size = 0x800, scoped, tag = 'scratch operand']
  %s0 = inlined_call_operand.vmem [shape: f32[8,128], index: 0, kind: input, shape index: {}]
  %s1 = inlined_call_operand.vmem [shape: f32[1,128], index: 1, kind: input, shape index: {}]
  %s2 = inlined_call_operand.vmem [shape: f32[1,128], index: 2, kind: input, shape index: {}, may-alias: {2,4}]
  %s3 = inlined_call_operand.vmem [shape: bf16[128,128], index: 3, kind: input, shape index: {}]
  %s4 = inlined_call_operand.vmem [shape: f32[1,128], index: 4, kind: input, shape index: {}, may-alias: {2,4}]
  %s5 = inlined_call_operand.vmem [shape: f32[8,128], index: 5, kind: output, shape index: {}]
  %s6 = sld [smem:[#allocation0]]
  $region34: #{_lambda_.40} parent=0
    _
  %s8 = ssub.s32 1, %s6
  %s9 = scalar_select 0, %s8, %s6
  // Predicated region
  $region2: #{_lambda_.40} parent=0 // pred_check
    _
  $region3: #{_lambda_.40} parent=0 // pred_check_branch
    %11 = sbr.rel (0) target = $region5
  $region4: #{_lambda_.40} parent=0 // pred_region
    _
  $region5: #{_lambda_.40} parent=0 // pred_fallthru
    _
  // Predicated region
  $region6: #{_lambda_.40} parent=0 // pred_check
    _
  $region7: #{_lambda_.40} parent=0 // pred_check_branch
    %13 = sbr.rel (0) target = $region9
  $region8: #{_lambda_.40} parent=0 // pred_region
    _
  $region9: #{_lambda_.40} parent=0 // pred_fallthru
    _
  // Predicated region
  $region10: #{_lambda_.40} parent=0 // pred_check
    _
  $region11: #{_lambda_.40} parent=0 // pred_check_branch
    %15 = sbr.rel (0) target = $region13
  $region12: #{_lambda_.40} parent=0 // pred_region
    _
  $region13: #{_lambda_.40} parent=0 // pred_fallthru
    _
  // Predicated region
  $region14: #{_lambda_.40} parent=0 // pred_check
    _
  $region15: #{_lambda_.40} parent=0 // pred_check_branch
    %17 = sbr.rel (0) target = $region17
  $region16: #{_lambda_.40} parent=0 // pred_region
    _
  $region17: #{_lambda_.40} parent=0 // pred_fallthru
    _
  // Predicated region
  $region18: #{_lambda_.40} parent=0 // pred_check
    _
  $region19: #{_lambda_.40} parent=0 // pred_check_branch
    %19 = sbr.rel (0) target = $region21
  $region20: #{_lambda_.40} parent=0 // pred_region
    _
  $region21: #{_lambda_.40} parent=0 // pred_fallthru
    _
  %p20 = scmp.eq.s32.totalorder 0, 0
  // Predicated region
  $region22: #{_lambda_.40} parent=0 // pred_check
    %p21 = pneg %p20
  $region23: #{_lambda_.40} parent=0 // pred_check_branch
    %23 = sbr.rel (%p21) target = $region25
  $region24: #{_lambda_.40} parent=0 // pred_region
    %v24 = vld [vmem:[%s0] sm:$0xff]
    %25 = vadd.xlane.f32.xlu0 %v24
    %v26 = vpop.xlane.xlu0 %25
    %v27 = vrcp.pop 128.0
    %v28 = vmul.f32 128.0, %v27
    %v29 = vsub.f32 1.0, %v28
    %v30 = vmul.f32 %v27, %v29
    %v31 = vadd.f32 %v27, %v30
    %vm32 = vweird.f32 %v27
    %v33 = vsel %vm32, %v27, %v31
    %v34 = vmul.f32 %v26, %v33
    %v35 = vsub.f32 %v24, %v34
    %v36 = vmul.f32 %v35, %v35
    %37 = vadd.xlane.f32.xlu0 %v36
    %v38 = vpop.xlane.xlu0 %37
    %v39 = vmul.f32 %v38, %v33
    %v40 = vadd.f32 %v39, 1e-05
    %v41 = vrsqrt.pop %v40
    %v42 = vmul.f32 %v41, %v40
    %v43 = vmul.f32 %v42, %v41
    %v44 = vmul.f32 0.5, %v43
    %v45 = vsub.f32 1.5, %v44
    %v46 = vmul.f32 %v41, %v45
    %vm47 = vweird.f32 %v40
    %vm48 = vweird.f32 %v41
    %vm49 = vmor %vm47, %vm48
    %v50 = vsel %vm49, %v41, %v46
    %v51 = vmul.f32 %v35, %v50
    %v52 = vld [vmem:[%s1] sm:$0x1]
    %v54 = vperm.slane %v52, 0
    %v56 = vmul.f32 %v51, %v54
    %v57 = vld [vmem:[%s2] sm:$0x1]
    %v59 = vperm.slane %v57, 0
    %v61 = vadd.f32 %v56, %v59
    %v62 = vpack.c.bf16 %v61, %v61
    %63 = vst [vmem:[#allocation2] sm:$0xf] %v62
  $region25: #{_lambda_.40} parent=0 // pred_fallthru
    _
  %v64 = vld [vmem:[#allocation2] sm:$0xf]
  %v65 = vld [vmem:[%s3] sm:$0xf]
  %v66 = vld [vmem:[%s3 + $0x4] sm:$0xf]
  %v67 = vld [vmem:[%s3 + $0x8] sm:$0xf]
  %v68 = vld [vmem:[%s3 + $0xc] sm:$0xf]
  %v69 = vld [vmem:[%s3 + $0x10] sm:$0xf]
  %v70 = vld [vmem:[%s3 + $0x14] sm:$0xf]
  %v71 = vld [vmem:[%s3 + $0x18] sm:$0xf]
  %v72 = vld [vmem:[%s3 + $0x1c] sm:$0xf]
  %v73 = vld [vmem:[%s3 + $0x20] sm:$0xf]
  %v74 = vld [vmem:[%s3 + $0x24] sm:$0xf]
  %v75 = vld [vmem:[%s3 + $0x28] sm:$0xf]
  %v76 = vld [vmem:[%s3 + $0x2c] sm:$0xf]
  %v77 = vld [vmem:[%s3 + $0x30] sm:$0xf]
  %v78 = vld [vmem:[%s3 + $0x34] sm:$0xf]
  %v79 = vld [vmem:[%s3 + $0x38] sm:$0xf]
  %v80 = vld [vmem:[%s3 + $0x3c] sm:$0xf]
  %v81 = vld [vmem:[%s4] sm:$0x1]
  %v83 = vperm.slane %v81, 0
  %v101 = vunpack.c.l.b16 %v65
  %v102 = vunpack.c.l.b16 %v66
  %v103 = vunpack.c.l.b16 %v67
  %v104 = vunpack.c.l.b16 %v68
  %v105 = vunpack.c.l.b16 %v69
  %v106 = vunpack.c.l.b16 %v70
  %v107 = vunpack.c.l.b16 %v71
  %v108 = vunpack.c.l.b16 %v72
  %v109 = vunpack.c.l.b16 %v73
  %v110 = vunpack.c.l.b16 %v74
  %v111 = vunpack.c.l.b16 %v75
  %v112 = vunpack.c.l.b16 %v76
  %v113 = vunpack.c.l.b16 %v77
  %v114 = vunpack.c.l.b16 %v78
  %v115 = vunpack.c.l.b16 %v79
  %v116 = vunpack.c.l.b16 %v80
  %v117 = vpack.c.b16 %v102, %v101
  %v118 = vpack.c.b16 %v104, %v103
  %v119 = vpack.c.b16 %v106, %v105
  %v120 = vpack.c.b16 %v108, %v107
  %v121 = vpack.c.b16 %v110, %v109
  %v122 = vpack.c.b16 %v112, %v111
  %v123 = vpack.c.b16 %v114, %v113
  %v124 = vpack.c.b16 %v116, %v115
  %133 = vmatpush.bf16.msra.mxu0 %v124
  %134 = vmatpush.bf16.msra.mxu0 %v123
  %135 = vmatpush.bf16.msra.mxu0 %v122
  %136 = vmatpush.bf16.msra.mxu0 %v121
  %137 = vmatpush.bf16.msra.mxu0 %v120
  %138 = vmatpush.bf16.msra.mxu0 %v119
  %139 = vmatpush.bf16.msra.mxu0 %v118
  %140 = vmatpush.bf16.msra.mxu0 %v117
  %141 = vmatmul.bf16.gmra.mxu0 %v64
  %v142 = vpop.f32.mrf.mxu0
  %v143 = vadd.f32 %v83, %v142
  %v144 = vpop.f32.mrf.mxu0
  %145 = vdwg.mxu0
  %146 = vst [vmem:[%s5] sm:$0xff] %v143
  // Predicated region
  $region26: #{_lambda_.40} parent=0 // pred_check
    _
  $region27: #{_lambda_.40} parent=0 // pred_check_branch
    %148 = sbr.rel (0) target = $region29
  $region28: #{_lambda_.40} parent=0 // pred_region
    _
  $region29: #{_lambda_.40} parent=0 // pred_fallthru
    _
  // Predicated region
  $region30: #{_lambda_.40} parent=0 // pred_check
    _
  $region31: #{_lambda_.40} parent=0 // pred_check_branch
    %150 = sbr.rel (0) target = $region33
  $region32: #{_lambda_.40} parent=0 // pred_region
    _
  $region33: #{_lambda_.40} parent=0 // pred_fallthru
    _

// kernel: _lambda_.41
$region0: #{_lambda_.41}
  #allocation0 [shape = 'u32[]', space=smem, size = 0x4, offset = 0x4, fixed_abs, tag = 'smem constant byte address 0x4 - core index']
  #allocation1 [shape = 'u32[72,128]{1,0:T(1,128)}', space=vmem, size = 0x9000, scoped, tag = 'internal scratch']
  #allocation2 [shape = 'f32[1]{0:T(128)S(6)}', space=smem, size = 0x200, scoped, tag = 'scoped memory for _lambda_.41']
  %s0 = inlined_call_operand.<no memory space> [shape: f32[1], index: 0, kind: input, shape index: {}]
  %s1 = inlined_call_operand.vmem [shape: f32[2,128], index: 1, kind: input, shape index: {}]
  %s2 = inlined_call_operand.vmem [shape: f32[2,128], index: 2, kind: input, shape index: {}]
  %s3 = inlined_call_operand.vmem [shape: f32[2,2], index: 3, kind: output, shape index: {}]
  %s4 = sld [smem:[#allocation0]]
  $region22: #{_lambda_.41} parent=0
    _
  %s6 = ssub.s32 1, %s4
  %s7 = scalar_select 0, %s6, %s4
  %8 = sst [smem:[#allocation2]] %s0
  // Predicated region
  $region2: #{_lambda_.41} parent=0 // pred_check
    _
  $region3: #{_lambda_.41} parent=0 // pred_check_branch
    %10 = sbr.rel (0) target = $region5
  $region4: #{_lambda_.41} parent=0 // pred_region
    _
  $region5: #{_lambda_.41} parent=0 // pred_fallthru
    _
  // Predicated region
  $region6: #{_lambda_.41} parent=0 // pred_check
    _
  $region7: #{_lambda_.41} parent=0 // pred_check_branch
    %12 = sbr.rel (0) target = $region9
  $region8: #{_lambda_.41} parent=0 // pred_region
    _
  $region9: #{_lambda_.41} parent=0 // pred_fallthru
    _
  // Predicated region
  $region10: #{_lambda_.41} parent=0 // pred_check
    _
  $region11: #{_lambda_.41} parent=0 // pred_check_branch
    %14 = sbr.rel (0) target = $region13
  $region12: #{_lambda_.41} parent=0 // pred_region
    _
  $region13: #{_lambda_.41} parent=0 // pred_fallthru
    _
  %v16 = vld [vmem:[%s1] sm:$0x3]
  %v17 = vld [vmem:[%s2] sm:$0x3]
  %v18 = vmul.f32 %v16, %v16
  %vm19 = vcmask 1041408
  %v20 = vsel %vm19, %v18, 0.0
  %21 = vadd.xlane.f32.xlu0 %v20
  %v22 = vpop.xlane.xlu0 %21
  %v23 = vrsqrt.pop %v22
  %v24 = vmul.f32 %v23, %v22
  %v25 = vmul.f32 %v24, %v23
  %v26 = vmul.f32 0.5, %v25
  %v27 = vsub.f32 1.5, %v26
  %v28 = vmul.f32 %v23, %v27
  %vm29 = vweird.f32 %v22
  %vm30 = vweird.f32 %v23
  %vm31 = vmor %vm29, %vm30
  %v32 = vsel %vm31, %v23, %v28
  %v33 = vmul.f32 %v16, %v32
  %v34 = vmul.f32 %v17, %v17
  %v35 = vsel %vm19, %v34, 0.0
  %36 = vadd.xlane.f32.xlu0 %v35
  %v37 = vpop.xlane.xlu0 %36
  %v38 = vrsqrt.pop %v37
  %v39 = vmul.f32 %v38, %v37
  %v40 = vmul.f32 %v39, %v38
  %v41 = vmul.f32 0.5, %v40
  %v42 = vsub.f32 1.5, %v41
  %v43 = vmul.f32 %v38, %v42
  %vm44 = vweird.f32 %v37
  %vm45 = vweird.f32 %v38
  %vm46 = vmor %vm44, %vm45
  %v47 = vsel %vm46, %v38, %v43
  %v48 = vmul.f32 %v17, %v47
  %v49 = vpack.c.bf16 %v33, %v33
  %v50 = vpack.c.bf16 %v48, %v48
  %51 = vmatpush.bf16.xpose.msra.mxu0 0
  %52 = vmatpush.bf16.xpose.msra.mxu0 0
  %53 = vmatpush.bf16.xpose.msra.mxu0 0
  %54 = vmatpush.bf16.xpose.msra.mxu0 0
  %55 = vmatpush.bf16.xpose.msra.mxu0 0
  %56 = vmatpush.bf16.xpose.msra.mxu0 0
  %57 = vmatpush.bf16.xpose.msra.mxu0 0
  %58 = vmatpush.bf16.xpose.msra.mxu0 %v50
  %59 = vmatmul.bf16.gmra.mxu0 %v49
  %v60 = vpop.f32.mrf.mxu0
  %v61 = vadd.f32 0.0, %v60
  %v62 = vpop.f32.mrf.mxu0
  %63 = vdwg.mxu0
  %s64 = sld [smem:[#allocation2]]
  %v65 = vstv %s64
  %v66 = vmul.f32 %v65, 1.442695
  %v67 = vpow.pop %v66
  %s68 = vtos %v67
  %v69 = vstv %s68
  %v70 = vmul.f32 %v61, %v69
  %vm71 = vcmask 9216
  %72 = vst.msk [vmem:[%s3] sm:$0x3] %vm71, %v70
  // Predicated region
  $region14: #{_lambda_.41} parent=0 // pred_check
    _
  $region15: #{_lambda_.41} parent=0 // pred_check_branch
    %74 = sbr.rel (0) target = $region17
  $region16: #{_lambda_.41} parent=0 // pred_region
    _
  $region17: #{_lambda_.41} parent=0 // pred_fallthru
    _
  // Predicated region
  $region18: #{_lambda_.41} parent=0 // pred_check
    _
  $region19: #{_lambda_.41} parent=0 // pred_check_branch
    %76 = sbr.rel (0) target = $region21
  $region20: #{_lambda_.41} parent=0 // pred_region
    _
  $region21: #{_lambda_.41} parent=0 // pred_fallthru
    _

// kernel: _lambda_.35
$region0: #{_lambda_.35}
  #allocation0 [shape = 'u32[]', space=smem, size = 0x4, offset = 0x4, fixed_abs, tag = 'smem constant byte address 0x4 - core index']
  #allocation1 [shape = 'u32[72,128]{1,0:T(1,128)}', space=vmem, size = 0x9000, scoped, tag = 'internal scratch']
  #allocation2 [shape = 'bf16[16,128]{1,0:T(8,128)(2,1)}', space=vmem, size = 0x1000, scoped, tag = 'scratch operand']
  #allocation3 [shape = 'f32[16,128]{1,0:T(8,128)}', space=vmem, size = 0x2000, scoped, tag = 'scratch operand']
  %s0 = inlined_call_operand.vmem [shape: f32[16,128], index: 0, kind: input, shape index: {}]
  %s1 = inlined_call_operand.vmem [shape: f32[1,128], index: 1, kind: input, shape index: {}]
  %s2 = inlined_call_operand.vmem [shape: f32[1,128], index: 2, kind: input, shape index: {}, may-alias: {2,6}]
  %s3 = inlined_call_operand.vmem [shape: bf16[128,512], index: 3, kind: input, shape index: {}]
  %s4 = inlined_call_operand.vmem [shape: f32[1,512], index: 4, kind: input, shape index: {}]
  %s5 = inlined_call_operand.vmem [shape: bf16[512,128], index: 5, kind: input, shape index: {}]
  %s6 = inlined_call_operand.vmem [shape: f32[1,128], index: 6, kind: input, shape index: {}, may-alias: {2,6}]
  %s7 = inlined_call_operand.vmem [shape: f32[16,128], index: 7, kind: output, shape index: {}]
  %s8 = sld [smem:[#allocation0]]
  $region46: #{_lambda_.35} parent=0
    _
  %s10 = ssub.s32 1, %s8
  %s11 = scalar_select 0, %s10, %s8
  // Predicated region
  $region2: #{_lambda_.35} parent=0 // pred_check
    _
  $region3: #{_lambda_.35} parent=0 // pred_check_branch
    %13 = sbr.rel (0) target = $region5
  $region4: #{_lambda_.35} parent=0 // pred_region
    _
  $region5: #{_lambda_.35} parent=0 // pred_fallthru
    _
  // Predicated region
  $region6: #{_lambda_.35} parent=0 // pred_check
    _
  $region7: #{_lambda_.35} parent=0 // pred_check_branch
    %15 = sbr.rel (0) target = $region9
  $region8: #{_lambda_.35} parent=0 // pred_region
    _
  $region9: #{_lambda_.35} parent=0 // pred_fallthru
    _
  // Predicated region
  $region10: #{_lambda_.35} parent=0 // pred_check
    _
  $region11: #{_lambda_.35} parent=0 // pred_check_branch
    %17 = sbr.rel (0) target = $region13
  $region12: #{_lambda_.35} parent=0 // pred_region
    _
  $region13: #{_lambda_.35} parent=0 // pred_fallthru
    _
  // Predicated region
  $region14: #{_lambda_.35} parent=0 // pred_check
    _
  $region15: #{_lambda_.35} parent=0 // pred_check_branch
    %19 = sbr.rel (0) target = $region17
  $region16: #{_lambda_.35} parent=0 // pred_region
    _
  $region17: #{_lambda_.35} parent=0 // pred_fallthru
    _
  // Predicated region
  $region18: #{_lambda_.35} parent=0 // pred_check
    _
  $region19: #{_lambda_.35} parent=0 // pred_check_branch
    %21 = sbr.rel (0) target = $region21
  $region20: #{_lambda_.35} parent=0 // pred_region
    _
  $region21: #{_lambda_.35} parent=0 // pred_fallthru
    _
  // Predicated region
  $region22: #{_lambda_.35} parent=0 // pred_check
    _
  $region23: #{_lambda_.35} parent=0 // pred_check_branch
    %23 = sbr.rel (0) target = $region25
  $region24: #{_lambda_.35} parent=0 // pred_region
    _
  $region25: #{_lambda_.35} parent=0 // pred_fallthru
    _
  // Predicated region
  $region26: #{_lambda_.35} parent=0 // pred_check
    _
  $region27: #{_lambda_.35} parent=0 // pred_check_branch
    %25 = sbr.rel (0) target = $region29
  $region28: #{_lambda_.35} parent=0 // pred_region
    _
  $region29: #{_lambda_.35} parent=0 // pred_fallthru
    _
  %p26 = scmp.eq.s32.totalorder 0, 0
  // Predicated region
  $region30: #{_lambda_.35} parent=0 // pred_check
    %p27 = pneg %p26
  $region31: #{_lambda_.35} parent=0 // pred_check_branch
    %29 = sbr.rel (%p27) target = $region33
  $region32: #{_lambda_.35} parent=0 // pred_region
    %30 = vst [vmem:[#allocation3] sm:$0xff] 0.0
    %31 = vst [vmem:[#allocation3 + $0x8] sm:$0xff] 0.0
    %v32 = vld [vmem:[%s0] sm:$0xff]
    %v33 = vld [vmem:[%s0 + $0x8] sm:$0xff]
    %34 = vadd.xlane.f32.xlu0 %v32
    %v35 = vpop.xlane.xlu0 %34
    %36 = vadd.xlane.f32.xlu0 %v33
    %v37 = vpop.xlane.xlu0 %36
    %v38 = vrcp.pop 128.0
    %v39 = vmul.f32 128.0, %v38
    %v40 = vsub.f32 1.0, %v39
    %v41 = vmul.f32 %v38, %v40
    %v42 = vadd.f32 %v38, %v41
    %vm43 = vweird.f32 %v38
    %v44 = vsel %vm43, %v38, %v42
    %v45 = vmul.f32 %v35, %v44
    %v46 = vmul.f32 %v37, %v44
    %v47 = vsub.f32 %v32, %v45
    %v48 = vsub.f32 %v33, %v46
    %v49 = vmul.f32 %v47, %v47
    %v50 = vmul.f32 %v48, %v48
    %51 = vadd.xlane.f32.xlu0 %v49
    %v52 = vpop.xlane.xlu0 %51
    %53 = vadd.xlane.f32.xlu0 %v50
    %v54 = vpop.xlane.xlu0 %53
    %v55 = vmul.f32 %v52, %v44
    %v56 = vmul.f32 %v54, %v44
    %v57 = vadd.f32 %v55, 1e-05
    %v58 = vadd.f32 %v56, 1e-05
    %v59 = vrsqrt.pop %v57
    %v60 = vmul.f32 %v59, %v57
    %v61 = vmul.f32 %v60, %v59
    %v62 = vmul.f32 0.5, %v61
    %v63 = vsub.f32 1.5, %v62
    %v64 = vmul.f32 %v59, %v63
    %vm65 = vweird.f32 %v57
    %vm66 = vweird.f32 %v59
    %vm67 = vmor %vm65, %vm66
    %v68 = vsel %vm67, %v59, %v64
    %v69 = vrsqrt.pop %v58
    %v70 = vmul.f32 %v69, %v58
    %v71 = vmul.f32 %v70, %v69
    %v72 = vmul.f32 0.5, %v71
    %v73 = vsub.f32 1.5, %v72
    %v74 = vmul.f32 %v69, %v73
    %vm75 = vweird.f32 %v58
    %vm76 = vweird.f32 %v69
    %vm77 = vmor %vm75, %vm76
    %v78 = vsel %vm77, %v69, %v74
    %v79 = vmul.f32 %v47, %v68
    %v80 = vmul.f32 %v48, %v78
    %v81 = vld [vmem:[%s1] sm:$0x1]
    %v83 = vperm.slane %v81, 0
    %v85 = vmul.f32 %v79, %v83
    %v86 = vmul.f32 %v80, %v83
    %v87 = vld [vmem:[%s2] sm:$0x1]
    %v89 = vperm.slane %v87, 0
    %v91 = vadd.f32 %v85, %v89
    %v92 = vadd.f32 %v86, %v89
    %v93 = vpack.c.bf16 %v91, %v91
    %v94 = vpack.c.bf16 %v92, %v92
    %95 = vst [vmem:[#allocation2] sm:$0xf] %v93
    %96 = vst [vmem:[#allocation2 + $0x4] sm:$0xf] %v94
  $region33: #{_lambda_.35} parent=0 // pred_fallthru
    _
  %v97 = vld [vmem:[#allocation2] sm:$0xf]
  %v98 = vld [vmem:[#allocation2 + $0x4] sm:$0xf]
  %v99 = vld [vmem:[%s3] sm:$0xff]
  %v100 = vld [vmem:[%s3 + $0x8] sm:$0xff]
  %v101 = vld [vmem:[%s3 + $0x10] sm:$0xff]
  %v102 = vld [vmem:[%s3 + $0x18] sm:$0xff]
  %v103 = vld [vmem:[%s3 + $0x20] sm:$0xff]
  %v104 = vld [vmem:[%s3 + $0x28] sm:$0xff]
  %v105 = vld [vmem:[%s3 + $0x30] sm:$0xff]
  %v106 = vld [vmem:[%s3 + $0x38] sm:$0xff]
  %v107 = vld [vmem:[%s3 + $0x40] sm:$0xff]
  %v108 = vld [vmem:[%s3 + $0x48] sm:$0xff]
  %v109 = vld [vmem:[%s3 + $0x50] sm:$0xff]
  %v110 = vld [vmem:[%s3 + $0x58] sm:$0xff]
  %v111 = vld [vmem:[%s3 + $0x60] sm:$0xff]
  %v112 = vld [vmem:[%s3 + $0x68] sm:$0xff]
  %v113 = vld [vmem:[%s3 + $0x70] sm:$0xff]
  %v114 = vld [vmem:[%s3 + $0x78] sm:$0xff]
  %v115 = vld [vmem:[%s3 + $0x80] sm:$0xff]
  %v116 = vld [vmem:[%s3 + $0x88] sm:$0xff]
  %v117 = vld [vmem:[%s3 + $0x90] sm:$0xff]
  %v118 = vld [vmem:[%s3 + $0x98] sm:$0xff]
  %v119 = vld [vmem:[%s3 + $0xa0] sm:$0xff]
  %v120 = vld [vmem:[%s3 + $0xa8] sm:$0xff]
  %v121 = vld [vmem:[%s3 + $0xb0] sm:$0xff]
  %v122 = vld [vmem:[%s3 + $0xb8] sm:$0xff]
  %v123 = vld [vmem:[%s3 + $0xc0] sm:$0xff]
  %v124 = vld [vmem:[%s3 + $0xc8] sm:$0xff]
  %v125 = vld [vmem:[%s3 + $0xd0] sm:$0xff]
  %v126 = vld [vmem:[%s3 + $0xd8] sm:$0xff]
  %v127 = vld [vmem:[%s3 + $0xe0] sm:$0xff]
  %v128 = vld [vmem:[%s3 + $0xe8] sm:$0xff]
  %v129 = vld [vmem:[%s3 + $0xf0] sm:$0xff]
  %v130 = vld [vmem:[%s3 + $0xf8] sm:$0xff]
  %v131 = vld [vmem:[%s4] sm:$0xf]
  %v133 = vperm.slane %v131, 0
  %v134 = vperm.slane %v131, 1
  %v135 = vperm.slane %v131, 2
  %v136 = vperm.slane %v131, 3
  %v143 = vunpack.c.l.b16 %v97
  %v144 = vunpack.c.l.b16 %v98
  %v145 = vpack.c.b16 %v144, %v143
  %v179 = vunpack.c.l.b16 %v99
  %v180 = vunpack.c.h.b16 %v99
  %v181 = vunpack.c.l.b16 %v100
  %v182 = vunpack.c.h.b16 %v100
  %v183 = vunpack.c.l.b16 %v101
  %v184 = vunpack.c.h.b16 %v101
  %v185 = vunpack.c.l.b16 %v102
  %v186 = vunpack.c.h.b16 %v102
  %v187 = vunpack.c.l.b16 %v103
  %v188 = vunpack.c.h.b16 %v103
  %v189 = vunpack.c.l.b16 %v104
  %v190 = vunpack.c.h.b16 %v104
  %v191 = vunpack.c.l.b16 %v105
  %v192 = vunpack.c.h.b16 %v105
  %v193 = vunpack.c.l.b16 %v106
  %v194 = vunpack.c.h.b16 %v106
  %v195 = vunpack.c.l.b16 %v107
  %v196 = vunpack.c.h.b16 %v107
  %v197 = vunpack.c.l.b16 %v108
  %v198 = vunpack.c.h.b16 %v108
  %v199 = vunpack.c.l.b16 %v109
  %v200 = vunpack.c.h.b16 %v109
  %v201 = vunpack.c.l.b16 %v110
  %v202 = vunpack.c.h.b16 %v110
  %v203 = vunpack.c.l.b16 %v111
  %v204 = vunpack.c.h.b16 %v111
  %v205 = vunpack.c.l.b16 %v112
  %v206 = vunpack.c.h.b16 %v112
  %v207 = vunpack.c.l.b16 %v113
  %v208 = vunpack.c.h.b16 %v113
  %v209 = vunpack.c.l.b16 %v114
  %v210 = vunpack.c.h.b16 %v114
  %v211 = vunpack.c.l.b16 %v115
  %v212 = vunpack.c.h.b16 %v115
  %v213 = vunpack.c.l.b16 %v116
  %v214 = vunpack.c.h.b16 %v116
  %v215 = vunpack.c.l.b16 %v117
  %v216 = vunpack.c.h.b16 %v117
  %v217 = vunpack.c.l.b16 %v118
  %v218 = vunpack.c.h.b16 %v118
  %v219 = vunpack.c.l.b16 %v119
  %v220 = vunpack.c.h.b16 %v119
  %v221 = vunpack.c.l.b16 %v120
  %v222 = vunpack.c.h.b16 %v120
  %v223 = vunpack.c.l.b16 %v121
  %v224 = vunpack.c.h.b16 %v121
  %v225 = vunpack.c.l.b16 %v122
  %v226 = vunpack.c.h.b16 %v122
  %v227 = vunpack.c.l.b16 %v123
  %v228 = vunpack.c.h.b16 %v123
  %v229 = vunpack.c.l.b16 %v124
  %v230 = vunpack.c.h.b16 %v124
  %v231 = vunpack.c.l.b16 %v125
  %v232 = vunpack.c.h.b16 %v125
  %v233 = vunpack.c.l.b16 %v126
  %v234 = vunpack.c.h.b16 %v126
  %v235 = vunpack.c.l.b16 %v127
  %v236 = vunpack.c.h.b16 %v127
  %v237 = vunpack.c.l.b16 %v128
  %v238 = vunpack.c.h.b16 %v128
  %v239 = vunpack.c.l.b16 %v129
  %v240 = vunpack.c.h.b16 %v129
  %v241 = vunpack.c.l.b16 %v130
  %v242 = vunpack.c.h.b16 %v130
  %v243 = vpack.c.b16 %v183, %v179
  %v244 = vpack.c.b16 %v184, %v180
  %v245 = vpack.c.b16 %v185, %v181
  %v246 = vpack.c.b16 %v186, %v182
  %v247 = vpack.c.b16 %v191, %v187
  %v248 = vpack.c.b16 %v192, %v188
  %v249 = vpack.c.b16 %v193, %v189
  %v250 = vpack.c.b16 %v194, %v190
  %v251 = vpack.c.b16 %v199, %v195
  %v252 = vpack.c.b16 %v200, %v196
  %v253 = vpack.c.b16 %v201, %v197
  %v254 = vpack.c.b16 %v202, %v198
  %v255 = vpack.c.b16 %v207, %v203
  %v256 = vpack.c.b16 %v208, %v204
  %v257 = vpack.c.b16 %v209, %v205
  %v258 = vpack.c.b16 %v210, %v206
  %v259 = vpack.c.b16 %v215, %v211
  %v260 = vpack.c.b16 %v216, %v212
  %v261 = vpack.c.b16 %v217, %v213
  %v262 = vpack.c.b16 %v218, %v214
  %v263 = vpack.c.b16 %v223, %v219
  %v264 = vpack.c.b16 %v224, %v220
  %v265 = vpack.c.b16 %v225, %v221
  %v266 = vpack.c.b16 %v226, %v222
  %v267 = vpack.c.b16 %v231, %v227
  %v268 = vpack.c.b16 %v232, %v228
  %v269 = vpack.c.b16 %v233, %v229
  %v270 = vpack.c.b16 %v234, %v230
  %v271 = vpack.c.b16 %v239, %v235
  %v272 = vpack.c.b16 %v240, %v236
  %v273 = vpack.c.b16 %v241, %v237
  %v274 = vpack.c.b16 %v242, %v238
  %307 = vmatpush.bf16.msra.mxu0 %v271
  %308 = vmatpush.bf16.msra.mxu0 %v267
  %309 = vmatpush.bf16.msra.mxu0 %v263
  %310 = vmatpush.bf16.msra.mxu0 %v259
  %311 = vmatpush.bf16.msra.mxu0 %v255
  %312 = vmatpush.bf16.msra.mxu0 %v251
  %313 = vmatpush.bf16.msra.mxu0 %v247
  %314 = vmatpush.bf16.msra.mxu0 %v243
  %315 = vmatmul.bf16.gmra.mxu0 %v145
  %v316 = vpop.f32.mrf.mxu0
  %v317 = vadd.f32 %v133, %v316
  %v318 = vpop.f32.mrf.mxu0
  %v319 = vadd.f32 %v133, %v318
  %320 = vdwg.mxu0
  %321 = vmatpush.bf16.msra.mxu0 %v272
  %322 = vmatpush.bf16.msra.mxu0 %v268
  %323 = vmatpush.bf16.msra.mxu0 %v264
  %324 = vmatpush.bf16.msra.mxu0 %v260
  %325 = vmatpush.bf16.msra.mxu0 %v256
  %326 = vmatpush.bf16.msra.mxu0 %v252
  %327 = vmatpush.bf16.msra.mxu0 %v248
  %328 = vmatpush.bf16.msra.mxu0 %v244
  %329 = vmatmul.bf16.gmra.mxu0 %v145
  %v330 = vpop.f32.mrf.mxu0
  %v331 = vadd.f32 %v134, %v330
  %v332 = vpop.f32.mrf.mxu0
  %v333 = vadd.f32 %v134, %v332
  %334 = vdwg.mxu0
  %335 = vmatpush.bf16.msra.mxu0 %v273
  %336 = vmatpush.bf16.msra.mxu0 %v269
  %337 = vmatpush.bf16.msra.mxu0 %v265
  %338 = vmatpush.bf16.msra.mxu0 %v261
  %339 = vmatpush.bf16.msra.mxu0 %v257
  %340 = vmatpush.bf16.msra.mxu0 %v253
  %341 = vmatpush.bf16.msra.mxu0 %v249
  %342 = vmatpush.bf16.msra.mxu0 %v245
  %343 = vmatmul.bf16.gmra.mxu0 %v145
  %v344 = vpop.f32.mrf.mxu0
  %v345 = vadd.f32 %v135, %v344
  %v346 = vpop.f32.mrf.mxu0
  %v347 = vadd.f32 %v135, %v346
  %348 = vdwg.mxu0
  %349 = vmatpush.bf16.msra.mxu0 %v274
  %350 = vmatpush.bf16.msra.mxu0 %v270
  %351 = vmatpush.bf16.msra.mxu0 %v266
  %352 = vmatpush.bf16.msra.mxu0 %v262
  %353 = vmatpush.bf16.msra.mxu0 %v258
  %354 = vmatpush.bf16.msra.mxu0 %v254
  %355 = vmatpush.bf16.msra.mxu0 %v250
  %356 = vmatpush.bf16.msra.mxu0 %v246
  %357 = vmatmul.bf16.gmra.mxu0 %v145
  %v358 = vpop.f32.mrf.mxu0
  %v359 = vadd.f32 %v136, %v358
  %v360 = vpop.f32.mrf.mxu0
  %v361 = vadd.f32 %v136, %v360
  %362 = vdwg.mxu0
  %v363 = vmul.f32 %v317, 1.702
  %v364 = vmul.f32 %v331, 1.702
  %v365 = vmul.f32 %v345, 1.702
  %v366 = vmul.f32 %v359, 1.702
  %v367 = vmul.f32 %v319, 1.702
  %v368 = vmul.f32 %v333, 1.702
  %v369 = vmul.f32 %v347, 1.702
  %v370 = vmul.f32 %v361, 1.702
  %v371 = vxor.u32 %v363, 2147483648
  %v372 = vxor.u32 %v364, 2147483648
  %v373 = vxor.u32 %v365, 2147483648
  %v374 = vxor.u32 %v366, 2147483648
  %v375 = vxor.u32 %v367, 2147483648
  %v376 = vxor.u32 %v368, 2147483648
  %v377 = vxor.u32 %v369, 2147483648
  %v378 = vxor.u32 %v370, 2147483648
  %v379 = vmul.f32 %v371, 1.442695
  %v380 = vpow.pop %v379
  %v381 = vmul.f32 %v372, 1.442695
  %v382 = vpow.pop %v381
  %v383 = vmul.f32 %v373, 1.442695
  %v384 = vpow.pop %v383
  %v385 = vmul.f32 %v374, 1.442695
  %v386 = vpow.pop %v385
  %v387 = vmul.f32 %v375, 1.442695
  %v388 = vpow.pop %v387
  %v389 = vmul.f32 %v376, 1.442695
  %v390 = vpow.pop %v389
  %v391 = vmul.f32 %v377, 1.442695
  %v392 = vpow.pop %v391
  %v393 = vmul.f32 %v378, 1.442695
  %v394 = vpow.pop %v393
  %v395 = vadd.f32 %v380, 1.0
  %v396 = vadd.f32 %v382, 1.0
  %v397 = vadd.f32 %v384, 1.0
  %v398 = vadd.f32 %v386, 1.0
  %v399 = vadd.f32 %v388, 1.0
  %v400 = vadd.f32 %v390, 1.0
  %v401 = vadd.f32 %v392, 1.0
  %v402 = vadd.f32 %v394, 1.0
  %v403 = vrcp.pop %v395
  %v404 = vmul.f32 %v395, %v403
  %v405 = vsub.f32 1.0, %v404
  %v406 = vmul.f32 %v403, %v405
  %v407 = vadd.f32 %v403, %v406
  %vm408 = vweird.f32 %v395
  %vm409 = vweird.f32 %v403
  %vm410 = vmor %vm408, %vm409
  %v411 = vsel %vm410, %v403, %v407
  %v412 = vand.u32 2147483647, %v395
  %vm413 = vcmp.eq.f32.partialorder %v412, 8.507059e+37
  %v414 = vand.u32 %v395, 2147483648
  %v415 = vor.u32 1.1754944e-38, %v414
  %v416 = vsel %vm413, %v415, %v411
  %v417 = vmul.f32 1.0, %v416
  %v418 = vrcp.pop %v396
  %v419 = vmul.f32 %v396, %v418
  %v420 = vsub.f32 1.0, %v419
  %v421 = vmul.f32 %v418, %v420
  %v422 = vadd.f32 %v418, %v421
  %vm423 = vweird.f32 %v396
  %vm424 = vweird.f32 %v418
  %vm425 = vmor %vm423, %vm424
  %v426 = vsel %vm425, %v418, %v422
  %v427 = vand.u32 2147483647, %v396
  %vm428 = vcmp.eq.f32.partialorder %v427, 8.507059e+37
  %v429 = vand.u32 %v396, 2147483648
  %v430 = vor.u32 1.1754944e-38, %v429
  %v431 = vsel %vm428, %v430, %v426
  %v432 = vmul.f32 1.0, %v431
  %v433 = vrcp.pop %v397
  %v434 = vmul.f32 %v397, %v433
  %v435 = vsub.f32 1.0, %v434
  %v436 = vmul.f32 %v433, %v435
  %v437 = vadd.f32 %v433, %v436
  %vm438 = vweird.f32 %v397
  %vm439 = vweird.f32 %v433
  %vm440 = vmor %vm438, %vm439
  %v441 = vsel %vm440, %v433, %v437
  %v442 = vand.u32 2147483647, %v397
  %vm443 = vcmp.eq.f32.partialorder %v442, 8.507059e+37
  %v444 = vand.u32 %v397, 2147483648
  %v445 = vor.u32 1.1754944e-38, %v444
  %v446 = vsel %vm443, %v445, %v441
  %v447 = vmul.f32 1.0, %v446
  %v448 = vrcp.pop %v398
  %v449 = vmul.f32 %v398, %v448
  %v450 = vsub.f32 1.0, %v449
  %v451 = vmul.f32 %v448, %v450
  %v452 = vadd.f32 %v448, %v451
  %vm453 = vweird.f32 %v398
  %vm454 = vweird.f32 %v448
  %vm455 = vmor %vm453, %vm454
  %v456 = vsel %vm455, %v448, %v452
  %v457 = vand.u32 2147483647, %v398
  %vm458 = vcmp.eq.f32.partialorder %v457, 8.507059e+37
  %v459 = vand.u32 %v398, 2147483648
  %v460 = vor.u32 1.1754944e-38, %v459
  %v461 = vsel %vm458, %v460, %v456
  %v462 = vmul.f32 1.0, %v461
  %v463 = vrcp.pop %v399
  %v464 = vmul.f32 %v399, %v463
  %v465 = vsub.f32 1.0, %v464
  %v466 = vmul.f32 %v463, %v465
  %v467 = vadd.f32 %v463, %v466
  %vm468 = vweird.f32 %v399
  %vm469 = vweird.f32 %v463
  %vm470 = vmor %vm468, %vm469
  %v471 = vsel %vm470, %v463, %v467
  %v472 = vand.u32 2147483647, %v399
  %vm473 = vcmp.eq.f32.partialorder %v472, 8.507059e+37
  %v474 = vand.u32 %v399, 2147483648
  %v475 = vor.u32 1.1754944e-38, %v474
  %v476 = vsel %vm473, %v475, %v471
  %v477 = vmul.f32 1.0, %v476
  %v478 = vrcp.pop %v400
  %v479 = vmul.f32 %v400, %v478
  %v480 = vsub.f32 1.0, %v479
  %v481 = vmul.f32 %v478, %v480
  %v482 = vadd.f32 %v478, %v481
  %vm483 = vweird.f32 %v400
  %vm484 = vweird.f32 %v478
  %vm485 = vmor %vm483, %vm484
  %v486 = vsel %vm485, %v478, %v482
  %v487 = vand.u32 2147483647, %v400
  %vm488 = vcmp.eq.f32.partialorder %v487, 8.507059e+37
  %v489 = vand.u32 %v400, 2147483648
  %v490 = vor.u32 1.1754944e-38, %v489
  %v491 = vsel %vm488, %v490, %v486
  %v492 = vmul.f32 1.0, %v491
  %v493 = vrcp.pop %v401
  %v494 = vmul.f32 %v401, %v493
  %v495 = vsub.f32 1.0, %v494
  %v496 = vmul.f32 %v493, %v495
  %v497 = vadd.f32 %v493, %v496
  %vm498 = vweird.f32 %v401
  %vm499 = vweird.f32 %v493
  %vm500 = vmor %vm498, %vm499
  %v501 = vsel %vm500, %v493, %v497
  %v502 = vand.u32 2147483647, %v401
  %vm503 = vcmp.eq.f32.partialorder %v502, 8.507059e+37
  %v504 = vand.u32 %v401, 2147483648
  %v505 = vor.u32 1.1754944e-38, %v504
  %v506 = vsel %vm503, %v505, %v501
  %v507 = vmul.f32 1.0, %v506
  %v508 = vrcp.pop %v402
  %v509 = vmul.f32 %v402, %v508
  %v510 = vsub.f32 1.0, %v509
  %v511 = vmul.f32 %v508, %v510
  %v512 = vadd.f32 %v508, %v511
  %vm513 = vweird.f32 %v402
  %vm514 = vweird.f32 %v508
  %vm515 = vmor %vm513, %vm514
  %v516 = vsel %vm515, %v508, %v512
  %v517 = vand.u32 2147483647, %v402
  %vm518 = vcmp.eq.f32.partialorder %v517, 8.507059e+37
  %v519 = vand.u32 %v402, 2147483648
  %v520 = vor.u32 1.1754944e-38, %v519
  %v521 = vsel %vm518, %v520, %v516
  %v522 = vmul.f32 1.0, %v521
  %v523 = vmul.f32 %v317, %v417
  %v524 = vmul.f32 %v331, %v432
  %v525 = vmul.f32 %v345, %v447
  %v526 = vmul.f32 %v359, %v462
  %v527 = vmul.f32 %v319, %v477
  %v528 = vmul.f32 %v333, %v492
  %v529 = vmul.f32 %v347, %v507
  %v530 = vmul.f32 %v361, %v522
  %v531 = vld [vmem:[#allocation3] sm:$0xff]
  %v532 = vld [vmem:[#allocation3 + $0x8] sm:$0xff]
  %v533 = vpack.c.bf16 %v527, %v523
  %v534 = vpack.c.bf16 %v528, %v524
  %v535 = vpack.c.bf16 %v529, %v525
  %v536 = vpack.c.bf16 %v530, %v526
  %v537 = vld [vmem:[%s5] sm:$0xf]
  %v538 = vld [vmem:[%s5 + $0x4] sm:$0xf]
  %v539 = vld [vmem:[%s5 + $0x8] sm:$0xf]
  %v540 = vld [vmem:[%s5 + $0xc] sm:$0xf]
  %v541 = vld [vmem:[%s5 + $0x10] sm:$0xf]
  %v542 = vld [vmem:[%s5 + $0x14] sm:$0xf]
  %v543 = vld [vmem:[%s5 + $0x18] sm:$0xf]
  %v544 = vld [vmem:[%s5 + $0x1c] sm:$0xf]
  %v545 = vld [vmem:[%s5 + $0x20] sm:$0xf]
  %v546 = vld [vmem:[%s5 + $0x24] sm:$0xf]
  %v547 = vld [vmem:[%s5 + $0x28] sm:$0xf]
  %v548 = vld [vmem:[%s5 + $0x2c] sm:$0xf]
  %v549 = vld [vmem:[%s5 + $0x30] sm:$0xf]
  %v550 = vld [vmem:[%s5 + $0x34] sm:$0xf]
  %v551 = vld [vmem:[%s5 + $0x38] sm:$0xf]
  %v552 = vld [vmem:[%s5 + $0x3c] sm:$0xf]
  %v553 = vld [vmem:[%s5 + $0x40] sm:$0xf]
  %v554 = vld [vmem:[%s5 + $0x44] sm:$0xf]
  %v555 = vld [vmem:[%s5 + $0x48] sm:$0xf]
  %v556 = vld [vmem:[%s5 + $0x4c] sm:$0xf]
  %v557 = vld [vmem:[%s5 + $0x50] sm:$0xf]
  %v558 = vld [vmem:[%s5 + $0x54] sm:$0xf]
  %v559 = vld [vmem:[%s5 + $0x58] sm:$0xf]
  %v560 = vld [vmem:[%s5 + $0x5c] sm:$0xf]
  %v561 = vld [vmem:[%s5 + $0x60] sm:$0xf]
  %v562 = vld [vmem:[%s5 + $0x64] sm:$0xf]
  %v563 = vld [vmem:[%s5 + $0x68] sm:$0xf]
  %v564 = vld [vmem:[%s5 + $0x6c] sm:$0xf]
  %v565 = vld [vmem:[%s5 + $0x70] sm:$0xf]
  %v566 = vld [vmem:[%s5 + $0x74] sm:$0xf]
  %v567 = vld [vmem:[%s5 + $0x78] sm:$0xf]
  %v568 = vld [vmem:[%s5 + $0x7c] sm:$0xf]
  %v569 = vld [vmem:[%s5 + $0x80] sm:$0xf]
  %v570 = vld [vmem:[%s5 + $0x84] sm:$0xf]
  %v571 = vld [vmem:[%s5 + $0x88] sm:$0xf]
  %v572 = vld [vmem:[%s5 + $0x8c] sm:$0xf]
  %v573 = vld [vmem:[%s5 + $0x90] sm:$0xf]
  %v574 = vld [vmem:[%s5 + $0x94] sm:$0xf]
  %v575 = vld [vmem:[%s5 + $0x98] sm:$0xf]
  %v576 = vld [vmem:[%s5 + $0x9c] sm:$0xf]
  %v577 = vld [vmem:[%s5 + $0xa0] sm:$0xf]
  %v578 = vld [vmem:[%s5 + $0xa4] sm:$0xf]
  %v579 = vld [vmem:[%s5 + $0xa8] sm:$0xf]
  %v580 = vld [vmem:[%s5 + $0xac] sm:$0xf]
  %v581 = vld [vmem:[%s5 + $0xb0] sm:$0xf]
  %v582 = vld [vmem:[%s5 + $0xb4] sm:$0xf]
  %v583 = vld [vmem:[%s5 + $0xb8] sm:$0xf]
  %v584 = vld [vmem:[%s5 + $0xbc] sm:$0xf]
  %v585 = vld [vmem:[%s5 + $0xc0] sm:$0xf]
  %v586 = vld [vmem:[%s5 + $0xc4] sm:$0xf]
  %v587 = vld [vmem:[%s5 + $0xc8] sm:$0xf]
  %v588 = vld [vmem:[%s5 + $0xcc] sm:$0xf]
  %v589 = vld [vmem:[%s5 + $0xd0] sm:$0xf]
  %v590 = vld [vmem:[%s5 + $0xd4] sm:$0xf]
  %v591 = vld [vmem:[%s5 + $0xd8] sm:$0xf]
  %v592 = vld [vmem:[%s5 + $0xdc] sm:$0xf]
  %v593 = vld [vmem:[%s5 + $0xe0] sm:$0xf]
  %v594 = vld [vmem:[%s5 + $0xe4] sm:$0xf]
  %v595 = vld [vmem:[%s5 + $0xe8] sm:$0xf]
  %v596 = vld [vmem:[%s5 + $0xec] sm:$0xf]
  %v597 = vld [vmem:[%s5 + $0xf0] sm:$0xf]
  %v598 = vld [vmem:[%s5 + $0xf4] sm:$0xf]
  %v599 = vld [vmem:[%s5 + $0xf8] sm:$0xf]
  %v600 = vld [vmem:[%s5 + $0xfc] sm:$0xf]
  %v665 = vunpack.c.l.b16 %v537
  %v666 = vunpack.c.l.b16 %v538
  %v667 = vunpack.c.l.b16 %v539
  %v668 = vunpack.c.l.b16 %v540
  %v669 = vunpack.c.l.b16 %v541
  %v670 = vunpack.c.l.b16 %v542
  %v671 = vunpack.c.l.b16 %v543
  %v672 = vunpack.c.l.b16 %v544
  %v673 = vunpack.c.l.b16 %v545
  %v674 = vunpack.c.l.b16 %v546
  %v675 = vunpack.c.l.b16 %v547
  %v676 = vunpack.c.l.b16 %v548
  %v677 = vunpack.c.l.b16 %v549
  %v678 = vunpack.c.l.b16 %v550
  %v679 = vunpack.c.l.b16 %v551
  %v680 = vunpack.c.l.b16 %v552
  %v681 = vunpack.c.l.b16 %v553
  %v682 = vunpack.c.l.b16 %v554
  %v683 = vunpack.c.l.b16 %v555
  %v684 = vunpack.c.l.b16 %v556
  %v685 = vunpack.c.l.b16 %v557
  %v686 = vunpack.c.l.b16 %v558
  %v687 = vunpack.c.l.b16 %v559
  %v688 = vunpack.c.l.b16 %v560
  %v689 = vunpack.c.l.b16 %v561
  %v690 = vunpack.c.l.b16 %v562
  %v691 = vunpack.c.l.b16 %v563
  %v692 = vunpack.c.l.b16 %v564
  %v693 = vunpack.c.l.b16 %v565
  %v694 = vunpack.c.l.b16 %v566
  %v695 = vunpack.c.l.b16 %v567
  %v696 = vunpack.c.l.b16 %v568
  %v697 = vunpack.c.l.b16 %v569
  %v698 = vunpack.c.l.b16 %v570
  %v699 = vunpack.c.l.b16 %v571
  %v700 = vunpack.c.l.b16 %v572
  %v701 = vunpack.c.l.b16 %v573
  %v702 = vunpack.c.l.b16 %v574
  %v703 = vunpack.c.l.b16 %v575
  %v704 = vunpack.c.l.b16 %v576
  %v705 = vunpack.c.l.b16 %v577
  %v706 = vunpack.c.l.b16 %v578
  %v707 = vunpack.c.l.b16 %v579
  %v708 = vunpack.c.l.b16 %v580
  %v709 = vunpack.c.l.b16 %v581
  %v710 = vunpack.c.l.b16 %v582
  %v711 = vunpack.c.l.b16 %v583
  %v712 = vunpack.c.l.b16 %v584
  %v713 = vunpack.c.l.b16 %v585
  %v714 = vunpack.c.l.b16 %v586
  %v715 = vunpack.c.l.b16 %v587
  %v716 = vunpack.c.l.b16 %v588
  %v717 = vunpack.c.l.b16 %v589
  %v718 = vunpack.c.l.b16 %v590
  %v719 = vunpack.c.l.b16 %v591
  %v720 = vunpack.c.l.b16 %v592
  %v721 = vunpack.c.l.b16 %v593
  %v722 = vunpack.c.l.b16 %v594
  %v723 = vunpack.c.l.b16 %v595
  %v724 = vunpack.c.l.b16 %v596
  %v725 = vunpack.c.l.b16 %v597
  %v726 = vunpack.c.l.b16 %v598
  %v727 = vunpack.c.l.b16 %v599
  %v728 = vunpack.c.l.b16 %v600
  %v729 = vpack.c.b16 %v666, %v665
  %v730 = vpack.c.b16 %v668, %v667
  %v731 = vpack.c.b16 %v670, %v669
  %v732 = vpack.c.b16 %v672, %v671
  %v733 = vpack.c.b16 %v674, %v673
  %v734 = vpack.c.b16 %v676, %v675
  %v735 = vpack.c.b16 %v678, %v677
  %v736 = vpack.c.b16 %v680, %v679
  %v737 = vpack.c.b16 %v682, %v681
  %v738 = vpack.c.b16 %v684, %v683
  %v739 = vpack.c.b16 %v686, %v685
  %v740 = vpack.c.b16 %v688, %v687
  %v741 = vpack.c.b16 %v690, %v689
  %v742 = vpack.c.b16 %v692, %v691
  %v743 = vpack.c.b16 %v694, %v693
  %v744 = vpack.c.b16 %v696, %v695
  %v745 = vpack.c.b16 %v698, %v697
  %v746 = vpack.c.b16 %v700, %v699
  %v747 = vpack.c.b16 %v702, %v701
  %v748 = vpack.c.b16 %v704, %v703
  %v749 = vpack.c.b16 %v706, %v705
  %v750 = vpack.c.b16 %v708, %v707
  %v751 = vpack.c.b16 %v710, %v709
  %v752 = vpack.c.b16 %v712, %v711
  %v753 = vpack.c.b16 %v714, %v713
  %v754 = vpack.c.b16 %v716, %v715
  %v755 = vpack.c.b16 %v718, %v717
  %v756 = vpack.c.b16 %v720, %v719
  %v757 = vpack.c.b16 %v722, %v721
  %v758 = vpack.c.b16 %v724, %v723
  %v759 = vpack.c.b16 %v726, %v725
  %v760 = vpack.c.b16 %v728, %v727
  %793 = vmatpush.bf16.msra.mxu0 %v736
  %794 = vmatpush.bf16.msra.mxu0 %v735
  %795 = vmatpush.bf16.msra.mxu0 %v734
  %796 = vmatpush.bf16.msra.mxu0 %v733
  %797 = vmatpush.bf16.msra.mxu0 %v732
  %798 = vmatpush.bf16.msra.mxu0 %v731
  %799 = vmatpush.bf16.msra.mxu0 %v730
  %800 = vmatpush.bf16.msra.mxu0 %v729
  %801 = vmatmul.bf16.gmra.mxu0 %v533
  %v802 = vpop.f32.mrf.mxu0
  %v803 = vadd.f32 0.0, %v802
  %v804 = vpop.f32.mrf.mxu0
  %v805 = vadd.f32 0.0, %v804
  %806 = vdwg.mxu0
  %807 = vmatpush.bf16.msra.mxu0 %v744
  %808 = vmatpush.bf16.msra.mxu0 %v743
  %809 = vmatpush.bf16.msra.mxu0 %v742
  %810 = vmatpush.bf16.msra.mxu0 %v741
  %811 = vmatpush.bf16.msra.mxu0 %v740
  %812 = vmatpush.bf16.msra.mxu0 %v739
  %813 = vmatpush.bf16.msra.mxu0 %v738
  %814 = vmatpush.bf16.msra.mxu0 %v737
  %815 = vmatmul.bf16.gmra.mxu0 %v534
  %v816 = vpop.f32.mrf.mxu0
  %v817 = vadd.f32 %v803, %v816
  %v818 = vpop.f32.mrf.mxu0
  %v819 = vadd.f32 %v805, %v818
  %820 = vdwg.mxu0
  %821 = vmatpush.bf16.msra.mxu0 %v752
  %822 = vmatpush.bf16.msra.mxu0 %v751
  %823 = vmatpush.bf16.msra.mxu0 %v750
  %824 = vmatpush.bf16.msra.mxu0 %v749
  %825 = vmatpush.bf16.msra.mxu0 %v748
  %826 = vmatpush.bf16.msra.mxu0 %v747
  %827 = vmatpush.bf16.msra.mxu0 %v746
  %828 = vmatpush.bf16.msra.mxu0 %v745
  %829 = vmatmul.bf16.gmra.mxu0 %v535
  %v830 = vpop.f32.mrf.mxu0
  %v831 = vadd.f32 %v817, %v830
  %v832 = vpop.f32.mrf.mxu0
  %v833 = vadd.f32 %v819, %v832
  %834 = vdwg.mxu0
  %835 = vmatpush.bf16.msra.mxu0 %v760
  %836 = vmatpush.bf16.msra.mxu0 %v759
  %837 = vmatpush.bf16.msra.mxu0 %v758
  %838 = vmatpush.bf16.msra.mxu0 %v757
  %839 = vmatpush.bf16.msra.mxu0 %v756
  %840 = vmatpush.bf16.msra.mxu0 %v755
  %841 = vmatpush.bf16.msra.mxu0 %v754
  %842 = vmatpush.bf16.msra.mxu0 %v753
  %843 = vmatmul.bf16.gmra.mxu0 %v536
  %v844 = vpop.f32.mrf.mxu0
  %v845 = vadd.f32 %v831, %v844
  %v846 = vpop.f32.mrf.mxu0
  %v847 = vadd.f32 %v833, %v846
  %848 = vdwg.mxu0
  %v849 = vadd.f32 %v531, %v845
  %v850 = vadd.f32 %v532, %v847
  %851 = vst [vmem:[#allocation3] sm:$0xff] %v849
  %852 = vst [vmem:[#allocation3 + $0x8] sm:$0xff] %v850
  // Predicated region
  $region34: #{_lambda_.35} parent=0 // pred_check
    %p853 = pneg %p26
  $region35: #{_lambda_.35} parent=0 // pred_check_branch
    %855 = sbr.rel (%p853) target = $region37
  $region36: #{_lambda_.35} parent=0 // pred_region
    %v856 = vld [vmem:[#allocation3] sm:$0xff]
    %v857 = vld [vmem:[#allocation3 + $0x8] sm:$0xff]
    %v858 = vld [vmem:[%s6] sm:$0x1]
    %v860 = vperm.slane %v858, 0
    %v862 = vadd.f32 %v856, %v860
    %v863 = vadd.f32 %v857, %v860
    %864 = vst [vmem:[%s7] sm:$0xff] %v862
    %865 = vst [vmem:[%s7 + $0x8] sm:$0xff] %v863
  $region37: #{_lambda_.35} parent=0 // pred_fallthru
    _
  // Predicated region
  $region38: #{_lambda_.35} parent=0 // pred_check
    _
  $region39: #{_lambda_.35} parent=0 // pred_check_branch
    %867 = sbr.rel (0) target = $region41
  $region40: #{_lambda_.35} parent=0 // pred_region
    _
  $region41: #{_lambda_.35} parent=0 // pred_fallthru
    _
  // Predicated region
  $region42: #{_lambda_.35} parent=0 // pred_check
    _
  $region43: #{_lambda_.35} parent=0 // pred_check_branch
    %869 = sbr.rel (0) target = $region45
  $region44: #{_lambda_.35} parent=0 // pred_region
    _
  $region45: #{_lambda_.35} parent=0 // pred_fallthru
    _

</llo_original>
